<compile_context>
chip_gen: v6e
topology: v6e:2x2x1
jax: 0.10.0
libtpu: 0.0.40
codegen_flags: <defaults>
</compile_context>

<pallas_src>
import math
import numpy as np
import jax
import jax.numpy as jnp
from jax import lax
from jax.experimental import pallas as pl
from jax.experimental.pallas import tpu as pltpu

# ---- config (TransformerClassifierConfig semantics: vocab+3, max_seq_len+2) ----
VOCAB = 5 + 3
D_MODEL = 32
N_HEADS = 4
DEPTH = D_MODEL // N_HEADS
DIM_FF = 64
N_LAYERS = 2
N_CLASSES = 2
SEQ = 8
BATCH = 2
LN_EPS = 1e-5
BS = BATCH * SEQ
NEG = -1e30
LANES = 128

# TODO(synk): mask path (pad_token_mask / causal_mask) not implemented; this matches the
#             forward's default mask=None path only (dropout = identity at inference).
# TODO(synk): for production batch sizes, pad BS up to >=128 rows and add a parallel grid
#             axis over batch groups (uses v7x's second TensorCore); at BS=16 a single
#             grid-less invocation with everything VMEM-resident is the right shape.


# ------------- packed-slab row layouts (shared by host packing and the kernel) -------------

def _build_w_layout():
    rows, r = {}, 0
    rows["emb"] = r; r += VOCAB                       # (VOCAB, D)
    for l in range(N_LAYERS):
        rows[f"qkv{l}"] = r; r += D_MODEL             # (D, 3D)  per-head [q|k|v] columns
        rows[f"wo{l}"] = r; r += D_MODEL              # (D, D)   rows grouped per head
        rows[f"w1{l}"] = r; r += D_MODEL              # (D, FF)
        rows[f"w2{l}"] = r; r += DIM_FF               # (FF, D)
    rows["fc"] = r; r += D_MODEL                      # (D, C)
    return rows, r


def _build_v_layout():
    rows, r = {}, 0
    rows["mask"] = r; r += BS                         # (BS, BS) block-diag additive mask
    for l in range(N_LAYERS):
        for name in ("bqkv", "bo", "b1", "b2", "ln1g", "ln1b", "ln2g", "ln2b"):
            rows[f"{name}{l}"] = r; r += 1
    rows["fcb"] = r; r += 1
    return rows, ((r + 7) // 8) * 8


W_ROWS, W_TOTAL_ROWS = _build_w_layout()              # 360 rows
V_ROWS, V_TOTAL_ROWS = _build_v_layout()              # 40 rows


# ----------------------------- fused Pallas kernel -----------------------------

def _layernorm(y, g, b):
    mu = jnp.mean(y, axis=-1, keepdims=True)
    var = jnp.mean((y - mu) ** 2, axis=-1, keepdims=True)
    return (y - mu) * jax.lax.rsqrt(var + LN_EPS) * g + b


def _vrow(v_ref, name, width):
    r = V_ROWS[name]
    return v_ref[r:r + 1, 0:width]                    # (1, width) static aligned-lane slice


def fused_transformer_kernel(tok_ref, w_ref, v_ref, out_ref):
    inv_sqrt_depth = 1.0 / math.sqrt(DEPTH)

    # ---- embedding lookup as a one-hot matmul (gather-free, MXU-friendly) ----
    tok = tok_ref[...]                                                   # (BS, 1) int32
    vocab_iota = jax.lax.broadcasted_iota(jnp.int32, (BS, VOCAB), 1)
    onehot = jnp.where(tok == vocab_iota, 1.0, 0.0)                      # (BS, VOCAB) f32
    emb = w_ref[W_ROWS["emb"]:W_ROWS["emb"] + VOCAB, 0:D_MODEL]          # (VOCAB, D)
    x = jnp.dot(onehot, emb, preferred_element_type=jnp.float32)         # (BS, D)

    # constant block-diagonal additive mask (0 within a sequence, -1e30 across sequences),
    # packed on the host -> loop-invariant, no in-kernel iota/compare/select.
    attn_mask = v_ref[V_ROWS["mask"]:V_ROWS["mask"] + BS, 0:BS]          # (BS, BS)

    for l in range(N_LAYERS):                 # static loop; all slab offsets are static
        # ---- fused QKV projection: ONE (BS,32)@(32,96) matmul, columns per head [q|k|v] ----
        rq = W_ROWS[f"qkv{l}"]
        wqkv = w_ref[rq:rq + D_MODEL, 0:3 * D_MODEL]                     # (32, 96)
        qkv = jnp.dot(x, wqkv, preferred_element_type=jnp.float32)
        qkv = qkv + _vrow(v_ref, f"bqkv{l}", 3 * D_MODEL)                # (BS, 96)

        # ---- per-head attention on (BS, BS) scores, head-sum folded into the accumulation ----
        wo_base = W_ROWS[f"wo{l}"]
        attn_out = None
        for h in range(N_HEADS):
            base = 3 * DEPTH * h                                         # 8-lane aligned
            q_h = qkv[:, base:base + DEPTH]                              # (BS, DEPTH)
            k_h = qkv[:, base + DEPTH:base + 2 * DEPTH]
            v_h = qkv[:, base + 2 * DEPTH:base + 3 * DEPTH]

            s = lax.dot_general(q_h, k_h, (((1,), (1,)), ((), ())),
                                preferred_element_type=jnp.float32)      # (BS, BS)
            s = s * inv_sqrt_depth + attn_mask
            s = s - jnp.max(s, axis=-1, keepdims=True)
            p = jnp.exp(s)
            p = p * pl.reciprocal(jnp.sum(p, axis=-1, keepdims=True), approx=True)

            o_h = jnp.dot(p, v_h, preferred_element_type=jnp.float32)    # (BS, DEPTH)
            wo_h = w_ref[wo_base + h * DEPTH:wo_base + (h + 1) * DEPTH, 0:D_MODEL]
            contrib = jnp.dot(o_h, wo_h, preferred_element_type=jnp.float32)  # (BS, D)
            attn_out = contrib if attn_out is None else attn_out + contrib
        attn_out = attn_out + _vrow(v_ref, f"bo{l}", D_MODEL)

        # ---- residual + LayerNorm 1 ----
        y = _layernorm(x + attn_out,
                       _vrow(v_ref, f"ln1g{l}", D_MODEL),
                       _vrow(v_ref, f"ln1b{l}", D_MODEL))

        # ---- feed-forward (weights pre-transposed to (in,out) on the host) ----
        r1 = W_ROWS[f"w1{l}"]
        w1 = w_ref[r1:r1 + D_MODEL, 0:DIM_FF]                            # (32, 64)
        h1 = jnp.dot(y, w1, preferred_element_type=jnp.float32) + _vrow(v_ref, f"b1{l}", DIM_FF)
        h1 = jnp.maximum(h1, 0.0)
        r2 = W_ROWS[f"w2{l}"]
        w2 = w_ref[r2:r2 + DIM_FF, 0:D_MODEL]                            # (64, 32)
        ff = jnp.dot(h1, w2, preferred_element_type=jnp.float32) + _vrow(v_ref, f"b2{l}", D_MODEL)

        # ---- residual + LayerNorm 2 ----
        x = _layernorm(y + ff,
                       _vrow(v_ref, f"ln2g{l}", D_MODEL),
                       _vrow(v_ref, f"ln2b{l}", D_MODEL))

    # ---- classifier head on token 0 of each sequence: two static row slices, one small dot ----
    cls = jnp.concatenate([x[b * SEQ:b * SEQ + 1, :] for b in range(BATCH)], axis=0)  # (B, D)
    fcw = w_ref[W_ROWS["fc"]:W_ROWS["fc"] + D_MODEL, 0:N_CLASSES]                     # (D, C)
    out_ref[...] = (jnp.dot(cls, fcw, preferred_element_type=jnp.float32)
                    + _vrow(v_ref, "fcb", N_CLASSES))


# ----------------------------- wrapper -----------------------------

def transformer_classifier_forward(tokens, packed):
    tok_flat = tokens.reshape(BS, 1).astype(jnp.int32)
    vmem = pl.BlockSpec(memory_space=pltpu.MemorySpace.VMEM)
    return pl.pallas_call(
        fused_transformer_kernel,
        out_shape=jax.ShapeDtypeStruct((BATCH, N_CLASSES), jnp.float32),
        in_specs=[vmem, vmem, vmem],
        out_specs=vmem,
    )(tok_flat, packed["W"], packed["V"])


# ------------------- params (torch layout) + host-side slab packing -------------------

def init_params(key):
    keys = jax.random.split(key, 4 + 4 * N_LAYERS)

    def lin_w(k, out_dim, in_dim):
        return jax.random.normal(k, (out_dim, in_dim), jnp.float32) * 0.05

    params = {
        "embedding": jax.random.normal(keys[0], (VOCAB, D_MODEL), jnp.float32) * 0.05,
        "fc_w": lin_w(keys[1], N_CLASSES, D_MODEL),
        "fc_b": jnp.zeros((1, N_CLASSES), jnp.float32),
        "layers": [],
    }
    for l in range(N_LAYERS):
        k = jax.random.split(keys[4 + l], 6)
        layer = (
            lin_w(k[0], D_MODEL, D_MODEL), jnp.zeros((1, D_MODEL), jnp.float32),  # wq, bq
            lin_w(k[1], D_MODEL, D_MODEL), jnp.zeros((1, D_MODEL), jnp.float32),  # wk, bk
            lin_w(k[2], D_MODEL, D_MODEL), jnp.zeros((1, D_MODEL), jnp.float32),  # wv, bv
            lin_w(k[3], D_MODEL, D_MODEL), jnp.zeros((1, D_MODEL), jnp.float32),  # wo, bo
            lin_w(k[4], DIM_FF, D_MODEL), jnp.zeros((1, DIM_FF), jnp.float32),    # w1, b1
            lin_w(k[5], D_MODEL, DIM_FF), jnp.zeros((1, D_MODEL), jnp.float32),   # w2, b2
            jnp.ones((1, D_MODEL), jnp.float32), jnp.zeros((1, D_MODEL), jnp.float32),  # ln1
            jnp.ones((1, D_MODEL), jnp.float32), jnp.zeros((1, D_MODEL), jnp.float32),  # ln2
        )
        params["layers"].append(layer)
    return params


def pack_params(params):
    """One-time host-side prep: pre-transpose every dense weight to (in,out), fuse QKV per
    head along the output axis, and pack everything into two lane-dense f32 slabs."""
    W = np.zeros((W_TOTAL_ROWS, LANES), np.float32)
    V = np.zeros((V_TOTAL_ROWS, LANES), np.float32)

    def put_w(name, arr):
        a = np.asarray(arr, np.float32)
        r = W_ROWS[name]
        W[r:r + a.shape[0], 0:a.shape[1]] = a

    def put_v(name, arr):
        a = np.asarray(arr, np.float32)
        if a.ndim == 1:
            a = a.reshape(1, -1)
        r = V_ROWS[name]
        V[r:r + a.shape[0], 0:a.shape[1]] = a

    put_w("emb", params["embedding"])

    # constant block-diagonal additive attention mask
    rb = np.arange(BS)[:, None] // SEQ
    cb = np.arange(BS)[None, :] // SEQ
    put_v("mask", np.where(rb == cb, 0.0, NEG).astype(np.float32))

    for l, layer in enumerate(params["layers"]):
        (wq, bq, wk, bk, wv, bv, wo, bo, w1, b1, w2, b2, g1, be1, g2, be2) = layer
        wqT, wkT, wvT = np.asarray(wq).T, np.asarray(wk).T, np.asarray(wv).T    # (in, out)
        bqn, bkn, bvn = (np.asarray(b).reshape(-1) for b in (bq, bk, bv))

        # fused QKV: columns grouped per head as [q_h | k_h | v_h], each DEPTH wide
        wqkv = np.zeros((D_MODEL, 3 * D_MODEL), np.float32)
        bqkv = np.zeros((1, 3 * D_MODEL), np.float32)
        for h in range(N_HEADS):
            c, s = 3 * DEPTH * h, slice(h * DEPTH, (h + 1) * DEPTH)
            wqkv[:, c:c + DEPTH] = wqT[:, s]
            wqkv[:, c + DEPTH:c + 2 * DEPTH] = wkT[:, s]
            wqkv[:, c + 2 * DEPTH:c + 3 * DEPTH] = wvT[:, s]
            bqkv[0, c:c + DEPTH] = bqn[s]
            bqkv[0, c + DEPTH:c + 2 * DEPTH] = bkn[s]
            bqkv[0, c + 2 * DEPTH:c + 3 * DEPTH] = bvn[s]
        put_w(f"qkv{l}", wqkv)
        put_v(f"bqkv{l}", bqkv)

        put_w(f"wo{l}", np.asarray(wo).T)     # (D, D): rows [8h:8h+8] belong to head h
        put_v(f"bo{l}", bo)
        put_w(f"w1{l}", np.asarray(w1).T)     # (D, FF)
        put_v(f"b1{l}", b1)
        put_w(f"w2{l}", np.asarray(w2).T)     # (FF, D)
        put_v(f"b2{l}", b2)
        put_v(f"ln1g{l}", g1); put_v(f"ln1b{l}", be1)
        put_v(f"ln2g{l}", g2); put_v(f"ln2b{l}", be2)

    put_w("fc", np.asarray(params["fc_w"]).T)  # (D, C)
    put_v("fcb", params["fc_b"])
    return {"W": jnp.asarray(W), "V": jnp.asarray(V)}


# ----------------------------- pure-JAX reference -----------------------------

def reference_forward(tokens, params):
    def ln(y, g, b):
        mu = jnp.mean(y, axis=-1, keepdims=True)
        var = jnp.mean((y - mu) ** 2, axis=-1, keepdims=True)
        return (y - mu) * jax.lax.rsqrt(var + LN_EPS) * g + b

    x = params["embedding"][tokens]
    B, S, D = x.shape
    for (wq, bq, wk, bk, wv, bv, wo, bo, w1, b1, w2, b2, g1, be1, g2, be2) in params["layers"]:
        q = (x @ wq.T + bq).reshape(B, S, N_HEADS, DEPTH)
        k = (x @ wk.T + bk).reshape(B, S, N_HEADS, DEPTH)
        v = (x @ wv.T + bv).reshape(B, S, N_HEADS, DEPTH)
        scores = jnp.einsum("bqhd,bkhd->bhqk", q, k) / math.sqrt(DEPTH)
        p = jax.nn.softmax(scores, axis=-1)
        attn = jnp.einsum("bhqk,bkhd->bqhd", p, v).reshape(B, S, D)
        attn_out = attn @ wo.T + bo
        x = ln(x + attn_out, g1, be1)
        ff = jnp.maximum(x @ w1.T + b1, 0.0) @ w2.T + b2
        x = ln(x + ff, g2, be2)
    cls = x[:, 0]
    return cls @ params["fc_w"].T + params["fc_b"]


# ----------------------------- main -----------------------------

if __name__ == "__main__":
    key = jax.random.PRNGKey(0)
    pkey, tkey = jax.random.split(key)
    params = init_params(pkey)
    packed = pack_params(params)
    tokens = jax.random.randint(tkey, (BATCH, SEQ), 0, VOCAB, dtype=jnp.int32)

    fwd = jax.jit(transformer_classifier_forward)
    logits = jax.block_until_ready(fwd(tokens, packed))

    with jax.default_matmul_precision("highest"):
        ref = reference_forward(tokens, params)

    assert logits.shape == (BATCH, N_CLASSES)
    assert jnp.max(jnp.abs(logits - ref)) < 1e-2, "mismatch vs reference"

    print("KERNEL_OK")
</pallas_src>

<mosaic_0001>
module attributes {stable_mosaic.version = 11 : i64} {
  func.func @fused_transformer_kernel(%arg0: memref<16x1xi32, #tpu.memory_space<vmem>>, %arg1: memref<360x128xf32, #tpu.memory_space<vmem>>, %arg2: memref<40x128xf32, #tpu.memory_space<vmem>>, %arg3: memref<2x2xf32, #tpu.memory_space<vmem>>) attributes {dimension_semantics = [], scalar_prefetch = 0 : i64, scratch_operands = 0 : i64, tpu.core_type = #tpu.core_type<tc>} {
    %c0 = arith.constant 0 : index
    %c0_0 = arith.constant 0 : index
    %0 = vector.load %arg0[%c0, %c0_0] : memref<16x1xi32, #tpu.memory_space<vmem>>, vector<16x1xi32>
    %1 = tpu.iota {dimensions = array<i32: 1>} : vector<16x8xi32>
    %2 = vector.broadcast %0 : vector<16x1xi32> to vector<16x8xi32>
    %3 = arith.cmpi eq, %2, %1 : vector<16x8xi32>
    %cst = arith.constant 1.000000e+00 : f32
    %cst_1 = arith.constant 0.000000e+00 : f32
    %4 = vector.broadcast %cst : f32 to vector<16x8xf32>
    %5 = vector.broadcast %cst_1 : f32 to vector<16x8xf32>
    %6 = arith.select %3, %4, %5 : vector<16x8xi1>, vector<16x8xf32>
    %c0_2 = arith.constant 0 : index
    %c0_3 = arith.constant 0 : index
    %7 = vector.load %arg1[%c0_2, %c0_3] : memref<360x128xf32, #tpu.memory_space<vmem>>, vector<8x32xf32>
    %cst_4 = arith.constant dense<0.000000e+00> : vector<16x32xf32>
    %8 = tpu.matmul %6, %7, %cst_4 {dimension_numbers = #tpu.dot_dimension_numbers<[1], [0], [0], [1], [0, 0, 1, 1], [], []>} : vector<16x8xf32>, vector<8x32xf32>, vector<16x32xf32> -> vector<16x32xf32>
    %c0_5 = arith.constant 0 : index
    %c0_6 = arith.constant 0 : index
    %9 = vector.load %arg2[%c0_5, %c0_6] : memref<40x128xf32, #tpu.memory_space<vmem>>, vector<16x16xf32>
    %c8 = arith.constant 8 : index
    %c0_7 = arith.constant 0 : index
    %10 = vector.load %arg1[%c8, %c0_7] : memref<360x128xf32, #tpu.memory_space<vmem>>, vector<32x96xf32>
    %cst_8 = arith.constant dense<0.000000e+00> : vector<16x96xf32>
    %11 = tpu.matmul %8, %10, %cst_8 {dimension_numbers = #tpu.dot_dimension_numbers<[1], [0], [0], [1], [0, 0, 1, 1], [], []>} : vector<16x32xf32>, vector<32x96xf32>, vector<16x96xf32> -> vector<16x96xf32>
    %c16 = arith.constant 16 : index
    %c0_9 = arith.constant 0 : index
    %12 = vector.load %arg2[%c16, %c0_9] : memref<40x128xf32, #tpu.memory_space<vmem>>, vector<1x96xf32>
    %13 = vector.broadcast %12 : vector<1x96xf32> to vector<16x96xf32>
    %14 = arith.addf %11, %13 : vector<16x96xf32>
    %15 = vector.extract_strided_slice %14 {offsets = [0, 0], sizes = [16, 8], strides = [1, 1]} : vector<16x96xf32> to vector<16x8xf32>
    %16 = vector.extract_strided_slice %14 {offsets = [0, 8], sizes = [16, 8], strides = [1, 1]} : vector<16x96xf32> to vector<16x8xf32>
    %17 = vector.extract_strided_slice %14 {offsets = [0, 16], sizes = [16, 8], strides = [1, 1]} : vector<16x96xf32> to vector<16x8xf32>
    %cst_10 = arith.constant dense<0.000000e+00> : vector<16x16xf32>
    %18 = tpu.matmul %15, %16, %cst_10 {dimension_numbers = #tpu.dot_dimension_numbers<[1], [1], [0], [0], [0, 0, 1, 0], [], []>} : vector<16x8xf32>, vector<16x8xf32>, vector<16x16xf32> -> vector<16x16xf32>
    %cst_11 = arith.constant 0.353553385 : f32
    %19 = vector.broadcast %cst_11 : f32 to vector<16x16xf32>
    %20 = arith.mulf %18, %19 : vector<16x16xf32>
    %21 = arith.addf %20, %9 : vector<16x16xf32>
    %cst_12 = arith.constant dense<0xFF800000> : vector<16xf32>
    %22 = vector.multi_reduction <maximumf>, %21, %cst_12 [1] : vector<16x16xf32> to vector<16xf32>
    %23 = vector.shape_cast %22 : vector<16xf32> to vector<16x1xf32>
    %24 = vector.broadcast %23 : vector<16x1xf32> to vector<16x16xf32>
    %25 = arith.subf %21, %24 : vector<16x16xf32>
    %26 = math.exp %25 : vector<16x16xf32>
    %cst_13 = arith.constant dense<0.000000e+00> : vector<16xf32>
    %27 = vector.multi_reduction <add>, %26, %cst_13 [1] : vector<16x16xf32> to vector<16xf32>
    %28 = vector.shape_cast %27 : vector<16xf32> to vector<16x1xf32>
    %29 = tpu.reciprocal %28 {approx = true} : vector<16x1xf32> -> vector<16x1xf32>
    %30 = vector.broadcast %29 : vector<16x1xf32> to vector<16x16xf32>
    %31 = arith.mulf %26, %30 : vector<16x16xf32>
    %cst_14 = arith.constant dense<0.000000e+00> : vector<16x8xf32>
    %32 = tpu.matmul %31, %17, %cst_14 {dimension_numbers = #tpu.dot_dimension_numbers<[1], [0], [0], [1], [0, 0, 1, 1], [], []>} : vector<16x16xf32>, vector<16x8xf32>, vector<16x8xf32> -> vector<16x8xf32>
    %c40 = arith.constant 40 : index
    %c0_15 = arith.constant 0 : index
    %33 = vector.load %arg1[%c40, %c0_15] : memref<360x128xf32, #tpu.memory_space<vmem>>, vector<8x32xf32>
    %cst_16 = arith.constant dense<0.000000e+00> : vector<16x32xf32>
    %34 = tpu.matmul %32, %33, %cst_16 {dimension_numbers = #tpu.dot_dimension_numbers<[1], [0], [0], [1], [0, 0, 1, 1], [], []>} : vector<16x8xf32>, vector<8x32xf32>, vector<16x32xf32> -> vector<16x32xf32>
    %35 = vector.extract_strided_slice %14 {offsets = [0, 24], sizes = [16, 8], strides = [1, 1]} : vector<16x96xf32> to vector<16x8xf32>
    %36 = vector.extract_strided_slice %14 {offsets = [0, 32], sizes = [16, 8], strides = [1, 1]} : vector<16x96xf32> to vector<16x8xf32>
    %37 = vector.extract_strided_slice %14 {offsets = [0, 40], sizes = [16, 8], strides = [1, 1]} : vector<16x96xf32> to vector<16x8xf32>
    %cst_17 = arith.constant dense<0.000000e+00> : vector<16x16xf32>
    %38 = tpu.matmul %35, %36, %cst_17 {dimension_numbers = #tpu.dot_dimension_numbers<[1], [1], [0], [0], [0, 0, 1, 0], [], []>} : vector<16x8xf32>, vector<16x8xf32>, vector<16x16xf32> -> vector<16x16xf32>
    %cst_18 = arith.constant 0.353553385 : f32
    %39 = vector.broadcast %cst_18 : f32 to vector<16x16xf32>
    %40 = arith.mulf %38, %39 : vector<16x16xf32>
    %41 = arith.addf %40, %9 : vector<16x16xf32>
    %cst_19 = arith.constant dense<0xFF800000> : vector<16xf32>
    %42 = vector.multi_reduction <maximumf>, %41, %cst_19 [1] : vector<16x16xf32> to vector<16xf32>
    %43 = vector.shape_cast %42 : vector<16xf32> to vector<16x1xf32>
    %44 = vector.broadcast %43 : vector<16x1xf32> to vector<16x16xf32>
    %45 = arith.subf %41, %44 : vector<16x16xf32>
    %46 = math.exp %45 : vector<16x16xf32>
    %cst_20 = arith.constant dense<0.000000e+00> : vector<16xf32>
    %47 = vector.multi_reduction <add>, %46, %cst_20 [1] : vector<16x16xf32> to vector<16xf32>
    %48 = vector.shape_cast %47 : vector<16xf32> to vector<16x1xf32>
    %49 = tpu.reciprocal %48 {approx = true} : vector<16x1xf32> -> vector<16x1xf32>
    %50 = vector.broadcast %49 : vector<16x1xf32> to vector<16x16xf32>
    %51 = arith.mulf %46, %50 : vector<16x16xf32>
    %cst_21 = arith.constant dense<0.000000e+00> : vector<16x8xf32>
    %52 = tpu.matmul %51, %37, %cst_21 {dimension_numbers = #tpu.dot_dimension_numbers<[1], [0], [0], [1], [0, 0, 1, 1], [], []>} : vector<16x16xf32>, vector<16x8xf32>, vector<16x8xf32> -> vector<16x8xf32>
    %c48 = arith.constant 48 : index
    %c0_22 = arith.constant 0 : index
    %53 = vector.load %arg1[%c48, %c0_22] : memref<360x128xf32, #tpu.memory_space<vmem>>, vector<8x32xf32>
    %cst_23 = arith.constant dense<0.000000e+00> : vector<16x32xf32>
    %54 = tpu.matmul %52, %53, %cst_23 {dimension_numbers = #tpu.dot_dimension_numbers<[1], [0], [0], [1], [0, 0, 1, 1], [], []>} : vector<16x8xf32>, vector<8x32xf32>, vector<16x32xf32> -> vector<16x32xf32>
    %55 = arith.addf %34, %54 : vector<16x32xf32>
    %56 = vector.extract_strided_slice %14 {offsets = [0, 48], sizes = [16, 8], strides = [1, 1]} : vector<16x96xf32> to vector<16x8xf32>
    %57 = vector.extract_strided_slice %14 {offsets = [0, 56], sizes = [16, 8], strides = [1, 1]} : vector<16x96xf32> to vector<16x8xf32>
    %58 = vector.extract_strided_slice %14 {offsets = [0, 64], sizes = [16, 8], strides = [1, 1]} : vector<16x96xf32> to vector<16x8xf32>
    %cst_24 = arith.constant dense<0.000000e+00> : vector<16x16xf32>
    %59 = tpu.matmul %56, %57, %cst_24 {dimension_numbers = #tpu.dot_dimension_numbers<[1], [1], [0], [0], [0, 0, 1, 0], [], []>} : vector<16x8xf32>, vector<16x8xf32>, vector<16x16xf32> -> vector<16x16xf32>
    %cst_25 = arith.constant 0.353553385 : f32
    %60 = vector.broadcast %cst_25 : f32 to vector<16x16xf32>
    %61 = arith.mulf %59, %60 : vector<16x16xf32>
    %62 = arith.addf %61, %9 : vector<16x16xf32>
    %cst_26 = arith.constant dense<0xFF800000> : vector<16xf32>
    %63 = vector.multi_reduction <maximumf>, %62, %cst_26 [1] : vector<16x16xf32> to vector<16xf32>
    %64 = vector.shape_cast %63 : vector<16xf32> to vector<16x1xf32>
    %65 = vector.broadcast %64 : vector<16x1xf32> to vector<16x16xf32>
    %66 = arith.subf %62, %65 : vector<16x16xf32>
    %67 = math.exp %66 : vector<16x16xf32>
    %cst_27 = arith.constant dense<0.000000e+00> : vector<16xf32>
    %68 = vector.multi_reduction <add>, %67, %cst_27 [1] : vector<16x16xf32> to vector<16xf32>
    %69 = vector.shape_cast %68 : vector<16xf32> to vector<16x1xf32>
    %70 = tpu.reciprocal %69 {approx = true} : vector<16x1xf32> -> vector<16x1xf32>
    %71 = vector.broadcast %70 : vector<16x1xf32> to vector<16x16xf32>
    %72 = arith.mulf %67, %71 : vector<16x16xf32>
    %cst_28 = arith.constant dense<0.000000e+00> : vector<16x8xf32>
    %73 = tpu.matmul %72, %58, %cst_28 {dimension_numbers = #tpu.dot_dimension_numbers<[1], [0], [0], [1], [0, 0, 1, 1], [], []>} : vector<16x16xf32>, vector<16x8xf32>, vector<16x8xf32> -> vector<16x8xf32>
    %c56 = arith.constant 56 : index
    %c0_29 = arith.constant 0 : index
    %74 = vector.load %arg1[%c56, %c0_29] : memref<360x128xf32, #tpu.memory_space<vmem>>, vector<8x32xf32>
    %cst_30 = arith.constant dense<0.000000e+00> : vector<16x32xf32>
    %75 = tpu.matmul %73, %74, %cst_30 {dimension_numbers = #tpu.dot_dimension_numbers<[1], [0], [0], [1], [0, 0, 1, 1], [], []>} : vector<16x8xf32>, vector<8x32xf32>, vector<16x32xf32> -> vector<16x32xf32>
    %76 = arith.addf %55, %75 : vector<16x32xf32>
    %77 = vector.extract_strided_slice %14 {offsets = [0, 72], sizes = [16, 8], strides = [1, 1]} : vector<16x96xf32> to vector<16x8xf32>
    %78 = vector.extract_strided_slice %14 {offsets = [0, 80], sizes = [16, 8], strides = [1, 1]} : vector<16x96xf32> to vector<16x8xf32>
    %79 = vector.extract_strided_slice %14 {offsets = [0, 88], sizes = [16, 8], strides = [1, 1]} : vector<16x96xf32> to vector<16x8xf32>
    %cst_31 = arith.constant dense<0.000000e+00> : vector<16x16xf32>
    %80 = tpu.matmul %77, %78, %cst_31 {dimension_numbers = #tpu.dot_dimension_numbers<[1], [1], [0], [0], [0, 0, 1, 0], [], []>} : vector<16x8xf32>, vector<16x8xf32>, vector<16x16xf32> -> vector<16x16xf32>
    %cst_32 = arith.constant 0.353553385 : f32
    %81 = vector.broadcast %cst_32 : f32 to vector<16x16xf32>
    %82 = arith.mulf %80, %81 : vector<16x16xf32>
    %83 = arith.addf %82, %9 : vector<16x16xf32>
    %cst_33 = arith.constant dense<0xFF800000> : vector<16xf32>
    %84 = vector.multi_reduction <maximumf>, %83, %cst_33 [1] : vector<16x16xf32> to vector<16xf32>
    %85 = vector.shape_cast %84 : vector<16xf32> to vector<16x1xf32>
    %86 = vector.broadcast %85 : vector<16x1xf32> to vector<16x16xf32>
    %87 = arith.subf %83, %86 : vector<16x16xf32>
    %88 = math.exp %87 : vector<16x16xf32>
    %cst_34 = arith.constant dense<0.000000e+00> : vector<16xf32>
    %89 = vector.multi_reduction <add>, %88, %cst_34 [1] : vector<16x16xf32> to vector<16xf32>
    %90 = vector.shape_cast %89 : vector<16xf32> to vector<16x1xf32>
    %91 = tpu.reciprocal %90 {approx = true} : vector<16x1xf32> -> vector<16x1xf32>
    %92 = vector.broadcast %91 : vector<16x1xf32> to vector<16x16xf32>
    %93 = arith.mulf %88, %92 : vector<16x16xf32>
    %cst_35 = arith.constant dense<0.000000e+00> : vector<16x8xf32>
    %94 = tpu.matmul %93, %79, %cst_35 {dimension_numbers = #tpu.dot_dimension_numbers<[1], [0], [0], [1], [0, 0, 1, 1], [], []>} : vector<16x16xf32>, vector<16x8xf32>, vector<16x8xf32> -> vector<16x8xf32>
    %c64 = arith.constant 64 : index
    %c0_36 = arith.constant 0 : index
    %95 = vector.load %arg1[%c64, %c0_36] : memref<360x128xf32, #tpu.memory_space<vmem>>, vector<8x32xf32>
    %cst_37 = arith.constant dense<0.000000e+00> : vector<16x32xf32>
    %96 = tpu.matmul %94, %95, %cst_37 {dimension_numbers = #tpu.dot_dimension_numbers<[1], [0], [0], [1], [0, 0, 1, 1], [], []>} : vector<16x8xf32>, vector<8x32xf32>, vector<16x32xf32> -> vector<16x32xf32>
    %97 = arith.addf %76, %96 : vector<16x32xf32>
    %c17 = arith.constant 17 : index
    %c0_38 = arith.constant 0 : index
    %98 = vector.load %arg2[%c17, %c0_38] : memref<40x128xf32, #tpu.memory_space<vmem>>, vector<1x32xf32>
    %99 = vector.broadcast %98 : vector<1x32xf32> to vector<16x32xf32>
    %100 = arith.addf %97, %99 : vector<16x32xf32>
    %101 = arith.addf %8, %100 : vector<16x32xf32>
    %c20 = arith.constant 20 : index
    %c0_39 = arith.constant 0 : index
    %102 = vector.load %arg2[%c20, %c0_39] : memref<40x128xf32, #tpu.memory_space<vmem>>, vector<1x32xf32>
    %c21 = arith.constant 21 : index
    %c0_40 = arith.constant 0 : index
    %103 = vector.load %arg2[%c21, %c0_40] : memref<40x128xf32, #tpu.memory_space<vmem>>, vector<1x32xf32>
    %cst_41 = arith.constant dense<0.000000e+00> : vector<16xf32>
    %104 = vector.multi_reduction <add>, %101, %cst_41 [1] : vector<16x32xf32> to vector<16xf32>
    %105 = vector.shape_cast %104 : vector<16xf32> to vector<16x1xf32>
    %cst_42 = arith.constant 3.200000e+01 : f32
    %106 = vector.broadcast %cst_42 : f32 to vector<16x1xf32>
    %107 = arith.divf %105, %106 : vector<16x1xf32>
    %108 = vector.broadcast %107 : vector<16x1xf32> to vector<16x32xf32>
    %109 = arith.subf %101, %108 : vector<16x32xf32>
    %110 = arith.mulf %109, %109 : vector<16x32xf32>
    %cst_43 = arith.constant dense<0.000000e+00> : vector<16xf32>
    %111 = vector.multi_reduction <add>, %110, %cst_43 [1] : vector<16x32xf32> to vector<16xf32>
    %112 = vector.shape_cast %111 : vector<16xf32> to vector<16x1xf32>
    %cst_44 = arith.constant 3.200000e+01 : f32
    %113 = vector.broadcast %cst_44 : f32 to vector<16x1xf32>
    %114 = arith.divf %112, %113 : vector<16x1xf32>
    %115 = vector.broadcast %107 : vector<16x1xf32> to vector<16x32xf32>
    %116 = arith.subf %101, %115 : vector<16x32xf32>
    %cst_45 = arith.constant 9.99999974E-6 : f32
    %117 = vector.broadcast %cst_45 : f32 to vector<16x1xf32>
    %118 = arith.addf %114, %117 : vector<16x1xf32>
    %119 = math.rsqrt %118 : vector<16x1xf32>
    %120 = vector.broadcast %119 : vector<16x1xf32> to vector<16x32xf32>
    %121 = arith.mulf %116, %120 : vector<16x32xf32>
    %122 = vector.broadcast %102 : vector<1x32xf32> to vector<16x32xf32>
    %123 = arith.mulf %121, %122 : vector<16x32xf32>
    %124 = vector.broadcast %103 : vector<1x32xf32> to vector<16x32xf32>
    %125 = arith.addf %123, %124 : vector<16x32xf32>
    %c72 = arith.constant 72 : index
    %c0_46 = arith.constant 0 : index
    %126 = vector.load %arg1[%c72, %c0_46] : memref<360x128xf32, #tpu.memory_space<vmem>>, vector<32x64xf32>
    %cst_47 = arith.constant dense<0.000000e+00> : vector<16x64xf32>
    %127 = tpu.matmul %125, %126, %cst_47 {dimension_numbers = #tpu.dot_dimension_numbers<[1], [0], [0], [1], [0, 0, 1, 1], [], []>} : vector<16x32xf32>, vector<32x64xf32>, vector<16x64xf32> -> vector<16x64xf32>
    %c18 = arith.constant 18 : index
    %c0_48 = arith.constant 0 : index
    %128 = vector.load %arg2[%c18, %c0_48] : memref<40x128xf32, #tpu.memory_space<vmem>>, vector<1x64xf32>
    %129 = vector.broadcast %128 : vector<1x64xf32> to vector<16x64xf32>
    %130 = arith.addf %127, %129 : vector<16x64xf32>
    %cst_49 = arith.constant 0.000000e+00 : f32
    %131 = vector.broadcast %cst_49 : f32 to vector<16x64xf32>
    %132 = arith.maximumf %130, %131 : vector<16x64xf32>
    %c104 = arith.constant 104 : index
    %c0_50 = arith.constant 0 : index
    %133 = vector.load %arg1[%c104, %c0_50] : memref<360x128xf32, #tpu.memory_space<vmem>>, vector<64x32xf32>
    %cst_51 = arith.constant dense<0.000000e+00> : vector<16x32xf32>
    %134 = tpu.matmul %132, %133, %cst_51 {dimension_numbers = #tpu.dot_dimension_numbers<[1], [0], [0], [1], [0, 0, 1, 1], [], []>} : vector<16x64xf32>, vector<64x32xf32>, vector<16x32xf32> -> vector<16x32xf32>
    %c19 = arith.constant 19 : index
    %c0_52 = arith.constant 0 : index
    %135 = vector.load %arg2[%c19, %c0_52] : memref<40x128xf32, #tpu.memory_space<vmem>>, vector<1x32xf32>
    %136 = vector.broadcast %135 : vector<1x32xf32> to vector<16x32xf32>
    %137 = arith.addf %134, %136 : vector<16x32xf32>
    %138 = arith.addf %125, %137 : vector<16x32xf32>
    %c22 = arith.constant 22 : index
    %c0_53 = arith.constant 0 : index
    %139 = vector.load %arg2[%c22, %c0_53] : memref<40x128xf32, #tpu.memory_space<vmem>>, vector<1x32xf32>
    %c23 = arith.constant 23 : index
    %c0_54 = arith.constant 0 : index
    %140 = vector.load %arg2[%c23, %c0_54] : memref<40x128xf32, #tpu.memory_space<vmem>>, vector<1x32xf32>
    %cst_55 = arith.constant dense<0.000000e+00> : vector<16xf32>
    %141 = vector.multi_reduction <add>, %138, %cst_55 [1] : vector<16x32xf32> to vector<16xf32>
    %142 = vector.shape_cast %141 : vector<16xf32> to vector<16x1xf32>
    %cst_56 = arith.constant 3.200000e+01 : f32
    %143 = vector.broadcast %cst_56 : f32 to vector<16x1xf32>
    %144 = arith.divf %142, %143 : vector<16x1xf32>
    %145 = vector.broadcast %144 : vector<16x1xf32> to vector<16x32xf32>
    %146 = arith.subf %138, %145 : vector<16x32xf32>
    %147 = arith.mulf %146, %146 : vector<16x32xf32>
    %cst_57 = arith.constant dense<0.000000e+00> : vector<16xf32>
    %148 = vector.multi_reduction <add>, %147, %cst_57 [1] : vector<16x32xf32> to vector<16xf32>
    %149 = vector.shape_cast %148 : vector<16xf32> to vector<16x1xf32>
    %cst_58 = arith.constant 3.200000e+01 : f32
    %150 = vector.broadcast %cst_58 : f32 to vector<16x1xf32>
    %151 = arith.divf %149, %150 : vector<16x1xf32>
    %152 = vector.broadcast %144 : vector<16x1xf32> to vector<16x32xf32>
    %153 = arith.subf %138, %152 : vector<16x32xf32>
    %cst_59 = arith.constant 9.99999974E-6 : f32
    %154 = vector.broadcast %cst_59 : f32 to vector<16x1xf32>
    %155 = arith.addf %151, %154 : vector<16x1xf32>
    %156 = math.rsqrt %155 : vector<16x1xf32>
    %157 = vector.broadcast %156 : vector<16x1xf32> to vector<16x32xf32>
    %158 = arith.mulf %153, %157 : vector<16x32xf32>
    %159 = vector.broadcast %139 : vector<1x32xf32> to vector<16x32xf32>
    %160 = arith.mulf %158, %159 : vector<16x32xf32>
    %161 = vector.broadcast %140 : vector<1x32xf32> to vector<16x32xf32>
    %162 = arith.addf %160, %161 : vector<16x32xf32>
    %c168 = arith.constant 168 : index
    %c0_60 = arith.constant 0 : index
    %163 = vector.load %arg1[%c168, %c0_60] : memref<360x128xf32, #tpu.memory_space<vmem>>, vector<32x96xf32>
    %cst_61 = arith.constant dense<0.000000e+00> : vector<16x96xf32>
    %164 = tpu.matmul %162, %163, %cst_61 {dimension_numbers = #tpu.dot_dimension_numbers<[1], [0], [0], [1], [0, 0, 1, 1], [], []>} : vector<16x32xf32>, vector<32x96xf32>, vector<16x96xf32> -> vector<16x96xf32>
    %c24 = arith.constant 24 : index
    %c0_62 = arith.constant 0 : index
    %165 = vector.load %arg2[%c24, %c0_62] : memref<40x128xf32, #tpu.memory_space<vmem>>, vector<1x96xf32>
    %166 = vector.broadcast %165 : vector<1x96xf32> to vector<16x96xf32>
    %167 = arith.addf %164, %166 : vector<16x96xf32>
    %168 = vector.extract_strided_slice %167 {offsets = [0, 0], sizes = [16, 8], strides = [1, 1]} : vector<16x96xf32> to vector<16x8xf32>
    %169 = vector.extract_strided_slice %167 {offsets = [0, 8], sizes = [16, 8], strides = [1, 1]} : vector<16x96xf32> to vector<16x8xf32>
    %170 = vector.extract_strided_slice %167 {offsets = [0, 16], sizes = [16, 8], strides = [1, 1]} : vector<16x96xf32> to vector<16x8xf32>
    %cst_63 = arith.constant dense<0.000000e+00> : vector<16x16xf32>
    %171 = tpu.matmul %168, %169, %cst_63 {dimension_numbers = #tpu.dot_dimension_numbers<[1], [1], [0], [0], [0, 0, 1, 0], [], []>} : vector<16x8xf32>, vector<16x8xf32>, vector<16x16xf32> -> vector<16x16xf32>
    %cst_64 = arith.constant 0.353553385 : f32
    %172 = vector.broadcast %cst_64 : f32 to vector<16x16xf32>
    %173 = arith.mulf %171, %172 : vector<16x16xf32>
    %174 = arith.addf %173, %9 : vector<16x16xf32>
    %cst_65 = arith.constant dense<0xFF800000> : vector<16xf32>
    %175 = vector.multi_reduction <maximumf>, %174, %cst_65 [1] : vector<16x16xf32> to vector<16xf32>
    %176 = vector.shape_cast %175 : vector<16xf32> to vector<16x1xf32>
    %177 = vector.broadcast %176 : vector<16x1xf32> to vector<16x16xf32>
    %178 = arith.subf %174, %177 : vector<16x16xf32>
    %179 = math.exp %178 : vector<16x16xf32>
    %cst_66 = arith.constant dense<0.000000e+00> : vector<16xf32>
    %180 = vector.multi_reduction <add>, %179, %cst_66 [1] : vector<16x16xf32> to vector<16xf32>
    %181 = vector.shape_cast %180 : vector<16xf32> to vector<16x1xf32>
    %182 = tpu.reciprocal %181 {approx = true} : vector<16x1xf32> -> vector<16x1xf32>
    %183 = vector.broadcast %182 : vector<16x1xf32> to vector<16x16xf32>
    %184 = arith.mulf %179, %183 : vector<16x16xf32>
    %cst_67 = arith.constant dense<0.000000e+00> : vector<16x8xf32>
    %185 = tpu.matmul %184, %170, %cst_67 {dimension_numbers = #tpu.dot_dimension_numbers<[1], [0], [0], [1], [0, 0, 1, 1], [], []>} : vector<16x16xf32>, vector<16x8xf32>, vector<16x8xf32> -> vector<16x8xf32>
    %c200 = arith.constant 200 : index
    %c0_68 = arith.constant 0 : index
    %186 = vector.load %arg1[%c200, %c0_68] : memref<360x128xf32, #tpu.memory_space<vmem>>, vector<8x32xf32>
    %cst_69 = arith.constant dense<0.000000e+00> : vector<16x32xf32>
    %187 = tpu.matmul %185, %186, %cst_69 {dimension_numbers = #tpu.dot_dimension_numbers<[1], [0], [0], [1], [0, 0, 1, 1], [], []>} : vector<16x8xf32>, vector<8x32xf32>, vector<16x32xf32> -> vector<16x32xf32>
    %188 = vector.extract_strided_slice %167 {offsets = [0, 24], sizes = [16, 8], strides = [1, 1]} : vector<16x96xf32> to vector<16x8xf32>
    %189 = vector.extract_strided_slice %167 {offsets = [0, 32], sizes = [16, 8], strides = [1, 1]} : vector<16x96xf32> to vector<16x8xf32>
    %190 = vector.extract_strided_slice %167 {offsets = [0, 40], sizes = [16, 8], strides = [1, 1]} : vector<16x96xf32> to vector<16x8xf32>
    %cst_70 = arith.constant dense<0.000000e+00> : vector<16x16xf32>
    %191 = tpu.matmul %188, %189, %cst_70 {dimension_numbers = #tpu.dot_dimension_numbers<[1], [1], [0], [0], [0, 0, 1, 0], [], []>} : vector<16x8xf32>, vector<16x8xf32>, vector<16x16xf32> -> vector<16x16xf32>
    %cst_71 = arith.constant 0.353553385 : f32
    %192 = vector.broadcast %cst_71 : f32 to vector<16x16xf32>
    %193 = arith.mulf %191, %192 : vector<16x16xf32>
    %194 = arith.addf %193, %9 : vector<16x16xf32>
    %cst_72 = arith.constant dense<0xFF800000> : vector<16xf32>
    %195 = vector.multi_reduction <maximumf>, %194, %cst_72 [1] : vector<16x16xf32> to vector<16xf32>
    %196 = vector.shape_cast %195 : vector<16xf32> to vector<16x1xf32>
    %197 = vector.broadcast %196 : vector<16x1xf32> to vector<16x16xf32>
    %198 = arith.subf %194, %197 : vector<16x16xf32>
    %199 = math.exp %198 : vector<16x16xf32>
    %cst_73 = arith.constant dense<0.000000e+00> : vector<16xf32>
    %200 = vector.multi_reduction <add>, %199, %cst_73 [1] : vector<16x16xf32> to vector<16xf32>
    %201 = vector.shape_cast %200 : vector<16xf32> to vector<16x1xf32>
    %202 = tpu.reciprocal %201 {approx = true} : vector<16x1xf32> -> vector<16x1xf32>
    %203 = vector.broadcast %202 : vector<16x1xf32> to vector<16x16xf32>
    %204 = arith.mulf %199, %203 : vector<16x16xf32>
    %cst_74 = arith.constant dense<0.000000e+00> : vector<16x8xf32>
    %205 = tpu.matmul %204, %190, %cst_74 {dimension_numbers = #tpu.dot_dimension_numbers<[1], [0], [0], [1], [0, 0, 1, 1], [], []>} : vector<16x16xf32>, vector<16x8xf32>, vector<16x8xf32> -> vector<16x8xf32>
    %c208 = arith.constant 208 : index
    %c0_75 = arith.constant 0 : index
    %206 = vector.load %arg1[%c208, %c0_75] : memref<360x128xf32, #tpu.memory_space<vmem>>, vector<8x32xf32>
    %cst_76 = arith.constant dense<0.000000e+00> : vector<16x32xf32>
    %207 = tpu.matmul %205, %206, %cst_76 {dimension_numbers = #tpu.dot_dimension_numbers<[1], [0], [0], [1], [0, 0, 1, 1], [], []>} : vector<16x8xf32>, vector<8x32xf32>, vector<16x32xf32> -> vector<16x32xf32>
    %208 = arith.addf %187, %207 : vector<16x32xf32>
    %209 = vector.extract_strided_slice %167 {offsets = [0, 48], sizes = [16, 8], strides = [1, 1]} : vector<16x96xf32> to vector<16x8xf32>
    %210 = vector.extract_strided_slice %167 {offsets = [0, 56], sizes = [16, 8], strides = [1, 1]} : vector<16x96xf32> to vector<16x8xf32>
    %211 = vector.extract_strided_slice %167 {offsets = [0, 64], sizes = [16, 8], strides = [1, 1]} : vector<16x96xf32> to vector<16x8xf32>
    %cst_77 = arith.constant dense<0.000000e+00> : vector<16x16xf32>
    %212 = tpu.matmul %209, %210, %cst_77 {dimension_numbers = #tpu.dot_dimension_numbers<[1], [1], [0], [0], [0, 0, 1, 0], [], []>} : vector<16x8xf32>, vector<16x8xf32>, vector<16x16xf32> -> vector<16x16xf32>
    %cst_78 = arith.constant 0.353553385 : f32
    %213 = vector.broadcast %cst_78 : f32 to vector<16x16xf32>
    %214 = arith.mulf %212, %213 : vector<16x16xf32>
    %215 = arith.addf %214, %9 : vector<16x16xf32>
    %cst_79 = arith.constant dense<0xFF800000> : vector<16xf32>
    %216 = vector.multi_reduction <maximumf>, %215, %cst_79 [1] : vector<16x16xf32> to vector<16xf32>
    %217 = vector.shape_cast %216 : vector<16xf32> to vector<16x1xf32>
    %218 = vector.broadcast %217 : vector<16x1xf32> to vector<16x16xf32>
    %219 = arith.subf %215, %218 : vector<16x16xf32>
    %220 = math.exp %219 : vector<16x16xf32>
    %cst_80 = arith.constant dense<0.000000e+00> : vector<16xf32>
    %221 = vector.multi_reduction <add>, %220, %cst_80 [1] : vector<16x16xf32> to vector<16xf32>
    %222 = vector.shape_cast %221 : vector<16xf32> to vector<16x1xf32>
    %223 = tpu.reciprocal %222 {approx = true} : vector<16x1xf32> -> vector<16x1xf32>
    %224 = vector.broadcast %223 : vector<16x1xf32> to vector<16x16xf32>
    %225 = arith.mulf %220, %224 : vector<16x16xf32>
    %cst_81 = arith.constant dense<0.000000e+00> : vector<16x8xf32>
    %226 = tpu.matmul %225, %211, %cst_81 {dimension_numbers = #tpu.dot_dimension_numbers<[1], [0], [0], [1], [0, 0, 1, 1], [], []>} : vector<16x16xf32>, vector<16x8xf32>, vector<16x8xf32> -> vector<16x8xf32>
    %c216 = arith.constant 216 : index
    %c0_82 = arith.constant 0 : index
    %227 = vector.load %arg1[%c216, %c0_82] : memref<360x128xf32, #tpu.memory_space<vmem>>, vector<8x32xf32>
    %cst_83 = arith.constant dense<0.000000e+00> : vector<16x32xf32>
    %228 = tpu.matmul %226, %227, %cst_83 {dimension_numbers = #tpu.dot_dimension_numbers<[1], [0], [0], [1], [0, 0, 1, 1], [], []>} : vector<16x8xf32>, vector<8x32xf32>, vector<16x32xf32> -> vector<16x32xf32>
    %229 = arith.addf %208, %228 : vector<16x32xf32>
    %230 = vector.extract_strided_slice %167 {offsets = [0, 72], sizes = [16, 8], strides = [1, 1]} : vector<16x96xf32> to vector<16x8xf32>
    %231 = vector.extract_strided_slice %167 {offsets = [0, 80], sizes = [16, 8], strides = [1, 1]} : vector<16x96xf32> to vector<16x8xf32>
    %232 = vector.extract_strided_slice %167 {offsets = [0, 88], sizes = [16, 8], strides = [1, 1]} : vector<16x96xf32> to vector<16x8xf32>
    %cst_84 = arith.constant dense<0.000000e+00> : vector<16x16xf32>
    %233 = tpu.matmul %230, %231, %cst_84 {dimension_numbers = #tpu.dot_dimension_numbers<[1], [1], [0], [0], [0, 0, 1, 0], [], []>} : vector<16x8xf32>, vector<16x8xf32>, vector<16x16xf32> -> vector<16x16xf32>
    %cst_85 = arith.constant 0.353553385 : f32
    %234 = vector.broadcast %cst_85 : f32 to vector<16x16xf32>
    %235 = arith.mulf %233, %234 : vector<16x16xf32>
    %236 = arith.addf %235, %9 : vector<16x16xf32>
    %cst_86 = arith.constant dense<0xFF800000> : vector<16xf32>
    %237 = vector.multi_reduction <maximumf>, %236, %cst_86 [1] : vector<16x16xf32> to vector<16xf32>
    %238 = vector.shape_cast %237 : vector<16xf32> to vector<16x1xf32>
    %239 = vector.broadcast %238 : vector<16x1xf32> to vector<16x16xf32>
    %240 = arith.subf %236, %239 : vector<16x16xf32>
    %241 = math.exp %240 : vector<16x16xf32>
    %cst_87 = arith.constant dense<0.000000e+00> : vector<16xf32>
    %242 = vector.multi_reduction <add>, %241, %cst_87 [1] : vector<16x16xf32> to vector<16xf32>
    %243 = vector.shape_cast %242 : vector<16xf32> to vector<16x1xf32>
    %244 = tpu.reciprocal %243 {approx = true} : vector<16x1xf32> -> vector<16x1xf32>
    %245 = vector.broadcast %244 : vector<16x1xf32> to vector<16x16xf32>
    %246 = arith.mulf %241, %245 : vector<16x16xf32>
    %cst_88 = arith.constant dense<0.000000e+00> : vector<16x8xf32>
    %247 = tpu.matmul %246, %232, %cst_88 {dimension_numbers = #tpu.dot_dimension_numbers<[1], [0], [0], [1], [0, 0, 1, 1], [], []>} : vector<16x16xf32>, vector<16x8xf32>, vector<16x8xf32> -> vector<16x8xf32>
    %c224 = arith.constant 224 : index
    %c0_89 = arith.constant 0 : index
    %248 = vector.load %arg1[%c224, %c0_89] : memref<360x128xf32, #tpu.memory_space<vmem>>, vector<8x32xf32>
    %cst_90 = arith.constant dense<0.000000e+00> : vector<16x32xf32>
    %249 = tpu.matmul %247, %248, %cst_90 {dimension_numbers = #tpu.dot_dimension_numbers<[1], [0], [0], [1], [0, 0, 1, 1], [], []>} : vector<16x8xf32>, vector<8x32xf32>, vector<16x32xf32> -> vector<16x32xf32>
    %250 = arith.addf %229, %249 : vector<16x32xf32>
    %c25 = arith.constant 25 : index
    %c0_91 = arith.constant 0 : index
    %251 = vector.load %arg2[%c25, %c0_91] : memref<40x128xf32, #tpu.memory_space<vmem>>, vector<1x32xf32>
    %252 = vector.broadcast %251 : vector<1x32xf32> to vector<16x32xf32>
    %253 = arith.addf %250, %252 : vector<16x32xf32>
    %254 = arith.addf %162, %253 : vector<16x32xf32>
    %c28 = arith.constant 28 : index
    %c0_92 = arith.constant 0 : index
    %255 = vector.load %arg2[%c28, %c0_92] : memref<40x128xf32, #tpu.memory_space<vmem>>, vector<1x32xf32>
    %c29 = arith.constant 29 : index
    %c0_93 = arith.constant 0 : index
    %256 = vector.load %arg2[%c29, %c0_93] : memref<40x128xf32, #tpu.memory_space<vmem>>, vector<1x32xf32>
    %cst_94 = arith.constant dense<0.000000e+00> : vector<16xf32>
    %257 = vector.multi_reduction <add>, %254, %cst_94 [1] : vector<16x32xf32> to vector<16xf32>
    %258 = vector.shape_cast %257 : vector<16xf32> to vector<16x1xf32>
    %cst_95 = arith.constant 3.200000e+01 : f32
    %259 = vector.broadcast %cst_95 : f32 to vector<16x1xf32>
    %260 = arith.divf %258, %259 : vector<16x1xf32>
    %261 = vector.broadcast %260 : vector<16x1xf32> to vector<16x32xf32>
    %262 = arith.subf %254, %261 : vector<16x32xf32>
    %263 = arith.mulf %262, %262 : vector<16x32xf32>
    %cst_96 = arith.constant dense<0.000000e+00> : vector<16xf32>
    %264 = vector.multi_reduction <add>, %263, %cst_96 [1] : vector<16x32xf32> to vector<16xf32>
    %265 = vector.shape_cast %264 : vector<16xf32> to vector<16x1xf32>
    %cst_97 = arith.constant 3.200000e+01 : f32
    %266 = vector.broadcast %cst_97 : f32 to vector<16x1xf32>
    %267 = arith.divf %265, %266 : vector<16x1xf32>
    %268 = vector.broadcast %260 : vector<16x1xf32> to vector<16x32xf32>
    %269 = arith.subf %254, %268 : vector<16x32xf32>
    %cst_98 = arith.constant 9.99999974E-6 : f32
    %270 = vector.broadcast %cst_98 : f32 to vector<16x1xf32>
    %271 = arith.addf %267, %270 : vector<16x1xf32>
    %272 = math.rsqrt %271 : vector<16x1xf32>
    %273 = vector.broadcast %272 : vector<16x1xf32> to vector<16x32xf32>
    %274 = arith.mulf %269, %273 : vector<16x32xf32>
    %275 = vector.broadcast %255 : vector<1x32xf32> to vector<16x32xf32>
    %276 = arith.mulf %274, %275 : vector<16x32xf32>
    %277 = vector.broadcast %256 : vector<1x32xf32> to vector<16x32xf32>
    %278 = arith.addf %276, %277 : vector<16x32xf32>
    %c232 = arith.constant 232 : index
    %c0_99 = arith.constant 0 : index
    %279 = vector.load %arg1[%c232, %c0_99] : memref<360x128xf32, #tpu.memory_space<vmem>>, vector<32x64xf32>
    %cst_100 = arith.constant dense<0.000000e+00> : vector<16x64xf32>
    %280 = tpu.matmul %278, %279, %cst_100 {dimension_numbers = #tpu.dot_dimension_numbers<[1], [0], [0], [1], [0, 0, 1, 1], [], []>} : vector<16x32xf32>, vector<32x64xf32>, vector<16x64xf32> -> vector<16x64xf32>
    %c26 = arith.constant 26 : index
    %c0_101 = arith.constant 0 : index
    %281 = vector.load %arg2[%c26, %c0_101] : memref<40x128xf32, #tpu.memory_space<vmem>>, vector<1x64xf32>
    %282 = vector.broadcast %281 : vector<1x64xf32> to vector<16x64xf32>
    %283 = arith.addf %280, %282 : vector<16x64xf32>
    %cst_102 = arith.constant 0.000000e+00 : f32
    %284 = vector.broadcast %cst_102 : f32 to vector<16x64xf32>
    %285 = arith.maximumf %283, %284 : vector<16x64xf32>
    %c264 = arith.constant 264 : index
    %c0_103 = arith.constant 0 : index
    %286 = vector.load %arg1[%c264, %c0_103] : memref<360x128xf32, #tpu.memory_space<vmem>>, vector<64x32xf32>
    %cst_104 = arith.constant dense<0.000000e+00> : vector<16x32xf32>
    %287 = tpu.matmul %285, %286, %cst_104 {dimension_numbers = #tpu.dot_dimension_numbers<[1], [0], [0], [1], [0, 0, 1, 1], [], []>} : vector<16x64xf32>, vector<64x32xf32>, vector<16x32xf32> -> vector<16x32xf32>
    %c27 = arith.constant 27 : index
    %c0_105 = arith.constant 0 : index
    %288 = vector.load %arg2[%c27, %c0_105] : memref<40x128xf32, #tpu.memory_space<vmem>>, vector<1x32xf32>
    %289 = vector.broadcast %288 : vector<1x32xf32> to vector<16x32xf32>
    %290 = arith.addf %287, %289 : vector<16x32xf32>
    %291 = arith.addf %278, %290 : vector<16x32xf32>
    %c30 = arith.constant 30 : index
    %c0_106 = arith.constant 0 : index
    %292 = vector.load %arg2[%c30, %c0_106] : memref<40x128xf32, #tpu.memory_space<vmem>>, vector<1x32xf32>
    %c31 = arith.constant 31 : index
    %c0_107 = arith.constant 0 : index
    %293 = vector.load %arg2[%c31, %c0_107] : memref<40x128xf32, #tpu.memory_space<vmem>>, vector<1x32xf32>
    %cst_108 = arith.constant dense<0.000000e+00> : vector<16xf32>
    %294 = vector.multi_reduction <add>, %291, %cst_108 [1] : vector<16x32xf32> to vector<16xf32>
    %295 = vector.shape_cast %294 : vector<16xf32> to vector<16x1xf32>
    %cst_109 = arith.constant 3.200000e+01 : f32
    %296 = vector.broadcast %cst_109 : f32 to vector<16x1xf32>
    %297 = arith.divf %295, %296 : vector<16x1xf32>
    %298 = vector.broadcast %297 : vector<16x1xf32> to vector<16x32xf32>
    %299 = arith.subf %291, %298 : vector<16x32xf32>
    %300 = arith.mulf %299, %299 : vector<16x32xf32>
    %cst_110 = arith.constant dense<0.000000e+00> : vector<16xf32>
    %301 = vector.multi_reduction <add>, %300, %cst_110 [1] : vector<16x32xf32> to vector<16xf32>
    %302 = vector.shape_cast %301 : vector<16xf32> to vector<16x1xf32>
    %cst_111 = arith.constant 3.200000e+01 : f32
    %303 = vector.broadcast %cst_111 : f32 to vector<16x1xf32>
    %304 = arith.divf %302, %303 : vector<16x1xf32>
    %305 = vector.broadcast %297 : vector<16x1xf32> to vector<16x32xf32>
    %306 = arith.subf %291, %305 : vector<16x32xf32>
    %cst_112 = arith.constant 9.99999974E-6 : f32
    %307 = vector.broadcast %cst_112 : f32 to vector<16x1xf32>
    %308 = arith.addf %304, %307 : vector<16x1xf32>
    %309 = math.rsqrt %308 : vector<16x1xf32>
    %310 = vector.broadcast %309 : vector<16x1xf32> to vector<16x32xf32>
    %311 = arith.mulf %306, %310 : vector<16x32xf32>
    %312 = vector.broadcast %292 : vector<1x32xf32> to vector<16x32xf32>
    %313 = arith.mulf %311, %312 : vector<16x32xf32>
    %314 = vector.broadcast %293 : vector<1x32xf32> to vector<16x32xf32>
    %315 = arith.addf %313, %314 : vector<16x32xf32>
    %316 = vector.extract_strided_slice %315 {offsets = [0, 0], sizes = [1, 32], strides = [1, 1]} : vector<16x32xf32> to vector<1x32xf32>
    %317 = vector.extract_strided_slice %315 {offsets = [8, 0], sizes = [1, 32], strides = [1, 1]} : vector<16x32xf32> to vector<1x32xf32>
    %318 = tpu.concatenate %316, %317 in 0 : vector<1x32xf32>, vector<1x32xf32> -> vector<2x32xf32>
    %c328 = arith.constant 328 : index
    %c0_113 = arith.constant 0 : index
    %319 = vector.load %arg1[%c328, %c0_113] : memref<360x128xf32, #tpu.memory_space<vmem>>, vector<32x2xf32>
    %cst_114 = arith.constant dense<0.000000e+00> : vector<2x2xf32>
    %320 = tpu.matmul %318, %319, %cst_114 {dimension_numbers = #tpu.dot_dimension_numbers<[1], [0], [0], [1], [0, 0, 1, 1], [], []>} : vector<2x32xf32>, vector<32x2xf32>, vector<2x2xf32> -> vector<2x2xf32>
    %c32 = arith.constant 32 : index
    %c0_115 = arith.constant 0 : index
    %321 = vector.load %arg2[%c32, %c0_115] : memref<40x128xf32, #tpu.memory_space<vmem>>, vector<1x2xf32>
    %322 = vector.broadcast %321 : vector<1x2xf32> to vector<2x2xf32>
    %323 = arith.addf %320, %322 : vector<2x2xf32>
    %c0_116 = arith.constant 0 : index
    %c0_117 = arith.constant 0 : index
    %324 = vector.load %arg3[%c0_116, %c0_117] : memref<2x2xf32, #tpu.memory_space<vmem>>, vector<2x2xf32>
    tpu.vector_store %arg3[%c0_116, %c0_117], %323 {strides = array<i32>} : memref<2x2xf32, #tpu.memory_space<vmem>>, vector<2x2xf32>,
    return
  }
}

</mosaic_0001>

<llo_original>
// kernel: transformer_classifier_forward.1
$region0: #{transformer_classifier_forward.1}
  #allocation0 [shape = 'u32[]', space=smem, size = 0x4, offset = 0x4, fixed_abs, tag = 'smem constant byte address 0x4 - core index']
  #allocation1 [shape = 'u32[144,128]{1,0:T(1,128)}', space=vmem, size = 0x12000, scoped, tag = 'internal scratch']
  %s0 = inlined_call_operand.vmem [shape: s32[16,1], index: 0, kind: input, shape index: {}]
  %s1 = inlined_call_operand.hbm [shape: f32[360,128], index: 1, kind: input, shape index: {}]
  %s2 = inlined_call_operand.hbm [shape: f32[40,128], index: 2, kind: input, shape index: {}]
  %s3 = inlined_call_operand.hbm [shape: f32[2,2], index: 3, kind: output, shape index: {}]
  %s4 = sld [smem:[#allocation0]]
  $region30: #{transformer_classifier_forward.1} parent=0
    _
  %s6 = ssub.s32 1, %s4
  %s7 = scalar_select 0, %s6, %s4
  $region1: #{transformer_classifier_forward.1} parent=0
    #allocation2 [shape = 'u8[184320]{0}', space=vmem, size = 0x2d000, scoped, tag = 'input window, operand 1, single buffered']
    #allocation3 [shape = 's32[1]{0}', space=sflag, size = 0x4, scoped, tag = 'scoped memory for transformer_classifier_forward.1']
    #allocation4 [shape = 's32[1]{0}', space=sflag, size = 0x4, scoped, tag = 'scoped memory for transformer_classifier_forward.1']
    #allocation5 [shape = 'u8[20480]{0}', space=vmem, size = 0x5000, scoped, tag = 'input window, operand 2, single buffered']
    #allocation6 [shape = 's32[1]{0}', space=sflag, size = 0x4, scoped, tag = 'scoped memory for transformer_classifier_forward.1']
    #allocation7 [shape = 'u8[1024]{0}', space=vmem, size = 0x400, scoped, tag = 'output window, operand 0, single buffered']
    %8 = vsyncpa [#allocation3], 0
    %9 = vsyncpa [#allocation6], 0
    %10 = vsyncpa [#allocation4], 0
    // Predicated region
    $region2: #{transformer_classifier_forward.1} parent=1 // pred_check
      _
    $region3: #{transformer_classifier_forward.1} parent=1 // pred_check_branch
      %12 = sbr.rel (0) target = $region5
    $region4: #{transformer_classifier_forward.1} parent=1 // pred_region
      _
    $region5: #{transformer_classifier_forward.1} parent=1 // pred_fallthru
      _
    // Predicated region
    $region6: #{transformer_classifier_forward.1} parent=1 // pred_check
      _
    $region7: #{transformer_classifier_forward.1} parent=1 // pred_check_branch
      %14 = sbr.rel (0) target = $region9
    $region8: #{transformer_classifier_forward.1} parent=1 // pred_region
      %s16 = ssub.s32 5760, 5760
      %17 = vsyncadd [#allocation3], %s16
      %s18 = sshll.u32 [#allocation2], 4
      %s19 = int_to_ptr.vmem [resolvable:$true] %s18
      %24 = dma.hbm_to_vmem [thread:$0]  %s1, 5760, %s19, [#allocation3], 128, 128, 8
    $region9: #{transformer_classifier_forward.1} parent=1 // pred_fallthru
      _
    // Predicated region
    $region10: #{transformer_classifier_forward.1} parent=1 // pred_check
      _
    $region11: #{transformer_classifier_forward.1} parent=1 // pred_check_branch
      %26 = sbr.rel (0) target = $region13
    $region12: #{transformer_classifier_forward.1} parent=1 // pred_region
      %s28 = ssub.s32 640, 640
      %29 = vsyncadd [#allocation6], %s28
      %s30 = sshll.u32 [#allocation5], 4
      %s31 = int_to_ptr.vmem [resolvable:$true] %s30
      %36 = dma.hbm_to_vmem [thread:$0]  %s2, 640, %s31, [#allocation6], 128, 128, 8
    $region13: #{transformer_classifier_forward.1} parent=1 // pred_fallthru
      _
    // Predicated region
    $region14: #{transformer_classifier_forward.1} parent=1 // pred_check
      _
    $region15: #{transformer_classifier_forward.1} parent=1 // pred_check_branch
      %38 = sbr.rel (0) target = $region17
    $region16: #{transformer_classifier_forward.1} parent=1 // pred_region
      %39 = dma.done [#allocation3], 5760
    $region17: #{transformer_classifier_forward.1} parent=1 // pred_fallthru
      _
    // Predicated region
    $region18: #{transformer_classifier_forward.1} parent=1 // pred_check
      _
    $region19: #{transformer_classifier_forward.1} parent=1 // pred_check_branch
      %41 = sbr.rel (0) target = $region21
    $region20: #{transformer_classifier_forward.1} parent=1 // pred_region
      %42 = dma.done [#allocation6], 640
    $region21: #{transformer_classifier_forward.1} parent=1 // pred_fallthru
      _
    %v43 = vld [vmem:[%s0] sm:$0xff]
    %v44 = vld [vmem:[%s0 + $0x8] sm:$0xff]
    %v45 = vlaneseq
    %v46 = vand.u32 %v45, 127
    %47 = vset.pattern.permute.xlu0 0
    %48 = vperm.xlu0 %47, %v43
    %v49 = vpop.permute.xlu0 %48
    %50 = vset.pattern.permute.xlu0 0
    %51 = vperm.xlu0 %50, %v44
    %v52 = vpop.permute.xlu0 %51
    %vm53 = vcmp.eq.s32.totalorder %v49, %v46
    %vm54 = vcmp.eq.s32.totalorder %v52, %v46
    %v55 = vsel %vm53, 1.0, 0.0
    %v56 = vsel %vm54, 1.0, 0.0
    %v57 = vld [vmem:[#allocation2] sm:$0xff]
    %vm58 = vcmask 64512
    %v60 = vsel %vm58, %v55, 0
    %v63 = vsel %vm58, %v56, 0
    %65 = vmatprep.subr.mxu0 0.0
    %66 = vmatpush1.msra.mxu0 0.0
    %67 = vmatprep.subr.mxu0 0.0
    %68 = vmatpush1.msra.mxu0 0.0
    %69 = vmatprep.subr.mxu0 0.0
    %70 = vmatpush1.msra.mxu0 0.0
    %71 = vmatprep.subr.mxu0 0.0
    %72 = vmatpush1.msra.mxu0 0.0
    %73 = vmatprep.subr.mxu0 0.0
    %74 = vmatpush1.msra.mxu0 0.0
    %75 = vmatprep.subr.mxu0 0.0
    %76 = vmatpush1.msra.mxu0 0.0
    %77 = vmatprep.subr.mxu0 0.0
    %78 = vmatpush1.msra.mxu0 0.0
    %79 = vmatprep.subr.mxu0 0.0
    %80 = vmatpush1.msra.mxu0 0.0
    %81 = vmatprep.subr.mxu0 0.0
    %82 = vmatpush1.msra.mxu0 0.0
    %83 = vmatprep.subr.mxu0 0.0
    %84 = vmatpush1.msra.mxu0 0.0
    %85 = vmatprep.subr.mxu0 0.0
    %86 = vmatpush1.msra.mxu0 0.0
    %87 = vmatprep.subr.mxu0 0.0
    %88 = vmatpush1.msra.mxu0 0.0
    %89 = vmatprep.subr.mxu0 0.0
    %90 = vmatpush1.msra.mxu0 0.0
    %91 = vmatprep.subr.mxu0 0.0
    %92 = vmatpush1.msra.mxu0 0.0
    %93 = vmatprep.subr.mxu0 0.0
    %94 = vmatpush1.msra.mxu0 0.0
    %95 = vmatprep.subr.mxu0 0.0
    %96 = vmatpush1.msra.mxu0 %v57
    %97 = vmatprep.subr.mxu0 0.0
    %98 = vmatpush2.msra.mxu0 0.0
    %99 = vmatprep.subr.mxu0 0.0
    %100 = vmatpush2.msra.mxu0 0.0
    %101 = vmatprep.subr.mxu0 0.0
    %102 = vmatpush2.msra.mxu0 0.0
    %103 = vmatprep.subr.mxu0 0.0
    %104 = vmatpush2.msra.mxu0 0.0
    %105 = vmatprep.subr.mxu0 0.0
    %106 = vmatpush2.msra.mxu0 0.0
    %107 = vmatprep.subr.mxu0 0.0
    %108 = vmatpush2.msra.mxu0 0.0
    %109 = vmatprep.subr.mxu0 0.0
    %110 = vmatpush2.msra.mxu0 0.0
    %111 = vmatprep.subr.mxu0 0.0
    %112 = vmatpush2.msra.mxu0 0.0
    %113 = vmatprep.subr.mxu0 0.0
    %114 = vmatpush2.msra.mxu0 0.0
    %115 = vmatprep.subr.mxu0 0.0
    %116 = vmatpush2.msra.mxu0 0.0
    %117 = vmatprep.subr.mxu0 0.0
    %118 = vmatpush2.msra.mxu0 0.0
    %119 = vmatprep.subr.mxu0 0.0
    %120 = vmatpush2.msra.mxu0 0.0
    %121 = vmatprep.subr.mxu0 0.0
    %122 = vmatpush2.msra.mxu0 0.0
    %123 = vmatprep.subr.mxu0 0.0
    %124 = vmatpush2.msra.mxu0 0.0
    %125 = vmatprep.subr.mxu0 0.0
    %126 = vmatpush2.msra.mxu0 0.0
    %127 = vmatprep.subr.mxu0 0.0
    %128 = vmatpush2.msra.mxu0 0.0
    %129 = vmatprep.mubr.f32.mxu0 0.0
    %130 = vmatmul.mubr.f32.gmra.mxu0 %v60
    %v131 = vpop.f32.mrf.mxu0
    %v132 = vadd.f32 0.0, %v131
    %v133 = vpop.f32.mrf.mxu0
    %134 = vmatprep.mubr.f32.mxu0 0.0
    %135 = vmatmul.mubr.f32.gmra.mxu0 %v63
    %v136 = vpop.f32.mrf.mxu0
    %v137 = vadd.f32 0.0, %v136
    %v138 = vpop.f32.mrf.mxu0
    %139 = vdwg.mxu0
    %v140 = vld [vmem:[#allocation5] sm:$0xff]
    %v141 = vld [vmem:[#allocation5 + $0x8] sm:$0xff]
    %v142 = vld [vmem:[#allocation2 + $0x8] sm:$0xff]
    %v143 = vld [vmem:[#allocation2 + $0x10] sm:$0xff]
    %v144 = vld [vmem:[#allocation2 + $0x18] sm:$0xff]
    %v145 = vld [vmem:[#allocation2 + $0x20] sm:$0xff]
    %v146 = vld [vmem:[#allocation5 + $0x10] sm:$0x1]
    %v147 = vlaneseq
    %v148 = vshrl.u32 %v147, 7
    %v149 = vsub.s32 0, %v148
    %v150 = vrot.slane %v146, %v149
    %vm151 = vcmask 261120
    %v153 = vsel %vm151, %v132, 0
    %v156 = vsel %vm151, %v137, 0
    %158 = vmatprep.subr.mxu0 0.0
    %159 = vmatpush1.msra.mxu0 0.0
    %160 = vmatprep.subr.mxu0 0.0
    %161 = vmatpush1.msra.mxu0 0.0
    %162 = vmatprep.subr.mxu0 0.0
    %163 = vmatpush1.msra.mxu0 0.0
    %164 = vmatprep.subr.mxu0 0.0
    %165 = vmatpush1.msra.mxu0 0.0
    %166 = vmatprep.subr.mxu0 0.0
    %167 = vmatpush1.msra.mxu0 0.0
    %168 = vmatprep.subr.mxu0 0.0
    %169 = vmatpush1.msra.mxu0 0.0
    %170 = vmatprep.subr.mxu0 0.0
    %171 = vmatpush1.msra.mxu0 0.0
    %172 = vmatprep.subr.mxu0 0.0
    %173 = vmatpush1.msra.mxu0 0.0
    %174 = vmatprep.subr.mxu0 0.0
    %175 = vmatpush1.msra.mxu0 0.0
    %176 = vmatprep.subr.mxu0 0.0
    %177 = vmatpush1.msra.mxu0 0.0
    %178 = vmatprep.subr.mxu0 0.0
    %179 = vmatpush1.msra.mxu0 0.0
    %180 = vmatprep.subr.mxu0 0.0
    %181 = vmatpush1.msra.mxu0 0.0
    %182 = vmatprep.subr.mxu0 0.0
    %183 = vmatpush1.msra.mxu0 %v145
    %184 = vmatprep.subr.mxu0 0.0
    %185 = vmatpush1.msra.mxu0 %v144
    %186 = vmatprep.subr.mxu0 0.0
    %187 = vmatpush1.msra.mxu0 %v143
    %188 = vmatprep.subr.mxu0 0.0
    %189 = vmatpush1.msra.mxu0 %v142
    %190 = vmatprep.subr.mxu0 0.0
    %191 = vmatpush2.msra.mxu0 0.0
    %192 = vmatprep.subr.mxu0 0.0
    %193 = vmatpush2.msra.mxu0 0.0
    %194 = vmatprep.subr.mxu0 0.0
    %195 = vmatpush2.msra.mxu0 0.0
    %196 = vmatprep.subr.mxu0 0.0
    %197 = vmatpush2.msra.mxu0 0.0
    %198 = vmatprep.subr.mxu0 0.0
    %199 = vmatpush2.msra.mxu0 0.0
    %200 = vmatprep.subr.mxu0 0.0
    %201 = vmatpush2.msra.mxu0 0.0
    %202 = vmatprep.subr.mxu0 0.0
    %203 = vmatpush2.msra.mxu0 0.0
    %204 = vmatprep.subr.mxu0 0.0
    %205 = vmatpush2.msra.mxu0 0.0
    %206 = vmatprep.subr.mxu0 0.0
    %207 = vmatpush2.msra.mxu0 0.0
    %208 = vmatprep.subr.mxu0 0.0
    %209 = vmatpush2.msra.mxu0 0.0
    %210 = vmatprep.subr.mxu0 0.0
    %211 = vmatpush2.msra.mxu0 0.0
    %212 = vmatprep.subr.mxu0 0.0
    %213 = vmatpush2.msra.mxu0 0.0
    %214 = vmatprep.subr.mxu0 0.0
    %215 = vmatpush2.msra.mxu0 0.0
    %216 = vmatprep.subr.mxu0 0.0
    %217 = vmatpush2.msra.mxu0 0.0
    %218 = vmatprep.subr.mxu0 0.0
    %219 = vmatpush2.msra.mxu0 0.0
    %220 = vmatprep.subr.mxu0 0.0
    %221 = vmatpush2.msra.mxu0 0.0
    %222 = vmatprep.mubr.f32.mxu0 0.0
    %223 = vmatmul.mubr.f32.gmra.mxu0 %v153
    %v224 = vpop.f32.mrf.mxu0
    %v225 = vadd.f32 %v150, %v224
    %v226 = vpop.f32.mrf.mxu0
    %227 = vmatprep.mubr.f32.mxu0 0.0
    %228 = vmatmul.mubr.f32.gmra.mxu0 %v156
    %v229 = vpop.f32.mrf.mxu0
    %v230 = vadd.f32 %v150, %v229
    %v231 = vpop.f32.mrf.mxu0
    %232 = vdwg.mxu0
    %235 = vrot.lane.b32.xlu0 %v225, 120
    %v236 = vpop.permute.xlu0 %235
    %237 = vrot.lane.b32.xlu0 %v230, 120
    %v238 = vpop.permute.xlu0 %237
    %v239 = vsel %vm58, %v225, 0
    %v241 = vsel %vm58, %v230, 0
    %v243 = vsel %vm58, %v236, 0
    %v245 = vsel %vm58, %v238, 0
    %247 = vmatprep.subr.mxu0 0.0
    %248 = vmatpush1.xpose.msra.mxu0 0.0
    %249 = vmatprep.subr.mxu0 0.0
    %250 = vmatpush1.xpose.msra.mxu0 0.0
    %251 = vmatprep.subr.mxu0 0.0
    %252 = vmatpush1.xpose.msra.mxu0 0.0
    %253 = vmatprep.subr.mxu0 0.0
    %254 = vmatpush1.xpose.msra.mxu0 0.0
    %255 = vmatprep.subr.mxu0 0.0
    %256 = vmatpush1.xpose.msra.mxu0 0.0
    %257 = vmatprep.subr.mxu0 0.0
    %258 = vmatpush1.xpose.msra.mxu0 0.0
    %259 = vmatprep.subr.mxu0 0.0
    %260 = vmatpush1.xpose.msra.mxu0 0.0
    %261 = vmatprep.subr.mxu0 0.0
    %262 = vmatpush1.xpose.msra.mxu0 0.0
    %263 = vmatprep.subr.mxu0 0.0
    %264 = vmatpush1.xpose.msra.mxu0 0.0
    %265 = vmatprep.subr.mxu0 0.0
    %266 = vmatpush1.xpose.msra.mxu0 0.0
    %267 = vmatprep.subr.mxu0 0.0
    %268 = vmatpush1.xpose.msra.mxu0 0.0
    %269 = vmatprep.subr.mxu0 0.0
    %270 = vmatpush1.xpose.msra.mxu0 0.0
    %271 = vmatprep.subr.mxu0 0.0
    %272 = vmatpush1.xpose.msra.mxu0 0.0
    %273 = vmatprep.subr.mxu0 0.0
    %274 = vmatpush1.xpose.msra.mxu0 0.0
    %275 = vmatprep.subr.mxu0 0.0
    %276 = vmatpush1.xpose.msra.mxu0 %v245
    %277 = vmatprep.subr.mxu0 0.0
    %278 = vmatpush1.xpose.msra.mxu0 %v243
    %279 = vmatprep.subr.mxu0 0.0
    %280 = vmatpush2.xpose.msra.mxu0 0.0
    %281 = vmatprep.subr.mxu0 0.0
    %282 = vmatpush2.xpose.msra.mxu0 0.0
    %283 = vmatprep.subr.mxu0 0.0
    %284 = vmatpush2.xpose.msra.mxu0 0.0
    %285 = vmatprep.subr.mxu0 0.0
    %286 = vmatpush2.xpose.msra.mxu0 0.0
    %287 = vmatprep.subr.mxu0 0.0
    %288 = vmatpush2.xpose.msra.mxu0 0.0
    %289 = vmatprep.subr.mxu0 0.0
    %290 = vmatpush2.xpose.msra.mxu0 0.0
    %291 = vmatprep.subr.mxu0 0.0
    %292 = vmatpush2.xpose.msra.mxu0 0.0
    %293 = vmatprep.subr.mxu0 0.0
    %294 = vmatpush2.xpose.msra.mxu0 0.0
    %295 = vmatprep.subr.mxu0 0.0
    %296 = vmatpush2.xpose.msra.mxu0 0.0
    %297 = vmatprep.subr.mxu0 0.0
    %298 = vmatpush2.xpose.msra.mxu0 0.0
    %299 = vmatprep.subr.mxu0 0.0
    %300 = vmatpush2.xpose.msra.mxu0 0.0
    %301 = vmatprep.subr.mxu0 0.0
    %302 = vmatpush2.xpose.msra.mxu0 0.0
    %303 = vmatprep.subr.mxu0 0.0
    %304 = vmatpush2.xpose.msra.mxu0 0.0
    %305 = vmatprep.subr.mxu0 0.0
    %306 = vmatpush2.xpose.msra.mxu0 0.0
    %307 = vmatprep.subr.mxu0 0.0
    %308 = vmatpush2.xpose.msra.mxu0 0.0
    %309 = vmatprep.subr.mxu0 0.0
    %310 = vmatpush2.xpose.msra.mxu0 0.0
    %311 = vmatprep.mubr.f32.mxu0 0.0
    %312 = vmatmul.mubr.f32.gmra.mxu0 %v239
    %v313 = vpop.f32.mrf.mxu0
    %v314 = vadd.f32 0.0, %v313
    %v315 = vpop.f32.mrf.mxu0
    %316 = vmatprep.mubr.f32.mxu0 0.0
    %317 = vmatmul.mubr.f32.gmra.mxu0 %v241
    %v318 = vpop.f32.mrf.mxu0
    %v319 = vadd.f32 0.0, %v318
    %v320 = vpop.f32.mrf.mxu0
    %321 = vdwg.mxu0
    %v322 = vmul.f32 %v314, 0.35355338
    %v323 = vmul.f32 %v319, 0.35355338
    %v324 = vadd.f32 %v322, %v140
    %v325 = vadd.f32 %v323, %v141
    %vm326 = vcmask 130048
    %v327 = vsel %vm326, %v324, -inf
    %328 = vmax.xlane.f32.xlu0 %v327
    %v329 = vpop.xlane.xlu0 %328
    %v330 = vsel %vm326, %v325, -inf
    %331 = vmax.xlane.f32.xlu0 %v330
    %v332 = vpop.xlane.xlu0 %331
    %v333 = vsub.f32 %v324, %v329
    %v334 = vsub.f32 %v325, %v332
    %v335 = vmul.f32 %v333, 1.442695
    %v336 = vpow.pop %v335
    %v337 = vmul.f32 %v334, 1.442695
    %v338 = vpow.pop %v337
    %v339 = vsel %vm326, %v336, 0.0
    %340 = vadd.xlane.f32.xlu0 %v339
    %v341 = vpop.xlane.xlu0 %340
    %v342 = vsel %vm326, %v338, 0.0
    %343 = vadd.xlane.f32.xlu0 %v342
    %v344 = vpop.xlane.xlu0 %343
    %v345 = vrcp.pop %v341
    %v346 = vrcp.pop %v344
    %v347 = vmul.f32 %v336, %v345
    %v348 = vmul.f32 %v338, %v346
    %349 = vrot.lane.b32.xlu0 %v225, 112
    %v350 = vpop.permute.xlu0 %349
    %351 = vrot.lane.b32.xlu0 %v230, 112
    %v352 = vpop.permute.xlu0 %351
    %v356 = vsel %vm326, %v347, 0
    %v359 = vsel %vm326, %v348, 0
    %361 = vmatprep.subr.mxu0 0.0
    %362 = vmatpush1.msra.mxu0 0.0
    %363 = vmatprep.subr.mxu0 0.0
    %364 = vmatpush1.msra.mxu0 0.0
    %365 = vmatprep.subr.mxu0 0.0
    %366 = vmatpush1.msra.mxu0 0.0
    %367 = vmatprep.subr.mxu0 0.0
    %368 = vmatpush1.msra.mxu0 0.0
    %369 = vmatprep.subr.mxu0 0.0
    %370 = vmatpush1.msra.mxu0 0.0
    %371 = vmatprep.subr.mxu0 0.0
    %372 = vmatpush1.msra.mxu0 0.0
    %373 = vmatprep.subr.mxu0 0.0
    %374 = vmatpush1.msra.mxu0 0.0
    %375 = vmatprep.subr.mxu0 0.0
    %376 = vmatpush1.msra.mxu0 0.0
    %377 = vmatprep.subr.mxu0 0.0
    %378 = vmatpush1.msra.mxu0 0.0
    %379 = vmatprep.subr.mxu0 0.0
    %380 = vmatpush1.msra.mxu0 0.0
    %381 = vmatprep.subr.mxu0 0.0
    %382 = vmatpush1.msra.mxu0 0.0
    %383 = vmatprep.subr.mxu0 0.0
    %384 = vmatpush1.msra.mxu0 0.0
    %385 = vmatprep.subr.mxu0 0.0
    %386 = vmatpush1.msra.mxu0 0.0
    %387 = vmatprep.subr.mxu0 0.0
    %388 = vmatpush1.msra.mxu0 0.0
    %389 = vmatprep.subr.mxu0 0.0
    %390 = vmatpush1.msra.mxu0 %v352
    %391 = vmatprep.subr.mxu0 0.0
    %392 = vmatpush1.msra.mxu0 %v350
    %393 = vmatprep.subr.mxu0 0.0
    %394 = vmatpush2.msra.mxu0 0.0
    %395 = vmatprep.subr.mxu0 0.0
    %396 = vmatpush2.msra.mxu0 0.0
    %397 = vmatprep.subr.mxu0 0.0
    %398 = vmatpush2.msra.mxu0 0.0
    %399 = vmatprep.subr.mxu0 0.0
    %400 = vmatpush2.msra.mxu0 0.0
    %401 = vmatprep.subr.mxu0 0.0
    %402 = vmatpush2.msra.mxu0 0.0
    %403 = vmatprep.subr.mxu0 0.0
    %404 = vmatpush2.msra.mxu0 0.0
    %405 = vmatprep.subr.mxu0 0.0
    %406 = vmatpush2.msra.mxu0 0.0
    %407 = vmatprep.subr.mxu0 0.0
    %408 = vmatpush2.msra.mxu0 0.0
    %409 = vmatprep.subr.mxu0 0.0
    %410 = vmatpush2.msra.mxu0 0.0
    %411 = vmatprep.subr.mxu0 0.0
    %412 = vmatpush2.msra.mxu0 0.0
    %413 = vmatprep.subr.mxu0 0.0
    %414 = vmatpush2.msra.mxu0 0.0
    %415 = vmatprep.subr.mxu0 0.0
    %416 = vmatpush2.msra.mxu0 0.0
    %417 = vmatprep.subr.mxu0 0.0
    %418 = vmatpush2.msra.mxu0 0.0
    %419 = vmatprep.subr.mxu0 0.0
    %420 = vmatpush2.msra.mxu0 0.0
    %421 = vmatprep.subr.mxu0 0.0
    %422 = vmatpush2.msra.mxu0 0.0
    %423 = vmatprep.subr.mxu0 0.0
    %424 = vmatpush2.msra.mxu0 0.0
    %425 = vmatprep.mubr.f32.mxu0 0.0
    %426 = vmatmul.mubr.f32.gmra.mxu0 %v356
    %v427 = vpop.f32.mrf.mxu0
    %v428 = vadd.f32 0.0, %v427
    %v429 = vpop.f32.mrf.mxu0
    %430 = vmatprep.mubr.f32.mxu0 0.0
    %431 = vmatmul.mubr.f32.gmra.mxu0 %v359
    %v432 = vpop.f32.mrf.mxu0
    %v433 = vadd.f32 0.0, %v432
    %v434 = vpop.f32.mrf.mxu0
    %435 = vdwg.mxu0
    %v436 = vld [vmem:[#allocation2 + $0x28] sm:$0xff]
    %437 = vrot.lane.b32.xlu0 %v225, 104
    %v438 = vpop.permute.xlu0 %437
    %439 = vrot.lane.b32.xlu0 %v230, 104
    %v440 = vpop.permute.xlu0 %439
    %441 = vrot.lane.b32.xlu0 %v225, 96
    %v442 = vpop.permute.xlu0 %441
    %443 = vrot.lane.b32.xlu0 %v230, 96
    %v444 = vpop.permute.xlu0 %443
    %v445 = vsel %vm58, %v438, 0
    %v447 = vsel %vm58, %v440, 0
    %v449 = vsel %vm58, %v442, 0
    %v451 = vsel %vm58, %v444, 0
    %453 = vmatprep.subr.mxu0 0.0
    %454 = vmatpush1.xpose.msra.mxu0 0.0
    %455 = vmatprep.subr.mxu0 0.0
    %456 = vmatpush1.xpose.msra.mxu0 0.0
    %457 = vmatprep.subr.mxu0 0.0
    %458 = vmatpush1.xpose.msra.mxu0 0.0
    %459 = vmatprep.subr.mxu0 0.0
    %460 = vmatpush1.xpose.msra.mxu0 0.0
    %461 = vmatprep.subr.mxu0 0.0
    %462 = vmatpush1.xpose.msra.mxu0 0.0
    %463 = vmatprep.subr.mxu0 0.0
    %464 = vmatpush1.xpose.msra.mxu0 0.0
    %465 = vmatprep.subr.mxu0 0.0
    %466 = vmatpush1.xpose.msra.mxu0 0.0
    %467 = vmatprep.subr.mxu0 0.0
    %468 = vmatpush1.xpose.msra.mxu0 0.0
    %469 = vmatprep.subr.mxu0 0.0
    %470 = vmatpush1.xpose.msra.mxu0 0.0
    %471 = vmatprep.subr.mxu0 0.0
    %472 = vmatpush1.xpose.msra.mxu0 0.0
    %473 = vmatprep.subr.mxu0 0.0
    %474 = vmatpush1.xpose.msra.mxu0 0.0
    %475 = vmatprep.subr.mxu0 0.0
    %476 = vmatpush1.xpose.msra.mxu0 0.0
    %477 = vmatprep.subr.mxu0 0.0
    %478 = vmatpush1.xpose.msra.mxu0 0.0
    %479 = vmatprep.subr.mxu0 0.0
    %480 = vmatpush1.xpose.msra.mxu0 0.0
    %481 = vmatprep.subr.mxu0 0.0
    %482 = vmatpush1.xpose.msra.mxu0 %v451
    %483 = vmatprep.subr.mxu0 0.0
    %484 = vmatpush1.xpose.msra.mxu0 %v449
    %485 = vmatprep.subr.mxu0 0.0
    %486 = vmatpush2.xpose.msra.mxu0 0.0
    %487 = vmatprep.subr.mxu0 0.0
    %488 = vmatpush2.xpose.msra.mxu0 0.0
    %489 = vmatprep.subr.mxu0 0.0
    %490 = vmatpush2.xpose.msra.mxu0 0.0
    %491 = vmatprep.subr.mxu0 0.0
    %492 = vmatpush2.xpose.msra.mxu0 0.0
    %493 = vmatprep.subr.mxu0 0.0
    %494 = vmatpush2.xpose.msra.mxu0 0.0
    %495 = vmatprep.subr.mxu0 0.0
    %496 = vmatpush2.xpose.msra.mxu0 0.0
    %497 = vmatprep.subr.mxu0 0.0
    %498 = vmatpush2.xpose.msra.mxu0 0.0
    %499 = vmatprep.subr.mxu0 0.0
    %500 = vmatpush2.xpose.msra.mxu0 0.0
    %501 = vmatprep.subr.mxu0 0.0
    %502 = vmatpush2.xpose.msra.mxu0 0.0
    %503 = vmatprep.subr.mxu0 0.0
    %504 = vmatpush2.xpose.msra.mxu0 0.0
    %505 = vmatprep.subr.mxu0 0.0
    %506 = vmatpush2.xpose.msra.mxu0 0.0
    %507 = vmatprep.subr.mxu0 0.0
    %508 = vmatpush2.xpose.msra.mxu0 0.0
    %509 = vmatprep.subr.mxu0 0.0
    %510 = vmatpush2.xpose.msra.mxu0 0.0
    %511 = vmatprep.subr.mxu0 0.0
    %512 = vmatpush2.xpose.msra.mxu0 0.0
    %513 = vmatprep.subr.mxu0 0.0
    %514 = vmatpush2.xpose.msra.mxu0 0.0
    %515 = vmatprep.subr.mxu0 0.0
    %516 = vmatpush2.xpose.msra.mxu0 0.0
    %517 = vmatprep.mubr.f32.mxu0 0.0
    %518 = vmatmul.mubr.f32.gmra.mxu0 %v445
    %v519 = vpop.f32.mrf.mxu0
    %v520 = vadd.f32 0.0, %v519
    %v521 = vpop.f32.mrf.mxu0
    %522 = vmatprep.mubr.f32.mxu0 0.0
    %523 = vmatmul.mubr.f32.gmra.mxu0 %v447
    %v524 = vpop.f32.mrf.mxu0
    %v525 = vadd.f32 0.0, %v524
    %v526 = vpop.f32.mrf.mxu0
    %527 = vdwg.mxu0
    %v528 = vmul.f32 %v520, 0.35355338
    %v529 = vmul.f32 %v525, 0.35355338
    %v530 = vadd.f32 %v528, %v140
    %v531 = vadd.f32 %v529, %v141
    %v532 = vsel %vm326, %v530, -inf
    %533 = vmax.xlane.f32.xlu0 %v532
    %v534 = vpop.xlane.xlu0 %533
    %v535 = vsel %vm326, %v531, -inf
    %536 = vmax.xlane.f32.xlu0 %v535
    %v537 = vpop.xlane.xlu0 %536
    %v538 = vsub.f32 %v530, %v534
    %v539 = vsub.f32 %v531, %v537
    %v540 = vmul.f32 %v538, 1.442695
    %v541 = vpow.pop %v540
    %v542 = vmul.f32 %v539, 1.442695
    %v543 = vpow.pop %v542
    %v544 = vsel %vm326, %v541, 0.0
    %545 = vadd.xlane.f32.xlu0 %v544
    %v546 = vpop.xlane.xlu0 %545
    %v547 = vsel %vm326, %v543, 0.0
    %548 = vadd.xlane.f32.xlu0 %v547
    %v549 = vpop.xlane.xlu0 %548
    %v550 = vrcp.pop %v546
    %v551 = vrcp.pop %v549
    %v552 = vmul.f32 %v541, %v550
    %v553 = vmul.f32 %v543, %v551
    %554 = vrot.lane.b32.xlu0 %v225, 88
    %v555 = vpop.permute.xlu0 %554
    %556 = vrot.lane.b32.xlu0 %v230, 88
    %v557 = vpop.permute.xlu0 %556
    %v561 = vsel %vm326, %v552, 0
    %v564 = vsel %vm326, %v553, 0
    %566 = vmatprep.subr.mxu0 0.0
    %567 = vmatpush1.msra.mxu0 0.0
    %568 = vmatprep.subr.mxu0 0.0
    %569 = vmatpush1.msra.mxu0 0.0
    %570 = vmatprep.subr.mxu0 0.0
    %571 = vmatpush1.msra.mxu0 0.0
    %572 = vmatprep.subr.mxu0 0.0
    %573 = vmatpush1.msra.mxu0 0.0
    %574 = vmatprep.subr.mxu0 0.0
    %575 = vmatpush1.msra.mxu0 0.0
    %576 = vmatprep.subr.mxu0 0.0
    %577 = vmatpush1.msra.mxu0 0.0
    %578 = vmatprep.subr.mxu0 0.0
    %579 = vmatpush1.msra.mxu0 0.0
    %580 = vmatprep.subr.mxu0 0.0
    %581 = vmatpush1.msra.mxu0 0.0
    %582 = vmatprep.subr.mxu0 0.0
    %583 = vmatpush1.msra.mxu0 0.0
    %584 = vmatprep.subr.mxu0 0.0
    %585 = vmatpush1.msra.mxu0 0.0
    %586 = vmatprep.subr.mxu0 0.0
    %587 = vmatpush1.msra.mxu0 0.0
    %588 = vmatprep.subr.mxu0 0.0
    %589 = vmatpush1.msra.mxu0 0.0
    %590 = vmatprep.subr.mxu0 0.0
    %591 = vmatpush1.msra.mxu0 0.0
    %592 = vmatprep.subr.mxu0 0.0
    %593 = vmatpush1.msra.mxu0 0.0
    %594 = vmatprep.subr.mxu0 0.0
    %595 = vmatpush1.msra.mxu0 %v557
    %596 = vmatprep.subr.mxu0 0.0
    %597 = vmatpush1.msra.mxu0 %v555
    %598 = vmatprep.subr.mxu0 0.0
    %599 = vmatpush2.msra.mxu0 0.0
    %600 = vmatprep.subr.mxu0 0.0
    %601 = vmatpush2.msra.mxu0 0.0
    %602 = vmatprep.subr.mxu0 0.0
    %603 = vmatpush2.msra.mxu0 0.0
    %604 = vmatprep.subr.mxu0 0.0
    %605 = vmatpush2.msra.mxu0 0.0
    %606 = vmatprep.subr.mxu0 0.0
    %607 = vmatpush2.msra.mxu0 0.0
    %608 = vmatprep.subr.mxu0 0.0
    %609 = vmatpush2.msra.mxu0 0.0
    %610 = vmatprep.subr.mxu0 0.0
    %611 = vmatpush2.msra.mxu0 0.0
    %612 = vmatprep.subr.mxu0 0.0
    %613 = vmatpush2.msra.mxu0 0.0
    %614 = vmatprep.subr.mxu0 0.0
    %615 = vmatpush2.msra.mxu0 0.0
    %616 = vmatprep.subr.mxu0 0.0
    %617 = vmatpush2.msra.mxu0 0.0
    %618 = vmatprep.subr.mxu0 0.0
    %619 = vmatpush2.msra.mxu0 0.0
    %620 = vmatprep.subr.mxu0 0.0
    %621 = vmatpush2.msra.mxu0 0.0
    %622 = vmatprep.subr.mxu0 0.0
    %623 = vmatpush2.msra.mxu0 0.0
    %624 = vmatprep.subr.mxu0 0.0
    %625 = vmatpush2.msra.mxu0 0.0
    %626 = vmatprep.subr.mxu0 0.0
    %627 = vmatpush2.msra.mxu0 0.0
    %628 = vmatprep.subr.mxu0 0.0
    %629 = vmatpush2.msra.mxu0 0.0
    %630 = vmatprep.mubr.f32.mxu0 0.0
    %631 = vmatmul.mubr.f32.gmra.mxu0 %v561
    %v632 = vpop.f32.mrf.mxu0
    %v633 = vadd.f32 0.0, %v632
    %v634 = vpop.f32.mrf.mxu0
    %635 = vmatprep.mubr.f32.mxu0 0.0
    %636 = vmatmul.mubr.f32.gmra.mxu0 %v564
    %v637 = vpop.f32.mrf.mxu0
    %v638 = vadd.f32 0.0, %v637
    %v639 = vpop.f32.mrf.mxu0
    %640 = vdwg.mxu0
    %v641 = vld [vmem:[#allocation2 + $0x30] sm:$0xff]
    %v643 = vsel %vm58, %v633, 0
    %v646 = vsel %vm58, %v638, 0
    %648 = vmatprep.subr.mxu0 0.0
    %649 = vmatpush1.msra.mxu0 0.0
    %650 = vmatprep.subr.mxu0 0.0
    %651 = vmatpush1.msra.mxu0 0.0
    %652 = vmatprep.subr.mxu0 0.0
    %653 = vmatpush1.msra.mxu0 0.0
    %654 = vmatprep.subr.mxu0 0.0
    %655 = vmatpush1.msra.mxu0 0.0
    %656 = vmatprep.subr.mxu0 0.0
    %657 = vmatpush1.msra.mxu0 0.0
    %658 = vmatprep.subr.mxu0 0.0
    %659 = vmatpush1.msra.mxu0 0.0
    %660 = vmatprep.subr.mxu0 0.0
    %661 = vmatpush1.msra.mxu0 0.0
    %662 = vmatprep.subr.mxu0 0.0
    %663 = vmatpush1.msra.mxu0 0.0
    %664 = vmatprep.subr.mxu0 0.0
    %665 = vmatpush1.msra.mxu0 0.0
    %666 = vmatprep.subr.mxu0 0.0
    %667 = vmatpush1.msra.mxu0 0.0
    %668 = vmatprep.subr.mxu0 0.0
    %669 = vmatpush1.msra.mxu0 0.0
    %670 = vmatprep.subr.mxu0 0.0
    %671 = vmatpush1.msra.mxu0 0.0
    %672 = vmatprep.subr.mxu0 0.0
    %673 = vmatpush1.msra.mxu0 0.0
    %674 = vmatprep.subr.mxu0 0.0
    %675 = vmatpush1.msra.mxu0 0.0
    %676 = vmatprep.subr.mxu0 0.0
    %677 = vmatpush1.msra.mxu0 0.0
    %678 = vmatprep.subr.mxu0 0.0
    %679 = vmatpush1.msra.mxu0 %v641
    %680 = vmatprep.subr.mxu0 0.0
    %681 = vmatpush2.msra.mxu0 0.0
    %682 = vmatprep.subr.mxu0 0.0
    %683 = vmatpush2.msra.mxu0 0.0
    %684 = vmatprep.subr.mxu0 0.0
    %685 = vmatpush2.msra.mxu0 0.0
    %686 = vmatprep.subr.mxu0 0.0
    %687 = vmatpush2.msra.mxu0 0.0
    %688 = vmatprep.subr.mxu0 0.0
    %689 = vmatpush2.msra.mxu0 0.0
    %690 = vmatprep.subr.mxu0 0.0
    %691 = vmatpush2.msra.mxu0 0.0
    %692 = vmatprep.subr.mxu0 0.0
    %693 = vmatpush2.msra.mxu0 0.0
    %694 = vmatprep.subr.mxu0 0.0
    %695 = vmatpush2.msra.mxu0 0.0
    %696 = vmatprep.subr.mxu0 0.0
    %697 = vmatpush2.msra.mxu0 0.0
    %698 = vmatprep.subr.mxu0 0.0
    %699 = vmatpush2.msra.mxu0 0.0
    %700 = vmatprep.subr.mxu0 0.0
    %701 = vmatpush2.msra.mxu0 0.0
    %702 = vmatprep.subr.mxu0 0.0
    %703 = vmatpush2.msra.mxu0 0.0
    %704 = vmatprep.subr.mxu0 0.0
    %705 = vmatpush2.msra.mxu0 0.0
    %706 = vmatprep.subr.mxu0 0.0
    %707 = vmatpush2.msra.mxu0 0.0
    %708 = vmatprep.subr.mxu0 0.0
    %709 = vmatpush2.msra.mxu0 0.0
    %710 = vmatprep.subr.mxu0 0.0
    %711 = vmatpush2.msra.mxu0 0.0
    %712 = vmatprep.mubr.f32.mxu0 0.0
    %713 = vmatmul.mubr.f32.gmra.mxu0 %v643
    %v714 = vpop.f32.mrf.mxu0
    %v715 = vadd.f32 0.0, %v714
    %v716 = vpop.f32.mrf.mxu0
    %717 = vmatprep.mubr.f32.mxu0 0.0
    %718 = vmatmul.mubr.f32.gmra.mxu0 %v646
    %v719 = vpop.f32.mrf.mxu0
    %v720 = vadd.f32 0.0, %v719
    %v721 = vpop.f32.mrf.mxu0
    %722 = vdwg.mxu0
    %v724 = vsel %vm58, %v428, 0
    %v727 = vsel %vm58, %v433, 0
    %729 = vmatprep.subr.mxu0 0.0
    %730 = vmatpush1.msra.mxu0 0.0
    %731 = vmatprep.subr.mxu0 0.0
    %732 = vmatpush1.msra.mxu0 0.0
    %733 = vmatprep.subr.mxu0 0.0
    %734 = vmatpush1.msra.mxu0 0.0
    %735 = vmatprep.subr.mxu0 0.0
    %736 = vmatpush1.msra.mxu0 0.0
    %737 = vmatprep.subr.mxu0 0.0
    %738 = vmatpush1.msra.mxu0 0.0
    %739 = vmatprep.subr.mxu0 0.0
    %740 = vmatpush1.msra.mxu0 0.0
    %741 = vmatprep.subr.mxu0 0.0
    %742 = vmatpush1.msra.mxu0 0.0
    %743 = vmatprep.subr.mxu0 0.0
    %744 = vmatpush1.msra.mxu0 0.0
    %745 = vmatprep.subr.mxu0 0.0
    %746 = vmatpush1.msra.mxu0 0.0
    %747 = vmatprep.subr.mxu0 0.0
    %748 = vmatpush1.msra.mxu0 0.0
    %749 = vmatprep.subr.mxu0 0.0
    %750 = vmatpush1.msra.mxu0 0.0
    %751 = vmatprep.subr.mxu0 0.0
    %752 = vmatpush1.msra.mxu0 0.0
    %753 = vmatprep.subr.mxu0 0.0
    %754 = vmatpush1.msra.mxu0 0.0
    %755 = vmatprep.subr.mxu0 0.0
    %756 = vmatpush1.msra.mxu0 0.0
    %757 = vmatprep.subr.mxu0 0.0
    %758 = vmatpush1.msra.mxu0 0.0
    %759 = vmatprep.subr.mxu0 0.0
    %760 = vmatpush1.msra.mxu0 %v436
    %761 = vmatprep.subr.mxu0 0.0
    %762 = vmatpush2.msra.mxu0 0.0
    %763 = vmatprep.subr.mxu0 0.0
    %764 = vmatpush2.msra.mxu0 0.0
    %765 = vmatprep.subr.mxu0 0.0
    %766 = vmatpush2.msra.mxu0 0.0
    %767 = vmatprep.subr.mxu0 0.0
    %768 = vmatpush2.msra.mxu0 0.0
    %769 = vmatprep.subr.mxu0 0.0
    %770 = vmatpush2.msra.mxu0 0.0
    %771 = vmatprep.subr.mxu0 0.0
    %772 = vmatpush2.msra.mxu0 0.0
    %773 = vmatprep.subr.mxu0 0.0
    %774 = vmatpush2.msra.mxu0 0.0
    %775 = vmatprep.subr.mxu0 0.0
    %776 = vmatpush2.msra.mxu0 0.0
    %777 = vmatprep.subr.mxu0 0.0
    %778 = vmatpush2.msra.mxu0 0.0
    %779 = vmatprep.subr.mxu0 0.0
    %780 = vmatpush2.msra.mxu0 0.0
    %781 = vmatprep.subr.mxu0 0.0
    %782 = vmatpush2.msra.mxu0 0.0
    %783 = vmatprep.subr.mxu0 0.0
    %784 = vmatpush2.msra.mxu0 0.0
    %785 = vmatprep.subr.mxu0 0.0
    %786 = vmatpush2.msra.mxu0 0.0
    %787 = vmatprep.subr.mxu0 0.0
    %788 = vmatpush2.msra.mxu0 0.0
    %789 = vmatprep.subr.mxu0 0.0
    %790 = vmatpush2.msra.mxu0 0.0
    %791 = vmatprep.subr.mxu0 0.0
    %792 = vmatpush2.msra.mxu0 0.0
    %793 = vmatprep.mubr.f32.mxu0 0.0
    %794 = vmatmul.mubr.f32.gmra.mxu0 %v724
    %v795 = vpop.f32.mrf.mxu0
    %v796 = vadd.f32 %v715, %v795
    %v797 = vpop.f32.mrf.mxu0
    %798 = vmatprep.mubr.f32.mxu0 0.0
    %799 = vmatmul.mubr.f32.gmra.mxu0 %v727
    %v800 = vpop.f32.mrf.mxu0
    %v801 = vadd.f32 %v720, %v800
    %v802 = vpop.f32.mrf.mxu0
    %803 = vdwg.mxu0
    %804 = vrot.lane.b32.xlu0 %v225, 80
    %v805 = vpop.permute.xlu0 %804
    %806 = vrot.lane.b32.xlu0 %v230, 80
    %v807 = vpop.permute.xlu0 %806
    %808 = vrot.lane.b32.xlu0 %v225, 72
    %v809 = vpop.permute.xlu0 %808
    %810 = vrot.lane.b32.xlu0 %v230, 72
    %v811 = vpop.permute.xlu0 %810
    %v812 = vsel %vm58, %v805, 0
    %v814 = vsel %vm58, %v807, 0
    %v816 = vsel %vm58, %v809, 0
    %v818 = vsel %vm58, %v811, 0
    %820 = vmatprep.subr.mxu0 0.0
    %821 = vmatpush1.xpose.msra.mxu0 0.0
    %822 = vmatprep.subr.mxu0 0.0
    %823 = vmatpush1.xpose.msra.mxu0 0.0
    %824 = vmatprep.subr.mxu0 0.0
    %825 = vmatpush1.xpose.msra.mxu0 0.0
    %826 = vmatprep.subr.mxu0 0.0
    %827 = vmatpush1.xpose.msra.mxu0 0.0
    %828 = vmatprep.subr.mxu0 0.0
    %829 = vmatpush1.xpose.msra.mxu0 0.0
    %830 = vmatprep.subr.mxu0 0.0
    %831 = vmatpush1.xpose.msra.mxu0 0.0
    %832 = vmatprep.subr.mxu0 0.0
    %833 = vmatpush1.xpose.msra.mxu0 0.0
    %834 = vmatprep.subr.mxu0 0.0
    %835 = vmatpush1.xpose.msra.mxu0 0.0
    %836 = vmatprep.subr.mxu0 0.0
    %837 = vmatpush1.xpose.msra.mxu0 0.0
    %838 = vmatprep.subr.mxu0 0.0
    %839 = vmatpush1.xpose.msra.mxu0 0.0
    %840 = vmatprep.subr.mxu0 0.0
    %841 = vmatpush1.xpose.msra.mxu0 0.0
    %842 = vmatprep.subr.mxu0 0.0
    %843 = vmatpush1.xpose.msra.mxu0 0.0
    %844 = vmatprep.subr.mxu0 0.0
    %845 = vmatpush1.xpose.msra.mxu0 0.0
    %846 = vmatprep.subr.mxu0 0.0
    %847 = vmatpush1.xpose.msra.mxu0 0.0
    %848 = vmatprep.subr.mxu0 0.0
    %849 = vmatpush1.xpose.msra.mxu0 %v818
    %850 = vmatprep.subr.mxu0 0.0
    %851 = vmatpush1.xpose.msra.mxu0 %v816
    %852 = vmatprep.subr.mxu0 0.0
    %853 = vmatpush2.xpose.msra.mxu0 0.0
    %854 = vmatprep.subr.mxu0 0.0
    %855 = vmatpush2.xpose.msra.mxu0 0.0
    %856 = vmatprep.subr.mxu0 0.0
    %857 = vmatpush2.xpose.msra.mxu0 0.0
    %858 = vmatprep.subr.mxu0 0.0
    %859 = vmatpush2.xpose.msra.mxu0 0.0
    %860 = vmatprep.subr.mxu0 0.0
    %861 = vmatpush2.xpose.msra.mxu0 0.0
    %862 = vmatprep.subr.mxu0 0.0
    %863 = vmatpush2.xpose.msra.mxu0 0.0
    %864 = vmatprep.subr.mxu0 0.0
    %865 = vmatpush2.xpose.msra.mxu0 0.0
    %866 = vmatprep.subr.mxu0 0.0
    %867 = vmatpush2.xpose.msra.mxu0 0.0
    %868 = vmatprep.subr.mxu0 0.0
    %869 = vmatpush2.xpose.msra.mxu0 0.0
    %870 = vmatprep.subr.mxu0 0.0
    %871 = vmatpush2.xpose.msra.mxu0 0.0
    %872 = vmatprep.subr.mxu0 0.0
    %873 = vmatpush2.xpose.msra.mxu0 0.0
    %874 = vmatprep.subr.mxu0 0.0
    %875 = vmatpush2.xpose.msra.mxu0 0.0
    %876 = vmatprep.subr.mxu0 0.0
    %877 = vmatpush2.xpose.msra.mxu0 0.0
    %878 = vmatprep.subr.mxu0 0.0
    %879 = vmatpush2.xpose.msra.mxu0 0.0
    %880 = vmatprep.subr.mxu0 0.0
    %881 = vmatpush2.xpose.msra.mxu0 0.0
    %882 = vmatprep.subr.mxu0 0.0
    %883 = vmatpush2.xpose.msra.mxu0 0.0
    %884 = vmatprep.mubr.f32.mxu0 0.0
    %885 = vmatmul.mubr.f32.gmra.mxu0 %v812
    %v886 = vpop.f32.mrf.mxu0
    %v887 = vadd.f32 0.0, %v886
    %v888 = vpop.f32.mrf.mxu0
    %889 = vmatprep.mubr.f32.mxu0 0.0
    %890 = vmatmul.mubr.f32.gmra.mxu0 %v814
    %v891 = vpop.f32.mrf.mxu0
    %v892 = vadd.f32 0.0, %v891
    %v893 = vpop.f32.mrf.mxu0
    %894 = vdwg.mxu0
    %v895 = vmul.f32 %v887, 0.35355338
    %v896 = vmul.f32 %v892, 0.35355338
    %v897 = vadd.f32 %v895, %v140
    %v898 = vadd.f32 %v896, %v141
    %v899 = vsel %vm326, %v897, -inf
    %900 = vmax.xlane.f32.xlu0 %v899
    %v901 = vpop.xlane.xlu0 %900
    %v902 = vsel %vm326, %v898, -inf
    %903 = vmax.xlane.f32.xlu0 %v902
    %v904 = vpop.xlane.xlu0 %903
    %v905 = vsub.f32 %v897, %v901
    %v906 = vsub.f32 %v898, %v904
    %v907 = vmul.f32 %v905, 1.442695
    %v908 = vpow.pop %v907
    %v909 = vmul.f32 %v906, 1.442695
    %v910 = vpow.pop %v909
    %v911 = vsel %vm326, %v908, 0.0
    %912 = vadd.xlane.f32.xlu0 %v911
    %v913 = vpop.xlane.xlu0 %912
    %v914 = vsel %vm326, %v910, 0.0
    %915 = vadd.xlane.f32.xlu0 %v914
    %v916 = vpop.xlane.xlu0 %915
    %v917 = vrcp.pop %v913
    %v918 = vrcp.pop %v916
    %v919 = vmul.f32 %v908, %v917
    %v920 = vmul.f32 %v910, %v918
    %921 = vrot.lane.b32.xlu0 %v225, 64
    %v922 = vpop.permute.xlu0 %921
    %923 = vrot.lane.b32.xlu0 %v230, 64
    %v924 = vpop.permute.xlu0 %923
    %v928 = vsel %vm326, %v919, 0
    %v931 = vsel %vm326, %v920, 0
    %933 = vmatprep.subr.mxu0 0.0
    %934 = vmatpush1.msra.mxu0 0.0
    %935 = vmatprep.subr.mxu0 0.0
    %936 = vmatpush1.msra.mxu0 0.0
    %937 = vmatprep.subr.mxu0 0.0
    %938 = vmatpush1.msra.mxu0 0.0
    %939 = vmatprep.subr.mxu0 0.0
    %940 = vmatpush1.msra.mxu0 0.0
    %941 = vmatprep.subr.mxu0 0.0
    %942 = vmatpush1.msra.mxu0 0.0
    %943 = vmatprep.subr.mxu0 0.0
    %944 = vmatpush1.msra.mxu0 0.0
    %945 = vmatprep.subr.mxu0 0.0
    %946 = vmatpush1.msra.mxu0 0.0
    %947 = vmatprep.subr.mxu0 0.0
    %948 = vmatpush1.msra.mxu0 0.0
    %949 = vmatprep.subr.mxu0 0.0
    %950 = vmatpush1.msra.mxu0 0.0
    %951 = vmatprep.subr.mxu0 0.0
    %952 = vmatpush1.msra.mxu0 0.0
    %953 = vmatprep.subr.mxu0 0.0
    %954 = vmatpush1.msra.mxu0 0.0
    %955 = vmatprep.subr.mxu0 0.0
    %956 = vmatpush1.msra.mxu0 0.0
    %957 = vmatprep.subr.mxu0 0.0
    %958 = vmatpush1.msra.mxu0 0.0
    %959 = vmatprep.subr.mxu0 0.0
    %960 = vmatpush1.msra.mxu0 0.0
    %961 = vmatprep.subr.mxu0 0.0
    %962 = vmatpush1.msra.mxu0 %v924
    %963 = vmatprep.subr.mxu0 0.0
    %964 = vmatpush1.msra.mxu0 %v922
    %965 = vmatprep.subr.mxu0 0.0
    %966 = vmatpush2.msra.mxu0 0.0
    %967 = vmatprep.subr.mxu0 0.0
    %968 = vmatpush2.msra.mxu0 0.0
    %969 = vmatprep.subr.mxu0 0.0
    %970 = vmatpush2.msra.mxu0 0.0
    %971 = vmatprep.subr.mxu0 0.0
    %972 = vmatpush2.msra.mxu0 0.0
    %973 = vmatprep.subr.mxu0 0.0
    %974 = vmatpush2.msra.mxu0 0.0
    %975 = vmatprep.subr.mxu0 0.0
    %976 = vmatpush2.msra.mxu0 0.0
    %977 = vmatprep.subr.mxu0 0.0
    %978 = vmatpush2.msra.mxu0 0.0
    %979 = vmatprep.subr.mxu0 0.0
    %980 = vmatpush2.msra.mxu0 0.0
    %981 = vmatprep.subr.mxu0 0.0
    %982 = vmatpush2.msra.mxu0 0.0
    %983 = vmatprep.subr.mxu0 0.0
    %984 = vmatpush2.msra.mxu0 0.0
    %985 = vmatprep.subr.mxu0 0.0
    %986 = vmatpush2.msra.mxu0 0.0
    %987 = vmatprep.subr.mxu0 0.0
    %988 = vmatpush2.msra.mxu0 0.0
    %989 = vmatprep.subr.mxu0 0.0
    %990 = vmatpush2.msra.mxu0 0.0
    %991 = vmatprep.subr.mxu0 0.0
    %992 = vmatpush2.msra.mxu0 0.0
    %993 = vmatprep.subr.mxu0 0.0
    %994 = vmatpush2.msra.mxu0 0.0
    %995 = vmatprep.subr.mxu0 0.0
    %996 = vmatpush2.msra.mxu0 0.0
    %997 = vmatprep.mubr.f32.mxu0 0.0
    %998 = vmatmul.mubr.f32.gmra.mxu0 %v928
    %v999 = vpop.f32.mrf.mxu0
    %v1000 = vadd.f32 0.0, %v999
    %v1001 = vpop.f32.mrf.mxu0
    %1002 = vmatprep.mubr.f32.mxu0 0.0
    %1003 = vmatmul.mubr.f32.gmra.mxu0 %v931
    %v1004 = vpop.f32.mrf.mxu0
    %v1005 = vadd.f32 0.0, %v1004
    %v1006 = vpop.f32.mrf.mxu0
    %1007 = vdwg.mxu0
    %v1008 = vld [vmem:[#allocation2 + $0x38] sm:$0xff]
    %v1010 = vsel %vm58, %v1000, 0
    %v1013 = vsel %vm58, %v1005, 0
    %1015 = vmatprep.subr.mxu0 0.0
    %1016 = vmatpush1.msra.mxu0 0.0
    %1017 = vmatprep.subr.mxu0 0.0
    %1018 = vmatpush1.msra.mxu0 0.0
    %1019 = vmatprep.subr.mxu0 0.0
    %1020 = vmatpush1.msra.mxu0 0.0
    %1021 = vmatprep.subr.mxu0 0.0
    %1022 = vmatpush1.msra.mxu0 0.0
    %1023 = vmatprep.subr.mxu0 0.0
    %1024 = vmatpush1.msra.mxu0 0.0
    %1025 = vmatprep.subr.mxu0 0.0
    %1026 = vmatpush1.msra.mxu0 0.0
    %1027 = vmatprep.subr.mxu0 0.0
    %1028 = vmatpush1.msra.mxu0 0.0
    %1029 = vmatprep.subr.mxu0 0.0
    %1030 = vmatpush1.msra.mxu0 0.0
    %1031 = vmatprep.subr.mxu0 0.0
    %1032 = vmatpush1.msra.mxu0 0.0
    %1033 = vmatprep.subr.mxu0 0.0
    %1034 = vmatpush1.msra.mxu0 0.0
    %1035 = vmatprep.subr.mxu0 0.0
    %1036 = vmatpush1.msra.mxu0 0.0
    %1037 = vmatprep.subr.mxu0 0.0
    %1038 = vmatpush1.msra.mxu0 0.0
    %1039 = vmatprep.subr.mxu0 0.0
    %1040 = vmatpush1.msra.mxu0 0.0
    %1041 = vmatprep.subr.mxu0 0.0
    %1042 = vmatpush1.msra.mxu0 0.0
    %1043 = vmatprep.subr.mxu0 0.0
    %1044 = vmatpush1.msra.mxu0 0.0
    %1045 = vmatprep.subr.mxu0 0.0
    %1046 = vmatpush1.msra.mxu0 %v1008
    %1047 = vmatprep.subr.mxu0 0.0
    %1048 = vmatpush2.msra.mxu0 0.0
    %1049 = vmatprep.subr.mxu0 0.0
    %1050 = vmatpush2.msra.mxu0 0.0
    %1051 = vmatprep.subr.mxu0 0.0
    %1052 = vmatpush2.msra.mxu0 0.0
    %1053 = vmatprep.subr.mxu0 0.0
    %1054 = vmatpush2.msra.mxu0 0.0
    %1055 = vmatprep.subr.mxu0 0.0
    %1056 = vmatpush2.msra.mxu0 0.0
    %1057 = vmatprep.subr.mxu0 0.0
    %1058 = vmatpush2.msra.mxu0 0.0
    %1059 = vmatprep.subr.mxu0 0.0
    %1060 = vmatpush2.msra.mxu0 0.0
    %1061 = vmatprep.subr.mxu0 0.0
    %1062 = vmatpush2.msra.mxu0 0.0
    %1063 = vmatprep.subr.mxu0 0.0
    %1064 = vmatpush2.msra.mxu0 0.0
    %1065 = vmatprep.subr.mxu0 0.0
    %1066 = vmatpush2.msra.mxu0 0.0
    %1067 = vmatprep.subr.mxu0 0.0
    %1068 = vmatpush2.msra.mxu0 0.0
    %1069 = vmatprep.subr.mxu0 0.0
    %1070 = vmatpush2.msra.mxu0 0.0
    %1071 = vmatprep.subr.mxu0 0.0
    %1072 = vmatpush2.msra.mxu0 0.0
    %1073 = vmatprep.subr.mxu0 0.0
    %1074 = vmatpush2.msra.mxu0 0.0
    %1075 = vmatprep.subr.mxu0 0.0
    %1076 = vmatpush2.msra.mxu0 0.0
    %1077 = vmatprep.subr.mxu0 0.0
    %1078 = vmatpush2.msra.mxu0 0.0
    %1079 = vmatprep.mubr.f32.mxu0 0.0
    %1080 = vmatmul.mubr.f32.gmra.mxu0 %v1010
    %v1081 = vpop.f32.mrf.mxu0
    %v1082 = vadd.f32 0.0, %v1081
    %v1083 = vpop.f32.mrf.mxu0
    %1084 = vmatprep.mubr.f32.mxu0 0.0
    %1085 = vmatmul.mubr.f32.gmra.mxu0 %v1013
    %v1086 = vpop.f32.mrf.mxu0
    %v1087 = vadd.f32 0.0, %v1086
    %v1088 = vpop.f32.mrf.mxu0
    %1089 = vdwg.mxu0
    %v1090 = vadd.f32 %v796, %v1082
    %v1091 = vadd.f32 %v801, %v1087
    %1092 = vrot.lane.b32.xlu0 %v225, 56
    %v1093 = vpop.permute.xlu0 %1092
    %1094 = vrot.lane.b32.xlu0 %v230, 56
    %v1095 = vpop.permute.xlu0 %1094
    %1096 = vrot.lane.b32.xlu0 %v225, 48
    %v1097 = vpop.permute.xlu0 %1096
    %1098 = vrot.lane.b32.xlu0 %v230, 48
    %v1099 = vpop.permute.xlu0 %1098
    %v1100 = vsel %vm58, %v1093, 0
    %v1102 = vsel %vm58, %v1095, 0
    %v1104 = vsel %vm58, %v1097, 0
    %v1106 = vsel %vm58, %v1099, 0
    %1108 = vmatprep.subr.mxu0 0.0
    %1109 = vmatpush1.xpose.msra.mxu0 0.0
    %1110 = vmatprep.subr.mxu0 0.0
    %1111 = vmatpush1.xpose.msra.mxu0 0.0
    %1112 = vmatprep.subr.mxu0 0.0
    %1113 = vmatpush1.xpose.msra.mxu0 0.0
    %1114 = vmatprep.subr.mxu0 0.0
    %1115 = vmatpush1.xpose.msra.mxu0 0.0
    %1116 = vmatprep.subr.mxu0 0.0
    %1117 = vmatpush1.xpose.msra.mxu0 0.0
    %1118 = vmatprep.subr.mxu0 0.0
    %1119 = vmatpush1.xpose.msra.mxu0 0.0
    %1120 = vmatprep.subr.mxu0 0.0
    %1121 = vmatpush1.xpose.msra.mxu0 0.0
    %1122 = vmatprep.subr.mxu0 0.0
    %1123 = vmatpush1.xpose.msra.mxu0 0.0
    %1124 = vmatprep.subr.mxu0 0.0
    %1125 = vmatpush1.xpose.msra.mxu0 0.0
    %1126 = vmatprep.subr.mxu0 0.0
    %1127 = vmatpush1.xpose.msra.mxu0 0.0
    %1128 = vmatprep.subr.mxu0 0.0
    %1129 = vmatpush1.xpose.msra.mxu0 0.0
    %1130 = vmatprep.subr.mxu0 0.0
    %1131 = vmatpush1.xpose.msra.mxu0 0.0
    %1132 = vmatprep.subr.mxu0 0.0
    %1133 = vmatpush1.xpose.msra.mxu0 0.0
    %1134 = vmatprep.subr.mxu0 0.0
    %1135 = vmatpush1.xpose.msra.mxu0 0.0
    %1136 = vmatprep.subr.mxu0 0.0
    %1137 = vmatpush1.xpose.msra.mxu0 %v1106
    %1138 = vmatprep.subr.mxu0 0.0
    %1139 = vmatpush1.xpose.msra.mxu0 %v1104
    %1140 = vmatprep.subr.mxu0 0.0
    %1141 = vmatpush2.xpose.msra.mxu0 0.0
    %1142 = vmatprep.subr.mxu0 0.0
    %1143 = vmatpush2.xpose.msra.mxu0 0.0
    %1144 = vmatprep.subr.mxu0 0.0
    %1145 = vmatpush2.xpose.msra.mxu0 0.0
    %1146 = vmatprep.subr.mxu0 0.0
    %1147 = vmatpush2.xpose.msra.mxu0 0.0
    %1148 = vmatprep.subr.mxu0 0.0
    %1149 = vmatpush2.xpose.msra.mxu0 0.0
    %1150 = vmatprep.subr.mxu0 0.0
    %1151 = vmatpush2.xpose.msra.mxu0 0.0
    %1152 = vmatprep.subr.mxu0 0.0
    %1153 = vmatpush2.xpose.msra.mxu0 0.0
    %1154 = vmatprep.subr.mxu0 0.0
    %1155 = vmatpush2.xpose.msra.mxu0 0.0
    %1156 = vmatprep.subr.mxu0 0.0
    %1157 = vmatpush2.xpose.msra.mxu0 0.0
    %1158 = vmatprep.subr.mxu0 0.0
    %1159 = vmatpush2.xpose.msra.mxu0 0.0
    %1160 = vmatprep.subr.mxu0 0.0
    %1161 = vmatpush2.xpose.msra.mxu0 0.0
    %1162 = vmatprep.subr.mxu0 0.0
    %1163 = vmatpush2.xpose.msra.mxu0 0.0
    %1164 = vmatprep.subr.mxu0 0.0
    %1165 = vmatpush2.xpose.msra.mxu0 0.0
    %1166 = vmatprep.subr.mxu0 0.0
    %1167 = vmatpush2.xpose.msra.mxu0 0.0
    %1168 = vmatprep.subr.mxu0 0.0
    %1169 = vmatpush2.xpose.msra.mxu0 0.0
    %1170 = vmatprep.subr.mxu0 0.0
    %1171 = vmatpush2.xpose.msra.mxu0 0.0
    %1172 = vmatprep.mubr.f32.mxu0 0.0
    %1173 = vmatmul.mubr.f32.gmra.mxu0 %v1100
    %v1174 = vpop.f32.mrf.mxu0
    %v1175 = vadd.f32 0.0, %v1174
    %v1176 = vpop.f32.mrf.mxu0
    %1177 = vmatprep.mubr.f32.mxu0 0.0
    %1178 = vmatmul.mubr.f32.gmra.mxu0 %v1102
    %v1179 = vpop.f32.mrf.mxu0
    %v1180 = vadd.f32 0.0, %v1179
    %v1181 = vpop.f32.mrf.mxu0
    %1182 = vdwg.mxu0
    %v1183 = vmul.f32 %v1175, 0.35355338
    %v1184 = vmul.f32 %v1180, 0.35355338
    %v1185 = vadd.f32 %v1183, %v140
    %v1186 = vadd.f32 %v1184, %v141
    %v1187 = vsel %vm326, %v1185, -inf
    %1188 = vmax.xlane.f32.xlu0 %v1187
    %v1189 = vpop.xlane.xlu0 %1188
    %v1190 = vsel %vm326, %v1186, -inf
    %1191 = vmax.xlane.f32.xlu0 %v1190
    %v1192 = vpop.xlane.xlu0 %1191
    %v1193 = vsub.f32 %v1185, %v1189
    %v1194 = vsub.f32 %v1186, %v1192
    %v1195 = vmul.f32 %v1193, 1.442695
    %v1196 = vpow.pop %v1195
    %v1197 = vmul.f32 %v1194, 1.442695
    %v1198 = vpow.pop %v1197
    %v1199 = vsel %vm326, %v1196, 0.0
    %1200 = vadd.xlane.f32.xlu0 %v1199
    %v1201 = vpop.xlane.xlu0 %1200
    %v1202 = vsel %vm326, %v1198, 0.0
    %1203 = vadd.xlane.f32.xlu0 %v1202
    %v1204 = vpop.xlane.xlu0 %1203
    %v1205 = vrcp.pop %v1201
    %v1206 = vrcp.pop %v1204
    %v1207 = vmul.f32 %v1196, %v1205
    %v1208 = vmul.f32 %v1198, %v1206
    %1209 = vrot.lane.b32.xlu0 %v225, 40
    %v1210 = vpop.permute.xlu0 %1209
    %1211 = vrot.lane.b32.xlu0 %v230, 40
    %v1212 = vpop.permute.xlu0 %1211
    %v1216 = vsel %vm326, %v1207, 0
    %v1219 = vsel %vm326, %v1208, 0
    %1221 = vmatprep.subr.mxu0 0.0
    %1222 = vmatpush1.msra.mxu0 0.0
    %1223 = vmatprep.subr.mxu0 0.0
    %1224 = vmatpush1.msra.mxu0 0.0
    %1225 = vmatprep.subr.mxu0 0.0
    %1226 = vmatpush1.msra.mxu0 0.0
    %1227 = vmatprep.subr.mxu0 0.0
    %1228 = vmatpush1.msra.mxu0 0.0
    %1229 = vmatprep.subr.mxu0 0.0
    %1230 = vmatpush1.msra.mxu0 0.0
    %1231 = vmatprep.subr.mxu0 0.0
    %1232 = vmatpush1.msra.mxu0 0.0
    %1233 = vmatprep.subr.mxu0 0.0
    %1234 = vmatpush1.msra.mxu0 0.0
    %1235 = vmatprep.subr.mxu0 0.0
    %1236 = vmatpush1.msra.mxu0 0.0
    %1237 = vmatprep.subr.mxu0 0.0
    %1238 = vmatpush1.msra.mxu0 0.0
    %1239 = vmatprep.subr.mxu0 0.0
    %1240 = vmatpush1.msra.mxu0 0.0
    %1241 = vmatprep.subr.mxu0 0.0
    %1242 = vmatpush1.msra.mxu0 0.0
    %1243 = vmatprep.subr.mxu0 0.0
    %1244 = vmatpush1.msra.mxu0 0.0
    %1245 = vmatprep.subr.mxu0 0.0
    %1246 = vmatpush1.msra.mxu0 0.0
    %1247 = vmatprep.subr.mxu0 0.0
    %1248 = vmatpush1.msra.mxu0 0.0
    %1249 = vmatprep.subr.mxu0 0.0
    %1250 = vmatpush1.msra.mxu0 %v1212
    %1251 = vmatprep.subr.mxu0 0.0
    %1252 = vmatpush1.msra.mxu0 %v1210
    %1253 = vmatprep.subr.mxu0 0.0
    %1254 = vmatpush2.msra.mxu0 0.0
    %1255 = vmatprep.subr.mxu0 0.0
    %1256 = vmatpush2.msra.mxu0 0.0
    %1257 = vmatprep.subr.mxu0 0.0
    %1258 = vmatpush2.msra.mxu0 0.0
    %1259 = vmatprep.subr.mxu0 0.0
    %1260 = vmatpush2.msra.mxu0 0.0
    %1261 = vmatprep.subr.mxu0 0.0
    %1262 = vmatpush2.msra.mxu0 0.0
    %1263 = vmatprep.subr.mxu0 0.0
    %1264 = vmatpush2.msra.mxu0 0.0
    %1265 = vmatprep.subr.mxu0 0.0
    %1266 = vmatpush2.msra.mxu0 0.0
    %1267 = vmatprep.subr.mxu0 0.0
    %1268 = vmatpush2.msra.mxu0 0.0
    %1269 = vmatprep.subr.mxu0 0.0
    %1270 = vmatpush2.msra.mxu0 0.0
    %1271 = vmatprep.subr.mxu0 0.0
    %1272 = vmatpush2.msra.mxu0 0.0
    %1273 = vmatprep.subr.mxu0 0.0
    %1274 = vmatpush2.msra.mxu0 0.0
    %1275 = vmatprep.subr.mxu0 0.0
    %1276 = vmatpush2.msra.mxu0 0.0
    %1277 = vmatprep.subr.mxu0 0.0
    %1278 = vmatpush2.msra.mxu0 0.0
    %1279 = vmatprep.subr.mxu0 0.0
    %1280 = vmatpush2.msra.mxu0 0.0
    %1281 = vmatprep.subr.mxu0 0.0
    %1282 = vmatpush2.msra.mxu0 0.0
    %1283 = vmatprep.subr.mxu0 0.0
    %1284 = vmatpush2.msra.mxu0 0.0
    %1285 = vmatprep.mubr.f32.mxu0 0.0
    %1286 = vmatmul.mubr.f32.gmra.mxu0 %v1216
    %v1287 = vpop.f32.mrf.mxu0
    %v1288 = vadd.f32 0.0, %v1287
    %v1289 = vpop.f32.mrf.mxu0
    %1290 = vmatprep.mubr.f32.mxu0 0.0
    %1291 = vmatmul.mubr.f32.gmra.mxu0 %v1219
    %v1292 = vpop.f32.mrf.mxu0
    %v1293 = vadd.f32 0.0, %v1292
    %v1294 = vpop.f32.mrf.mxu0
    %1295 = vdwg.mxu0
    %v1296 = vld [vmem:[#allocation2 + $0x40] sm:$0xff]
    %v1298 = vsel %vm58, %v1288, 0
    %v1301 = vsel %vm58, %v1293, 0
    %1303 = vmatprep.subr.mxu0 0.0
    %1304 = vmatpush1.msra.mxu0 0.0
    %1305 = vmatprep.subr.mxu0 0.0
    %1306 = vmatpush1.msra.mxu0 0.0
    %1307 = vmatprep.subr.mxu0 0.0
    %1308 = vmatpush1.msra.mxu0 0.0
    %1309 = vmatprep.subr.mxu0 0.0
    %1310 = vmatpush1.msra.mxu0 0.0
    %1311 = vmatprep.subr.mxu0 0.0
    %1312 = vmatpush1.msra.mxu0 0.0
    %1313 = vmatprep.subr.mxu0 0.0
    %1314 = vmatpush1.msra.mxu0 0.0
    %1315 = vmatprep.subr.mxu0 0.0
    %1316 = vmatpush1.msra.mxu0 0.0
    %1317 = vmatprep.subr.mxu0 0.0
    %1318 = vmatpush1.msra.mxu0 0.0
    %1319 = vmatprep.subr.mxu0 0.0
    %1320 = vmatpush1.msra.mxu0 0.0
    %1321 = vmatprep.subr.mxu0 0.0
    %1322 = vmatpush1.msra.mxu0 0.0
    %1323 = vmatprep.subr.mxu0 0.0
    %1324 = vmatpush1.msra.mxu0 0.0
    %1325 = vmatprep.subr.mxu0 0.0
    %1326 = vmatpush1.msra.mxu0 0.0
    %1327 = vmatprep.subr.mxu0 0.0
    %1328 = vmatpush1.msra.mxu0 0.0
    %1329 = vmatprep.subr.mxu0 0.0
    %1330 = vmatpush1.msra.mxu0 0.0
    %1331 = vmatprep.subr.mxu0 0.0
    %1332 = vmatpush1.msra.mxu0 0.0
    %1333 = vmatprep.subr.mxu0 0.0
    %1334 = vmatpush1.msra.mxu0 %v1296
    %1335 = vmatprep.subr.mxu0 0.0
    %1336 = vmatpush2.msra.mxu0 0.0
    %1337 = vmatprep.subr.mxu0 0.0
    %1338 = vmatpush2.msra.mxu0 0.0
    %1339 = vmatprep.subr.mxu0 0.0
    %1340 = vmatpush2.msra.mxu0 0.0
    %1341 = vmatprep.subr.mxu0 0.0
    %1342 = vmatpush2.msra.mxu0 0.0
    %1343 = vmatprep.subr.mxu0 0.0
    %1344 = vmatpush2.msra.mxu0 0.0
    %1345 = vmatprep.subr.mxu0 0.0
    %1346 = vmatpush2.msra.mxu0 0.0
    %1347 = vmatprep.subr.mxu0 0.0
    %1348 = vmatpush2.msra.mxu0 0.0
    %1349 = vmatprep.subr.mxu0 0.0
    %1350 = vmatpush2.msra.mxu0 0.0
    %1351 = vmatprep.subr.mxu0 0.0
    %1352 = vmatpush2.msra.mxu0 0.0
    %1353 = vmatprep.subr.mxu0 0.0
    %1354 = vmatpush2.msra.mxu0 0.0
    %1355 = vmatprep.subr.mxu0 0.0
    %1356 = vmatpush2.msra.mxu0 0.0
    %1357 = vmatprep.subr.mxu0 0.0
    %1358 = vmatpush2.msra.mxu0 0.0
    %1359 = vmatprep.subr.mxu0 0.0
    %1360 = vmatpush2.msra.mxu0 0.0
    %1361 = vmatprep.subr.mxu0 0.0
    %1362 = vmatpush2.msra.mxu0 0.0
    %1363 = vmatprep.subr.mxu0 0.0
    %1364 = vmatpush2.msra.mxu0 0.0
    %1365 = vmatprep.subr.mxu0 0.0
    %1366 = vmatpush2.msra.mxu0 0.0
    %1367 = vmatprep.mubr.f32.mxu0 0.0
    %1368 = vmatmul.mubr.f32.gmra.mxu0 %v1298
    %v1369 = vpop.f32.mrf.mxu0
    %v1370 = vadd.f32 0.0, %v1369
    %v1371 = vpop.f32.mrf.mxu0
    %1372 = vmatprep.mubr.f32.mxu0 0.0
    %1373 = vmatmul.mubr.f32.gmra.mxu0 %v1301
    %v1374 = vpop.f32.mrf.mxu0
    %v1375 = vadd.f32 0.0, %v1374
    %v1376 = vpop.f32.mrf.mxu0
    %1377 = vdwg.mxu0
    %v1378 = vadd.f32 %v1090, %v1370
    %v1379 = vadd.f32 %v1091, %v1375
    %v1380 = vld [vmem:[#allocation5 + $0x11] sm:$0x1]
    %v1381 = vlaneseq
    %v1382 = vshrl.u32 %v1381, 7
    %v1383 = vsub.s32 0, %v1382
    %v1384 = vrot.slane %v1380, %v1383
    %v1385 = vadd.f32 %v1378, %v1384
    %v1386 = vadd.f32 %v1379, %v1384
    %v1387 = vadd.f32 %v132, %v1385
    %v1388 = vadd.f32 %v137, %v1386
    %v1389 = vld [vmem:[#allocation5 + $0x14] sm:$0x1]
    %v1390 = vld [vmem:[#allocation5 + $0x15] sm:$0x1]
    %v1391 = vsel %vm151, %v1387, 0.0
    %1392 = vadd.xlane.f32.xlu0 %v1391
    %v1393 = vpop.xlane.xlu0 %1392
    %v1394 = vsel %vm151, %v1388, 0.0
    %1395 = vadd.xlane.f32.xlu0 %v1394
    %v1396 = vpop.xlane.xlu0 %1395
    %v1397 = vrcp.pop 32.0
    %v1398 = vmul.f32 %v1393, %v1397
    %v1399 = vmul.f32 %v1396, %v1397
    %v1400 = vsub.f32 %v1387, %v1398
    %v1401 = vsub.f32 %v1388, %v1399
    %v1402 = vmul.f32 %v1400, %v1400
    %v1403 = vmul.f32 %v1401, %v1401
    %v1404 = vsel %vm151, %v1402, 0.0
    %1405 = vadd.xlane.f32.xlu0 %v1404
    %v1406 = vpop.xlane.xlu0 %1405
    %v1407 = vsel %vm151, %v1403, 0.0
    %1408 = vadd.xlane.f32.xlu0 %v1407
    %v1409 = vpop.xlane.xlu0 %1408
    %v1410 = vmul.f32 %v1406, %v1397
    %v1411 = vmul.f32 %v1409, %v1397
    %v1412 = vadd.f32 %v1410, 1e-05
    %v1413 = vadd.f32 %v1411, 1e-05
    %v1414 = vrsqrt.pop %v1412
    %v1415 = vrsqrt.pop %v1413
    %v1416 = vmul.f32 %v1400, %v1414
    %v1417 = vmul.f32 %v1401, %v1415
    %v1418 = vlaneseq
    %v1419 = vshrl.u32 %v1418, 7
    %v1420 = vsub.s32 0, %v1419
    %v1421 = vrot.slane %v1389, %v1420
    %v1422 = vmul.f32 %v1416, %v1421
    %v1423 = vmul.f32 %v1417, %v1421
    %v1424 = vlaneseq
    %v1425 = vshrl.u32 %v1424, 7
    %v1426 = vsub.s32 0, %v1425
    %v1427 = vrot.slane %v1390, %v1426
    %v1428 = vadd.f32 %v1422, %v1427
    %v1429 = vadd.f32 %v1423, %v1427
    %v1430 = vld [vmem:[#allocation2 + $0x48] sm:$0xff]
    %v1431 = vld [vmem:[#allocation2 + $0x50] sm:$0xff]
    %v1432 = vld [vmem:[#allocation2 + $0x58] sm:$0xff]
    %v1433 = vld [vmem:[#allocation2 + $0x60] sm:$0xff]
    %v1434 = vld [vmem:[#allocation5 + $0x12] sm:$0x1]
    %v1435 = vlaneseq
    %v1436 = vshrl.u32 %v1435, 7
    %v1437 = vsub.s32 0, %v1436
    %v1438 = vrot.slane %v1434, %v1437
    %v1440 = vsel %vm151, %v1428, 0
    %v1443 = vsel %vm151, %v1429, 0
    %1445 = vmatprep.subr.mxu0 0.0
    %1446 = vmatpush1.msra.mxu0 0.0
    %1447 = vmatprep.subr.mxu0 0.0
    %1448 = vmatpush1.msra.mxu0 0.0
    %1449 = vmatprep.subr.mxu0 0.0
    %1450 = vmatpush1.msra.mxu0 0.0
    %1451 = vmatprep.subr.mxu0 0.0
    %1452 = vmatpush1.msra.mxu0 0.0
    %1453 = vmatprep.subr.mxu0 0.0
    %1454 = vmatpush1.msra.mxu0 0.0
    %1455 = vmatprep.subr.mxu0 0.0
    %1456 = vmatpush1.msra.mxu0 0.0
    %1457 = vmatprep.subr.mxu0 0.0
    %1458 = vmatpush1.msra.mxu0 0.0
    %1459 = vmatprep.subr.mxu0 0.0
    %1460 = vmatpush1.msra.mxu0 0.0
    %1461 = vmatprep.subr.mxu0 0.0
    %1462 = vmatpush1.msra.mxu0 0.0
    %1463 = vmatprep.subr.mxu0 0.0
    %1464 = vmatpush1.msra.mxu0 0.0
    %1465 = vmatprep.subr.mxu0 0.0
    %1466 = vmatpush1.msra.mxu0 0.0
    %1467 = vmatprep.subr.mxu0 0.0
    %1468 = vmatpush1.msra.mxu0 0.0
    %1469 = vmatprep.subr.mxu0 0.0
    %1470 = vmatpush1.msra.mxu0 %v1433
    %1471 = vmatprep.subr.mxu0 0.0
    %1472 = vmatpush1.msra.mxu0 %v1432
    %1473 = vmatprep.subr.mxu0 0.0
    %1474 = vmatpush1.msra.mxu0 %v1431
    %1475 = vmatprep.subr.mxu0 0.0
    %1476 = vmatpush1.msra.mxu0 %v1430
    %1477 = vmatprep.subr.mxu0 0.0
    %1478 = vmatpush2.msra.mxu0 0.0
    %1479 = vmatprep.subr.mxu0 0.0
    %1480 = vmatpush2.msra.mxu0 0.0
    %1481 = vmatprep.subr.mxu0 0.0
    %1482 = vmatpush2.msra.mxu0 0.0
    %1483 = vmatprep.subr.mxu0 0.0
    %1484 = vmatpush2.msra.mxu0 0.0
    %1485 = vmatprep.subr.mxu0 0.0
    %1486 = vmatpush2.msra.mxu0 0.0
    %1487 = vmatprep.subr.mxu0 0.0
    %1488 = vmatpush2.msra.mxu0 0.0
    %1489 = vmatprep.subr.mxu0 0.0
    %1490 = vmatpush2.msra.mxu0 0.0
    %1491 = vmatprep.subr.mxu0 0.0
    %1492 = vmatpush2.msra.mxu0 0.0
    %1493 = vmatprep.subr.mxu0 0.0
    %1494 = vmatpush2.msra.mxu0 0.0
    %1495 = vmatprep.subr.mxu0 0.0
    %1496 = vmatpush2.msra.mxu0 0.0
    %1497 = vmatprep.subr.mxu0 0.0
    %1498 = vmatpush2.msra.mxu0 0.0
    %1499 = vmatprep.subr.mxu0 0.0
    %1500 = vmatpush2.msra.mxu0 0.0
    %1501 = vmatprep.subr.mxu0 0.0
    %1502 = vmatpush2.msra.mxu0 0.0
    %1503 = vmatprep.subr.mxu0 0.0
    %1504 = vmatpush2.msra.mxu0 0.0
    %1505 = vmatprep.subr.mxu0 0.0
    %1506 = vmatpush2.msra.mxu0 0.0
    %1507 = vmatprep.subr.mxu0 0.0
    %1508 = vmatpush2.msra.mxu0 0.0
    %1509 = vmatprep.mubr.f32.mxu0 0.0
    %1510 = vmatmul.mubr.f32.gmra.mxu0 %v1440
    %v1511 = vpop.f32.mrf.mxu0
    %v1512 = vadd.f32 %v1438, %v1511
    %v1513 = vpop.f32.mrf.mxu0
    %1514 = vmatprep.mubr.f32.mxu0 0.0
    %1515 = vmatmul.mubr.f32.gmra.mxu0 %v1443
    %v1516 = vpop.f32.mrf.mxu0
    %v1517 = vadd.f32 %v1438, %v1516
    %v1518 = vpop.f32.mrf.mxu0
    %1519 = vdwg.mxu0
    %v1520 = vmax.f32 %v1512, 0.0
    %v1521 = vmax.f32 %v1517, 0.0
    %v1522 = vld [vmem:[#allocation2 + $0x68] sm:$0xff]
    %v1523 = vld [vmem:[#allocation2 + $0x70] sm:$0xff]
    %v1524 = vld [vmem:[#allocation2 + $0x78] sm:$0xff]
    %v1525 = vld [vmem:[#allocation2 + $0x80] sm:$0xff]
    %v1526 = vld [vmem:[#allocation2 + $0x88] sm:$0xff]
    %v1527 = vld [vmem:[#allocation2 + $0x90] sm:$0xff]
    %v1528 = vld [vmem:[#allocation2 + $0x98] sm:$0xff]
    %v1529 = vld [vmem:[#allocation2 + $0xa0] sm:$0xff]
    %v1530 = vld [vmem:[#allocation5 + $0x13] sm:$0x1]
    %v1531 = vlaneseq
    %v1532 = vshrl.u32 %v1531, 7
    %v1533 = vsub.s32 0, %v1532
    %v1534 = vrot.slane %v1530, %v1533
    %vm1535 = vcmask 523264
    %v1537 = vsel %vm1535, %v1520, 0
    %v1540 = vsel %vm1535, %v1521, 0
    %1542 = vmatprep.subr.mxu0 0.0
    %1543 = vmatpush1.msra.mxu0 0.0
    %1544 = vmatprep.subr.mxu0 0.0
    %1545 = vmatpush1.msra.mxu0 0.0
    %1546 = vmatprep.subr.mxu0 0.0
    %1547 = vmatpush1.msra.mxu0 0.0
    %1548 = vmatprep.subr.mxu0 0.0
    %1549 = vmatpush1.msra.mxu0 0.0
    %1550 = vmatprep.subr.mxu0 0.0
    %1551 = vmatpush1.msra.mxu0 0.0
    %1552 = vmatprep.subr.mxu0 0.0
    %1553 = vmatpush1.msra.mxu0 0.0
    %1554 = vmatprep.subr.mxu0 0.0
    %1555 = vmatpush1.msra.mxu0 0.0
    %1556 = vmatprep.subr.mxu0 0.0
    %1557 = vmatpush1.msra.mxu0 0.0
    %1558 = vmatprep.subr.mxu0 0.0
    %1559 = vmatpush1.msra.mxu0 %v1529
    %1560 = vmatprep.subr.mxu0 0.0
    %1561 = vmatpush1.msra.mxu0 %v1528
    %1562 = vmatprep.subr.mxu0 0.0
    %1563 = vmatpush1.msra.mxu0 %v1527
    %1564 = vmatprep.subr.mxu0 0.0
    %1565 = vmatpush1.msra.mxu0 %v1526
    %1566 = vmatprep.subr.mxu0 0.0
    %1567 = vmatpush1.msra.mxu0 %v1525
    %1568 = vmatprep.subr.mxu0 0.0
    %1569 = vmatpush1.msra.mxu0 %v1524
    %1570 = vmatprep.subr.mxu0 0.0
    %1571 = vmatpush1.msra.mxu0 %v1523
    %1572 = vmatprep.subr.mxu0 0.0
    %1573 = vmatpush1.msra.mxu0 %v1522
    %1574 = vmatprep.subr.mxu0 0.0
    %1575 = vmatpush2.msra.mxu0 0.0
    %1576 = vmatprep.subr.mxu0 0.0
    %1577 = vmatpush2.msra.mxu0 0.0
    %1578 = vmatprep.subr.mxu0 0.0
    %1579 = vmatpush2.msra.mxu0 0.0
    %1580 = vmatprep.subr.mxu0 0.0
    %1581 = vmatpush2.msra.mxu0 0.0
    %1582 = vmatprep.subr.mxu0 0.0
    %1583 = vmatpush2.msra.mxu0 0.0
    %1584 = vmatprep.subr.mxu0 0.0
    %1585 = vmatpush2.msra.mxu0 0.0
    %1586 = vmatprep.subr.mxu0 0.0
    %1587 = vmatpush2.msra.mxu0 0.0
    %1588 = vmatprep.subr.mxu0 0.0
    %1589 = vmatpush2.msra.mxu0 0.0
    %1590 = vmatprep.subr.mxu0 0.0
    %1591 = vmatpush2.msra.mxu0 0.0
    %1592 = vmatprep.subr.mxu0 0.0
    %1593 = vmatpush2.msra.mxu0 0.0
    %1594 = vmatprep.subr.mxu0 0.0
    %1595 = vmatpush2.msra.mxu0 0.0
    %1596 = vmatprep.subr.mxu0 0.0
    %1597 = vmatpush2.msra.mxu0 0.0
    %1598 = vmatprep.subr.mxu0 0.0
    %1599 = vmatpush2.msra.mxu0 0.0
    %1600 = vmatprep.subr.mxu0 0.0
    %1601 = vmatpush2.msra.mxu0 0.0
    %1602 = vmatprep.subr.mxu0 0.0
    %1603 = vmatpush2.msra.mxu0 0.0
    %1604 = vmatprep.subr.mxu0 0.0
    %1605 = vmatpush2.msra.mxu0 0.0
    %1606 = vmatprep.mubr.f32.mxu0 0.0
    %1607 = vmatmul.mubr.f32.gmra.mxu0 %v1537
    %v1608 = vpop.f32.mrf.mxu0
    %v1609 = vadd.f32 %v1534, %v1608
    %v1610 = vpop.f32.mrf.mxu0
    %1611 = vmatprep.mubr.f32.mxu0 0.0
    %1612 = vmatmul.mubr.f32.gmra.mxu0 %v1540
    %v1613 = vpop.f32.mrf.mxu0
    %v1614 = vadd.f32 %v1534, %v1613
    %v1615 = vpop.f32.mrf.mxu0
    %1616 = vdwg.mxu0
    %v1617 = vadd.f32 %v1428, %v1609
    %v1618 = vadd.f32 %v1429, %v1614
    %v1619 = vld [vmem:[#allocation5 + $0x16] sm:$0x1]
    %v1620 = vld [vmem:[#allocation5 + $0x17] sm:$0x1]
    %v1621 = vsel %vm151, %v1617, 0.0
    %1622 = vadd.xlane.f32.xlu0 %v1621
    %v1623 = vpop.xlane.xlu0 %1622
    %v1624 = vsel %vm151, %v1618, 0.0
    %1625 = vadd.xlane.f32.xlu0 %v1624
    %v1626 = vpop.xlane.xlu0 %1625
    %v1627 = vmul.f32 %v1623, %v1397
    %v1628 = vmul.f32 %v1626, %v1397
    %v1629 = vsub.f32 %v1617, %v1627
    %v1630 = vsub.f32 %v1618, %v1628
    %v1631 = vmul.f32 %v1629, %v1629
    %v1632 = vmul.f32 %v1630, %v1630
    %v1633 = vsel %vm151, %v1631, 0.0
    %1634 = vadd.xlane.f32.xlu0 %v1633
    %v1635 = vpop.xlane.xlu0 %1634
    %v1636 = vsel %vm151, %v1632, 0.0
    %1637 = vadd.xlane.f32.xlu0 %v1636
    %v1638 = vpop.xlane.xlu0 %1637
    %v1639 = vmul.f32 %v1635, %v1397
    %v1640 = vmul.f32 %v1638, %v1397
    %v1641 = vadd.f32 %v1639, 1e-05
    %v1642 = vadd.f32 %v1640, 1e-05
    %v1643 = vrsqrt.pop %v1641
    %v1644 = vrsqrt.pop %v1642
    %v1645 = vmul.f32 %v1629, %v1643
    %v1646 = vmul.f32 %v1630, %v1644
    %v1647 = vlaneseq
    %v1648 = vshrl.u32 %v1647, 7
    %v1649 = vsub.s32 0, %v1648
    %v1650 = vrot.slane %v1619, %v1649
    %v1651 = vmul.f32 %v1645, %v1650
    %v1652 = vmul.f32 %v1646, %v1650
    %v1653 = vlaneseq
    %v1654 = vshrl.u32 %v1653, 7
    %v1655 = vsub.s32 0, %v1654
    %v1656 = vrot.slane %v1620, %v1655
    %v1657 = vadd.f32 %v1651, %v1656
    %v1658 = vadd.f32 %v1652, %v1656
    %v1659 = vld [vmem:[#allocation2 + $0xa8] sm:$0xff]
    %v1660 = vld [vmem:[#allocation2 + $0xb0] sm:$0xff]
    %v1661 = vld [vmem:[#allocation2 + $0xb8] sm:$0xff]
    %v1662 = vld [vmem:[#allocation2 + $0xc0] sm:$0xff]
    %v1663 = vld [vmem:[#allocation5 + $0x18] sm:$0x1]
    %v1664 = vlaneseq
    %v1665 = vshrl.u32 %v1664, 7
    %v1666 = vsub.s32 0, %v1665
    %v1667 = vrot.slane %v1663, %v1666
    %v1669 = vsel %vm151, %v1657, 0
    %v1672 = vsel %vm151, %v1658, 0
    %1674 = vmatprep.subr.mxu0 0.0
    %1675 = vmatpush1.msra.mxu0 0.0
    %1676 = vmatprep.subr.mxu0 0.0
    %1677 = vmatpush1.msra.mxu0 0.0
    %1678 = vmatprep.subr.mxu0 0.0
    %1679 = vmatpush1.msra.mxu0 0.0
    %1680 = vmatprep.subr.mxu0 0.0
    %1681 = vmatpush1.msra.mxu0 0.0
    %1682 = vmatprep.subr.mxu0 0.0
    %1683 = vmatpush1.msra.mxu0 0.0
    %1684 = vmatprep.subr.mxu0 0.0
    %1685 = vmatpush1.msra.mxu0 0.0
    %1686 = vmatprep.subr.mxu0 0.0
    %1687 = vmatpush1.msra.mxu0 0.0
    %1688 = vmatprep.subr.mxu0 0.0
    %1689 = vmatpush1.msra.mxu0 0.0
    %1690 = vmatprep.subr.mxu0 0.0
    %1691 = vmatpush1.msra.mxu0 0.0
    %1692 = vmatprep.subr.mxu0 0.0
    %1693 = vmatpush1.msra.mxu0 0.0
    %1694 = vmatprep.subr.mxu0 0.0
    %1695 = vmatpush1.msra.mxu0 0.0
    %1696 = vmatprep.subr.mxu0 0.0
    %1697 = vmatpush1.msra.mxu0 0.0
    %1698 = vmatprep.subr.mxu0 0.0
    %1699 = vmatpush1.msra.mxu0 %v1662
    %1700 = vmatprep.subr.mxu0 0.0
    %1701 = vmatpush1.msra.mxu0 %v1661
    %1702 = vmatprep.subr.mxu0 0.0
    %1703 = vmatpush1.msra.mxu0 %v1660
    %1704 = vmatprep.subr.mxu0 0.0
    %1705 = vmatpush1.msra.mxu0 %v1659
    %1706 = vmatprep.subr.mxu0 0.0
    %1707 = vmatpush2.msra.mxu0 0.0
    %1708 = vmatprep.subr.mxu0 0.0
    %1709 = vmatpush2.msra.mxu0 0.0
    %1710 = vmatprep.subr.mxu0 0.0
    %1711 = vmatpush2.msra.mxu0 0.0
    %1712 = vmatprep.subr.mxu0 0.0
    %1713 = vmatpush2.msra.mxu0 0.0
    %1714 = vmatprep.subr.mxu0 0.0
    %1715 = vmatpush2.msra.mxu0 0.0
    %1716 = vmatprep.subr.mxu0 0.0
    %1717 = vmatpush2.msra.mxu0 0.0
    %1718 = vmatprep.subr.mxu0 0.0
    %1719 = vmatpush2.msra.mxu0 0.0
    %1720 = vmatprep.subr.mxu0 0.0
    %1721 = vmatpush2.msra.mxu0 0.0
    %1722 = vmatprep.subr.mxu0 0.0
    %1723 = vmatpush2.msra.mxu0 0.0
    %1724 = vmatprep.subr.mxu0 0.0
    %1725 = vmatpush2.msra.mxu0 0.0
    %1726 = vmatprep.subr.mxu0 0.0
    %1727 = vmatpush2.msra.mxu0 0.0
    %1728 = vmatprep.subr.mxu0 0.0
    %1729 = vmatpush2.msra.mxu0 0.0
    %1730 = vmatprep.subr.mxu0 0.0
    %1731 = vmatpush2.msra.mxu0 0.0
    %1732 = vmatprep.subr.mxu0 0.0
    %1733 = vmatpush2.msra.mxu0 0.0
    %1734 = vmatprep.subr.mxu0 0.0
    %1735 = vmatpush2.msra.mxu0 0.0
    %1736 = vmatprep.subr.mxu0 0.0
    %1737 = vmatpush2.msra.mxu0 0.0
    %1738 = vmatprep.mubr.f32.mxu0 0.0
    %1739 = vmatmul.mubr.f32.gmra.mxu0 %v1669
    %v1740 = vpop.f32.mrf.mxu0
    %v1741 = vadd.f32 %v1667, %v1740
    %v1742 = vpop.f32.mrf.mxu0
    %1743 = vmatprep.mubr.f32.mxu0 0.0
    %1744 = vmatmul.mubr.f32.gmra.mxu0 %v1672
    %v1745 = vpop.f32.mrf.mxu0
    %v1746 = vadd.f32 %v1667, %v1745
    %v1747 = vpop.f32.mrf.mxu0
    %1748 = vdwg.mxu0
    %1751 = vrot.lane.b32.xlu0 %v1741, 120
    %v1752 = vpop.permute.xlu0 %1751
    %1753 = vrot.lane.b32.xlu0 %v1746, 120
    %v1754 = vpop.permute.xlu0 %1753
    %v1755 = vsel %vm58, %v1741, 0
    %v1757 = vsel %vm58, %v1746, 0
    %v1759 = vsel %vm58, %v1752, 0
    %v1761 = vsel %vm58, %v1754, 0
    %1763 = vmatprep.subr.mxu0 0.0
    %1764 = vmatpush1.xpose.msra.mxu0 0.0
    %1765 = vmatprep.subr.mxu0 0.0
    %1766 = vmatpush1.xpose.msra.mxu0 0.0
    %1767 = vmatprep.subr.mxu0 0.0
    %1768 = vmatpush1.xpose.msra.mxu0 0.0
    %1769 = vmatprep.subr.mxu0 0.0
    %1770 = vmatpush1.xpose.msra.mxu0 0.0
    %1771 = vmatprep.subr.mxu0 0.0
    %1772 = vmatpush1.xpose.msra.mxu0 0.0
    %1773 = vmatprep.subr.mxu0 0.0
    %1774 = vmatpush1.xpose.msra.mxu0 0.0
    %1775 = vmatprep.subr.mxu0 0.0
    %1776 = vmatpush1.xpose.msra.mxu0 0.0
    %1777 = vmatprep.subr.mxu0 0.0
    %1778 = vmatpush1.xpose.msra.mxu0 0.0
    %1779 = vmatprep.subr.mxu0 0.0
    %1780 = vmatpush1.xpose.msra.mxu0 0.0
    %1781 = vmatprep.subr.mxu0 0.0
    %1782 = vmatpush1.xpose.msra.mxu0 0.0
    %1783 = vmatprep.subr.mxu0 0.0
    %1784 = vmatpush1.xpose.msra.mxu0 0.0
    %1785 = vmatprep.subr.mxu0 0.0
    %1786 = vmatpush1.xpose.msra.mxu0 0.0
    %1787 = vmatprep.subr.mxu0 0.0
    %1788 = vmatpush1.xpose.msra.mxu0 0.0
    %1789 = vmatprep.subr.mxu0 0.0
    %1790 = vmatpush1.xpose.msra.mxu0 0.0
    %1791 = vmatprep.subr.mxu0 0.0
    %1792 = vmatpush1.xpose.msra.mxu0 %v1761
    %1793 = vmatprep.subr.mxu0 0.0
    %1794 = vmatpush1.xpose.msra.mxu0 %v1759
    %1795 = vmatprep.subr.mxu0 0.0
    %1796 = vmatpush2.xpose.msra.mxu0 0.0
    %1797 = vmatprep.subr.mxu0 0.0
    %1798 = vmatpush2.xpose.msra.mxu0 0.0
    %1799 = vmatprep.subr.mxu0 0.0
    %1800 = vmatpush2.xpose.msra.mxu0 0.0
    %1801 = vmatprep.subr.mxu0 0.0
    %1802 = vmatpush2.xpose.msra.mxu0 0.0
    %1803 = vmatprep.subr.mxu0 0.0
    %1804 = vmatpush2.xpose.msra.mxu0 0.0
    %1805 = vmatprep.subr.mxu0 0.0
    %1806 = vmatpush2.xpose.msra.mxu0 0.0
    %1807 = vmatprep.subr.mxu0 0.0
    %1808 = vmatpush2.xpose.msra.mxu0 0.0
    %1809 = vmatprep.subr.mxu0 0.0
    %1810 = vmatpush2.xpose.msra.mxu0 0.0
    %1811 = vmatprep.subr.mxu0 0.0
    %1812 = vmatpush2.xpose.msra.mxu0 0.0
    %1813 = vmatprep.subr.mxu0 0.0
    %1814 = vmatpush2.xpose.msra.mxu0 0.0
    %1815 = vmatprep.subr.mxu0 0.0
    %1816 = vmatpush2.xpose.msra.mxu0 0.0
    %1817 = vmatprep.subr.mxu0 0.0
    %1818 = vmatpush2.xpose.msra.mxu0 0.0
    %1819 = vmatprep.subr.mxu0 0.0
    %1820 = vmatpush2.xpose.msra.mxu0 0.0
    %1821 = vmatprep.subr.mxu0 0.0
    %1822 = vmatpush2.xpose.msra.mxu0 0.0
    %1823 = vmatprep.subr.mxu0 0.0
    %1824 = vmatpush2.xpose.msra.mxu0 0.0
    %1825 = vmatprep.subr.mxu0 0.0
    %1826 = vmatpush2.xpose.msra.mxu0 0.0
    %1827 = vmatprep.mubr.f32.mxu0 0.0
    %1828 = vmatmul.mubr.f32.gmra.mxu0 %v1755
    %v1829 = vpop.f32.mrf.mxu0
    %v1830 = vadd.f32 0.0, %v1829
    %v1831 = vpop.f32.mrf.mxu0
    %1832 = vmatprep.mubr.f32.mxu0 0.0
    %1833 = vmatmul.mubr.f32.gmra.mxu0 %v1757
    %v1834 = vpop.f32.mrf.mxu0
    %v1835 = vadd.f32 0.0, %v1834
    %v1836 = vpop.f32.mrf.mxu0
    %1837 = vdwg.mxu0
    %v1838 = vmul.f32 %v1830, 0.35355338
    %v1839 = vmul.f32 %v1835, 0.35355338
    %v1840 = vadd.f32 %v1838, %v140
    %v1841 = vadd.f32 %v1839, %v141
    %v1842 = vsel %vm326, %v1840, -inf
    %1843 = vmax.xlane.f32.xlu0 %v1842
    %v1844 = vpop.xlane.xlu0 %1843
    %v1845 = vsel %vm326, %v1841, -inf
    %1846 = vmax.xlane.f32.xlu0 %v1845
    %v1847 = vpop.xlane.xlu0 %1846
    %v1848 = vsub.f32 %v1840, %v1844
    %v1849 = vsub.f32 %v1841, %v1847
    %v1850 = vmul.f32 %v1848, 1.442695
    %v1851 = vpow.pop %v1850
    %v1852 = vmul.f32 %v1849, 1.442695
    %v1853 = vpow.pop %v1852
    %v1854 = vsel %vm326, %v1851, 0.0
    %1855 = vadd.xlane.f32.xlu0 %v1854
    %v1856 = vpop.xlane.xlu0 %1855
    %v1857 = vsel %vm326, %v1853, 0.0
    %1858 = vadd.xlane.f32.xlu0 %v1857
    %v1859 = vpop.xlane.xlu0 %1858
    %v1860 = vrcp.pop %v1856
    %v1861 = vrcp.pop %v1859
    %v1862 = vmul.f32 %v1851, %v1860
    %v1863 = vmul.f32 %v1853, %v1861
    %1864 = vrot.lane.b32.xlu0 %v1741, 112
    %v1865 = vpop.permute.xlu0 %1864
    %1866 = vrot.lane.b32.xlu0 %v1746, 112
    %v1867 = vpop.permute.xlu0 %1866
    %v1871 = vsel %vm326, %v1862, 0
    %v1874 = vsel %vm326, %v1863, 0
    %1876 = vmatprep.subr.mxu0 0.0
    %1877 = vmatpush1.msra.mxu0 0.0
    %1878 = vmatprep.subr.mxu0 0.0
    %1879 = vmatpush1.msra.mxu0 0.0
    %1880 = vmatprep.subr.mxu0 0.0
    %1881 = vmatpush1.msra.mxu0 0.0
    %1882 = vmatprep.subr.mxu0 0.0
    %1883 = vmatpush1.msra.mxu0 0.0
    %1884 = vmatprep.subr.mxu0 0.0
    %1885 = vmatpush1.msra.mxu0 0.0
    %1886 = vmatprep.subr.mxu0 0.0
    %1887 = vmatpush1.msra.mxu0 0.0
    %1888 = vmatprep.subr.mxu0 0.0
    %1889 = vmatpush1.msra.mxu0 0.0
    %1890 = vmatprep.subr.mxu0 0.0
    %1891 = vmatpush1.msra.mxu0 0.0
    %1892 = vmatprep.subr.mxu0 0.0
    %1893 = vmatpush1.msra.mxu0 0.0
    %1894 = vmatprep.subr.mxu0 0.0
    %1895 = vmatpush1.msra.mxu0 0.0
    %1896 = vmatprep.subr.mxu0 0.0
    %1897 = vmatpush1.msra.mxu0 0.0
    %1898 = vmatprep.subr.mxu0 0.0
    %1899 = vmatpush1.msra.mxu0 0.0
    %1900 = vmatprep.subr.mxu0 0.0
    %1901 = vmatpush1.msra.mxu0 0.0
    %1902 = vmatprep.subr.mxu0 0.0
    %1903 = vmatpush1.msra.mxu0 0.0
    %1904 = vmatprep.subr.mxu0 0.0
    %1905 = vmatpush1.msra.mxu0 %v1867
    %1906 = vmatprep.subr.mxu0 0.0
    %1907 = vmatpush1.msra.mxu0 %v1865
    %1908 = vmatprep.subr.mxu0 0.0
    %1909 = vmatpush2.msra.mxu0 0.0
    %1910 = vmatprep.subr.mxu0 0.0
    %1911 = vmatpush2.msra.mxu0 0.0
    %1912 = vmatprep.subr.mxu0 0.0
    %1913 = vmatpush2.msra.mxu0 0.0
    %1914 = vmatprep.subr.mxu0 0.0
    %1915 = vmatpush2.msra.mxu0 0.0
    %1916 = vmatprep.subr.mxu0 0.0
    %1917 = vmatpush2.msra.mxu0 0.0
    %1918 = vmatprep.subr.mxu0 0.0
    %1919 = vmatpush2.msra.mxu0 0.0
    %1920 = vmatprep.subr.mxu0 0.0
    %1921 = vmatpush2.msra.mxu0 0.0
    %1922 = vmatprep.subr.mxu0 0.0
    %1923 = vmatpush2.msra.mxu0 0.0
    %1924 = vmatprep.subr.mxu0 0.0
    %1925 = vmatpush2.msra.mxu0 0.0
    %1926 = vmatprep.subr.mxu0 0.0
    %1927 = vmatpush2.msra.mxu0 0.0
    %1928 = vmatprep.subr.mxu0 0.0
    %1929 = vmatpush2.msra.mxu0 0.0
    %1930 = vmatprep.subr.mxu0 0.0
    %1931 = vmatpush2.msra.mxu0 0.0
    %1932 = vmatprep.subr.mxu0 0.0
    %1933 = vmatpush2.msra.mxu0 0.0
    %1934 = vmatprep.subr.mxu0 0.0
    %1935 = vmatpush2.msra.mxu0 0.0
    %1936 = vmatprep.subr.mxu0 0.0
    %1937 = vmatpush2.msra.mxu0 0.0
    %1938 = vmatprep.subr.mxu0 0.0
    %1939 = vmatpush2.msra.mxu0 0.0
    %1940 = vmatprep.mubr.f32.mxu0 0.0
    %1941 = vmatmul.mubr.f32.gmra.mxu0 %v1871
    %v1942 = vpop.f32.mrf.mxu0
    %v1943 = vadd.f32 0.0, %v1942
    %v1944 = vpop.f32.mrf.mxu0
    %1945 = vmatprep.mubr.f32.mxu0 0.0
    %1946 = vmatmul.mubr.f32.gmra.mxu0 %v1874
    %v1947 = vpop.f32.mrf.mxu0
    %v1948 = vadd.f32 0.0, %v1947
    %v1949 = vpop.f32.mrf.mxu0
    %1950 = vdwg.mxu0
    %v1951 = vld [vmem:[#allocation2 + $0xc8] sm:$0xff]
    %1952 = vrot.lane.b32.xlu0 %v1741, 104
    %v1953 = vpop.permute.xlu0 %1952
    %1954 = vrot.lane.b32.xlu0 %v1746, 104
    %v1955 = vpop.permute.xlu0 %1954
    %1956 = vrot.lane.b32.xlu0 %v1741, 96
    %v1957 = vpop.permute.xlu0 %1956
    %1958 = vrot.lane.b32.xlu0 %v1746, 96
    %v1959 = vpop.permute.xlu0 %1958
    %v1960 = vsel %vm58, %v1953, 0
    %v1962 = vsel %vm58, %v1955, 0
    %v1964 = vsel %vm58, %v1957, 0
    %v1966 = vsel %vm58, %v1959, 0
    %1968 = vmatprep.subr.mxu0 0.0
    %1969 = vmatpush1.xpose.msra.mxu0 0.0
    %1970 = vmatprep.subr.mxu0 0.0
    %1971 = vmatpush1.xpose.msra.mxu0 0.0
    %1972 = vmatprep.subr.mxu0 0.0
    %1973 = vmatpush1.xpose.msra.mxu0 0.0
    %1974 = vmatprep.subr.mxu0 0.0
    %1975 = vmatpush1.xpose.msra.mxu0 0.0
    %1976 = vmatprep.subr.mxu0 0.0
    %1977 = vmatpush1.xpose.msra.mxu0 0.0
    %1978 = vmatprep.subr.mxu0 0.0
    %1979 = vmatpush1.xpose.msra.mxu0 0.0
    %1980 = vmatprep.subr.mxu0 0.0
    %1981 = vmatpush1.xpose.msra.mxu0 0.0
    %1982 = vmatprep.subr.mxu0 0.0
    %1983 = vmatpush1.xpose.msra.mxu0 0.0
    %1984 = vmatprep.subr.mxu0 0.0
    %1985 = vmatpush1.xpose.msra.mxu0 0.0
    %1986 = vmatprep.subr.mxu0 0.0
    %1987 = vmatpush1.xpose.msra.mxu0 0.0
    %1988 = vmatprep.subr.mxu0 0.0
    %1989 = vmatpush1.xpose.msra.mxu0 0.0
    %1990 = vmatprep.subr.mxu0 0.0
    %1991 = vmatpush1.xpose.msra.mxu0 0.0
    %1992 = vmatprep.subr.mxu0 0.0
    %1993 = vmatpush1.xpose.msra.mxu0 0.0
    %1994 = vmatprep.subr.mxu0 0.0
    %1995 = vmatpush1.xpose.msra.mxu0 0.0
    %1996 = vmatprep.subr.mxu0 0.0
    %1997 = vmatpush1.xpose.msra.mxu0 %v1966
    %1998 = vmatprep.subr.mxu0 0.0
    %1999 = vmatpush1.xpose.msra.mxu0 %v1964
    %2000 = vmatprep.subr.mxu0 0.0
    %2001 = vmatpush2.xpose.msra.mxu0 0.0
    %2002 = vmatprep.subr.mxu0 0.0
    %2003 = vmatpush2.xpose.msra.mxu0 0.0
    %2004 = vmatprep.subr.mxu0 0.0
    %2005 = vmatpush2.xpose.msra.mxu0 0.0
    %2006 = vmatprep.subr.mxu0 0.0
    %2007 = vmatpush2.xpose.msra.mxu0 0.0
    %2008 = vmatprep.subr.mxu0 0.0
    %2009 = vmatpush2.xpose.msra.mxu0 0.0
    %2010 = vmatprep.subr.mxu0 0.0
    %2011 = vmatpush2.xpose.msra.mxu0 0.0
    %2012 = vmatprep.subr.mxu0 0.0
    %2013 = vmatpush2.xpose.msra.mxu0 0.0
    %2014 = vmatprep.subr.mxu0 0.0
    %2015 = vmatpush2.xpose.msra.mxu0 0.0
    %2016 = vmatprep.subr.mxu0 0.0
    %2017 = vmatpush2.xpose.msra.mxu0 0.0
    %2018 = vmatprep.subr.mxu0 0.0
    %2019 = vmatpush2.xpose.msra.mxu0 0.0
    %2020 = vmatprep.subr.mxu0 0.0
    %2021 = vmatpush2.xpose.msra.mxu0 0.0
    %2022 = vmatprep.subr.mxu0 0.0
    %2023 = vmatpush2.xpose.msra.mxu0 0.0
    %2024 = vmatprep.subr.mxu0 0.0
    %2025 = vmatpush2.xpose.msra.mxu0 0.0
    %2026 = vmatprep.subr.mxu0 0.0
    %2027 = vmatpush2.xpose.msra.mxu0 0.0
    %2028 = vmatprep.subr.mxu0 0.0
    %2029 = vmatpush2.xpose.msra.mxu0 0.0
    %2030 = vmatprep.subr.mxu0 0.0
    %2031 = vmatpush2.xpose.msra.mxu0 0.0
    %2032 = vmatprep.mubr.f32.mxu0 0.0
    %2033 = vmatmul.mubr.f32.gmra.mxu0 %v1960
    %v2034 = vpop.f32.mrf.mxu0
    %v2035 = vadd.f32 0.0, %v2034
    %v2036 = vpop.f32.mrf.mxu0
    %2037 = vmatprep.mubr.f32.mxu0 0.0
    %2038 = vmatmul.mubr.f32.gmra.mxu0 %v1962
    %v2039 = vpop.f32.mrf.mxu0
    %v2040 = vadd.f32 0.0, %v2039
    %v2041 = vpop.f32.mrf.mxu0
    %2042 = vdwg.mxu0
    %v2043 = vmul.f32 %v2035, 0.35355338
    %v2044 = vmul.f32 %v2040, 0.35355338
    %v2045 = vadd.f32 %v2043, %v140
    %v2046 = vadd.f32 %v2044, %v141
    %v2047 = vsel %vm326, %v2045, -inf
    %2048 = vmax.xlane.f32.xlu0 %v2047
    %v2049 = vpop.xlane.xlu0 %2048
    %v2050 = vsel %vm326, %v2046, -inf
    %2051 = vmax.xlane.f32.xlu0 %v2050
    %v2052 = vpop.xlane.xlu0 %2051
    %v2053 = vsub.f32 %v2045, %v2049
    %v2054 = vsub.f32 %v2046, %v2052
    %v2055 = vmul.f32 %v2053, 1.442695
    %v2056 = vpow.pop %v2055
    %v2057 = vmul.f32 %v2054, 1.442695
    %v2058 = vpow.pop %v2057
    %v2059 = vsel %vm326, %v2056, 0.0
    %2060 = vadd.xlane.f32.xlu0 %v2059
    %v2061 = vpop.xlane.xlu0 %2060
    %v2062 = vsel %vm326, %v2058, 0.0
    %2063 = vadd.xlane.f32.xlu0 %v2062
    %v2064 = vpop.xlane.xlu0 %2063
    %v2065 = vrcp.pop %v2061
    %v2066 = vrcp.pop %v2064
    %v2067 = vmul.f32 %v2056, %v2065
    %v2068 = vmul.f32 %v2058, %v2066
    %2069 = vrot.lane.b32.xlu0 %v1741, 88
    %v2070 = vpop.permute.xlu0 %2069
    %2071 = vrot.lane.b32.xlu0 %v1746, 88
    %v2072 = vpop.permute.xlu0 %2071
    %v2076 = vsel %vm326, %v2067, 0
    %v2079 = vsel %vm326, %v2068, 0
    %2081 = vmatprep.subr.mxu0 0.0
    %2082 = vmatpush1.msra.mxu0 0.0
    %2083 = vmatprep.subr.mxu0 0.0
    %2084 = vmatpush1.msra.mxu0 0.0
    %2085 = vmatprep.subr.mxu0 0.0
    %2086 = vmatpush1.msra.mxu0 0.0
    %2087 = vmatprep.subr.mxu0 0.0
    %2088 = vmatpush1.msra.mxu0 0.0
    %2089 = vmatprep.subr.mxu0 0.0
    %2090 = vmatpush1.msra.mxu0 0.0
    %2091 = vmatprep.subr.mxu0 0.0
    %2092 = vmatpush1.msra.mxu0 0.0
    %2093 = vmatprep.subr.mxu0 0.0
    %2094 = vmatpush1.msra.mxu0 0.0
    %2095 = vmatprep.subr.mxu0 0.0
    %2096 = vmatpush1.msra.mxu0 0.0
    %2097 = vmatprep.subr.mxu0 0.0
    %2098 = vmatpush1.msra.mxu0 0.0
    %2099 = vmatprep.subr.mxu0 0.0
    %2100 = vmatpush1.msra.mxu0 0.0
    %2101 = vmatprep.subr.mxu0 0.0
    %2102 = vmatpush1.msra.mxu0 0.0
    %2103 = vmatprep.subr.mxu0 0.0
    %2104 = vmatpush1.msra.mxu0 0.0
    %2105 = vmatprep.subr.mxu0 0.0
    %2106 = vmatpush1.msra.mxu0 0.0
    %2107 = vmatprep.subr.mxu0 0.0
    %2108 = vmatpush1.msra.mxu0 0.0
    %2109 = vmatprep.subr.mxu0 0.0
    %2110 = vmatpush1.msra.mxu0 %v2072
    %2111 = vmatprep.subr.mxu0 0.0
    %2112 = vmatpush1.msra.mxu0 %v2070
    %2113 = vmatprep.subr.mxu0 0.0
    %2114 = vmatpush2.msra.mxu0 0.0
    %2115 = vmatprep.subr.mxu0 0.0
    %2116 = vmatpush2.msra.mxu0 0.0
    %2117 = vmatprep.subr.mxu0 0.0
    %2118 = vmatpush2.msra.mxu0 0.0
    %2119 = vmatprep.subr.mxu0 0.0
    %2120 = vmatpush2.msra.mxu0 0.0
    %2121 = vmatprep.subr.mxu0 0.0
    %2122 = vmatpush2.msra.mxu0 0.0
    %2123 = vmatprep.subr.mxu0 0.0
    %2124 = vmatpush2.msra.mxu0 0.0
    %2125 = vmatprep.subr.mxu0 0.0
    %2126 = vmatpush2.msra.mxu0 0.0
    %2127 = vmatprep.subr.mxu0 0.0
    %2128 = vmatpush2.msra.mxu0 0.0
    %2129 = vmatprep.subr.mxu0 0.0
    %2130 = vmatpush2.msra.mxu0 0.0
    %2131 = vmatprep.subr.mxu0 0.0
    %2132 = vmatpush2.msra.mxu0 0.0
    %2133 = vmatprep.subr.mxu0 0.0
    %2134 = vmatpush2.msra.mxu0 0.0
    %2135 = vmatprep.subr.mxu0 0.0
    %2136 = vmatpush2.msra.mxu0 0.0
    %2137 = vmatprep.subr.mxu0 0.0
    %2138 = vmatpush2.msra.mxu0 0.0
    %2139 = vmatprep.subr.mxu0 0.0
    %2140 = vmatpush2.msra.mxu0 0.0
    %2141 = vmatprep.subr.mxu0 0.0
    %2142 = vmatpush2.msra.mxu0 0.0
    %2143 = vmatprep.subr.mxu0 0.0
    %2144 = vmatpush2.msra.mxu0 0.0
    %2145 = vmatprep.mubr.f32.mxu0 0.0
    %2146 = vmatmul.mubr.f32.gmra.mxu0 %v2076
    %v2147 = vpop.f32.mrf.mxu0
    %v2148 = vadd.f32 0.0, %v2147
    %v2149 = vpop.f32.mrf.mxu0
    %2150 = vmatprep.mubr.f32.mxu0 0.0
    %2151 = vmatmul.mubr.f32.gmra.mxu0 %v2079
    %v2152 = vpop.f32.mrf.mxu0
    %v2153 = vadd.f32 0.0, %v2152
    %v2154 = vpop.f32.mrf.mxu0
    %2155 = vdwg.mxu0
    %v2156 = vld [vmem:[#allocation2 + $0xd0] sm:$0xff]
    %v2158 = vsel %vm58, %v2148, 0
    %v2161 = vsel %vm58, %v2153, 0
    %2163 = vmatprep.subr.mxu0 0.0
    %2164 = vmatpush1.msra.mxu0 0.0
    %2165 = vmatprep.subr.mxu0 0.0
    %2166 = vmatpush1.msra.mxu0 0.0
    %2167 = vmatprep.subr.mxu0 0.0
    %2168 = vmatpush1.msra.mxu0 0.0
    %2169 = vmatprep.subr.mxu0 0.0
    %2170 = vmatpush1.msra.mxu0 0.0
    %2171 = vmatprep.subr.mxu0 0.0
    %2172 = vmatpush1.msra.mxu0 0.0
    %2173 = vmatprep.subr.mxu0 0.0
    %2174 = vmatpush1.msra.mxu0 0.0
    %2175 = vmatprep.subr.mxu0 0.0
    %2176 = vmatpush1.msra.mxu0 0.0
    %2177 = vmatprep.subr.mxu0 0.0
    %2178 = vmatpush1.msra.mxu0 0.0
    %2179 = vmatprep.subr.mxu0 0.0
    %2180 = vmatpush1.msra.mxu0 0.0
    %2181 = vmatprep.subr.mxu0 0.0
    %2182 = vmatpush1.msra.mxu0 0.0
    %2183 = vmatprep.subr.mxu0 0.0
    %2184 = vmatpush1.msra.mxu0 0.0
    %2185 = vmatprep.subr.mxu0 0.0
    %2186 = vmatpush1.msra.mxu0 0.0
    %2187 = vmatprep.subr.mxu0 0.0
    %2188 = vmatpush1.msra.mxu0 0.0
    %2189 = vmatprep.subr.mxu0 0.0
    %2190 = vmatpush1.msra.mxu0 0.0
    %2191 = vmatprep.subr.mxu0 0.0
    %2192 = vmatpush1.msra.mxu0 0.0
    %2193 = vmatprep.subr.mxu0 0.0
    %2194 = vmatpush1.msra.mxu0 %v2156
    %2195 = vmatprep.subr.mxu0 0.0
    %2196 = vmatpush2.msra.mxu0 0.0
    %2197 = vmatprep.subr.mxu0 0.0
    %2198 = vmatpush2.msra.mxu0 0.0
    %2199 = vmatprep.subr.mxu0 0.0
    %2200 = vmatpush2.msra.mxu0 0.0
    %2201 = vmatprep.subr.mxu0 0.0
    %2202 = vmatpush2.msra.mxu0 0.0
    %2203 = vmatprep.subr.mxu0 0.0
    %2204 = vmatpush2.msra.mxu0 0.0
    %2205 = vmatprep.subr.mxu0 0.0
    %2206 = vmatpush2.msra.mxu0 0.0
    %2207 = vmatprep.subr.mxu0 0.0
    %2208 = vmatpush2.msra.mxu0 0.0
    %2209 = vmatprep.subr.mxu0 0.0
    %2210 = vmatpush2.msra.mxu0 0.0
    %2211 = vmatprep.subr.mxu0 0.0
    %2212 = vmatpush2.msra.mxu0 0.0
    %2213 = vmatprep.subr.mxu0 0.0
    %2214 = vmatpush2.msra.mxu0 0.0
    %2215 = vmatprep.subr.mxu0 0.0
    %2216 = vmatpush2.msra.mxu0 0.0
    %2217 = vmatprep.subr.mxu0 0.0
    %2218 = vmatpush2.msra.mxu0 0.0
    %2219 = vmatprep.subr.mxu0 0.0
    %2220 = vmatpush2.msra.mxu0 0.0
    %2221 = vmatprep.subr.mxu0 0.0
    %2222 = vmatpush2.msra.mxu0 0.0
    %2223 = vmatprep.subr.mxu0 0.0
    %2224 = vmatpush2.msra.mxu0 0.0
    %2225 = vmatprep.subr.mxu0 0.0
    %2226 = vmatpush2.msra.mxu0 0.0
    %2227 = vmatprep.mubr.f32.mxu0 0.0
    %2228 = vmatmul.mubr.f32.gmra.mxu0 %v2158
    %v2229 = vpop.f32.mrf.mxu0
    %v2230 = vadd.f32 0.0, %v2229
    %v2231 = vpop.f32.mrf.mxu0
    %2232 = vmatprep.mubr.f32.mxu0 0.0
    %2233 = vmatmul.mubr.f32.gmra.mxu0 %v2161
    %v2234 = vpop.f32.mrf.mxu0
    %v2235 = vadd.f32 0.0, %v2234
    %v2236 = vpop.f32.mrf.mxu0
    %2237 = vdwg.mxu0
    %v2239 = vsel %vm58, %v1943, 0
    %v2242 = vsel %vm58, %v1948, 0
    %2244 = vmatprep.subr.mxu0 0.0
    %2245 = vmatpush1.msra.mxu0 0.0
    %2246 = vmatprep.subr.mxu0 0.0
    %2247 = vmatpush1.msra.mxu0 0.0
    %2248 = vmatprep.subr.mxu0 0.0
    %2249 = vmatpush1.msra.mxu0 0.0
    %2250 = vmatprep.subr.mxu0 0.0
    %2251 = vmatpush1.msra.mxu0 0.0
    %2252 = vmatprep.subr.mxu0 0.0
    %2253 = vmatpush1.msra.mxu0 0.0
    %2254 = vmatprep.subr.mxu0 0.0
    %2255 = vmatpush1.msra.mxu0 0.0
    %2256 = vmatprep.subr.mxu0 0.0
    %2257 = vmatpush1.msra.mxu0 0.0
    %2258 = vmatprep.subr.mxu0 0.0
    %2259 = vmatpush1.msra.mxu0 0.0
    %2260 = vmatprep.subr.mxu0 0.0
    %2261 = vmatpush1.msra.mxu0 0.0
    %2262 = vmatprep.subr.mxu0 0.0
    %2263 = vmatpush1.msra.mxu0 0.0
    %2264 = vmatprep.subr.mxu0 0.0
    %2265 = vmatpush1.msra.mxu0 0.0
    %2266 = vmatprep.subr.mxu0 0.0
    %2267 = vmatpush1.msra.mxu0 0.0
    %2268 = vmatprep.subr.mxu0 0.0
    %2269 = vmatpush1.msra.mxu0 0.0
    %2270 = vmatprep.subr.mxu0 0.0
    %2271 = vmatpush1.msra.mxu0 0.0
    %2272 = vmatprep.subr.mxu0 0.0
    %2273 = vmatpush1.msra.mxu0 0.0
    %2274 = vmatprep.subr.mxu0 0.0
    %2275 = vmatpush1.msra.mxu0 %v1951
    %2276 = vmatprep.subr.mxu0 0.0
    %2277 = vmatpush2.msra.mxu0 0.0
    %2278 = vmatprep.subr.mxu0 0.0
    %2279 = vmatpush2.msra.mxu0 0.0
    %2280 = vmatprep.subr.mxu0 0.0
    %2281 = vmatpush2.msra.mxu0 0.0
    %2282 = vmatprep.subr.mxu0 0.0
    %2283 = vmatpush2.msra.mxu0 0.0
    %2284 = vmatprep.subr.mxu0 0.0
    %2285 = vmatpush2.msra.mxu0 0.0
    %2286 = vmatprep.subr.mxu0 0.0
    %2287 = vmatpush2.msra.mxu0 0.0
    %2288 = vmatprep.subr.mxu0 0.0
    %2289 = vmatpush2.msra.mxu0 0.0
    %2290 = vmatprep.subr.mxu0 0.0
    %2291 = vmatpush2.msra.mxu0 0.0
    %2292 = vmatprep.subr.mxu0 0.0
    %2293 = vmatpush2.msra.mxu0 0.0
    %2294 = vmatprep.subr.mxu0 0.0
    %2295 = vmatpush2.msra.mxu0 0.0
    %2296 = vmatprep.subr.mxu0 0.0
    %2297 = vmatpush2.msra.mxu0 0.0
    %2298 = vmatprep.subr.mxu0 0.0
    %2299 = vmatpush2.msra.mxu0 0.0
    %2300 = vmatprep.subr.mxu0 0.0
    %2301 = vmatpush2.msra.mxu0 0.0
    %2302 = vmatprep.subr.mxu0 0.0
    %2303 = vmatpush2.msra.mxu0 0.0
    %2304 = vmatprep.subr.mxu0 0.0
    %2305 = vmatpush2.msra.mxu0 0.0
    %2306 = vmatprep.subr.mxu0 0.0
    %2307 = vmatpush2.msra.mxu0 0.0
    %2308 = vmatprep.mubr.f32.mxu0 0.0
    %2309 = vmatmul.mubr.f32.gmra.mxu0 %v2239
    %v2310 = vpop.f32.mrf.mxu0
    %v2311 = vadd.f32 %v2230, %v2310
    %v2312 = vpop.f32.mrf.mxu0
    %2313 = vmatprep.mubr.f32.mxu0 0.0
    %2314 = vmatmul.mubr.f32.gmra.mxu0 %v2242
    %v2315 = vpop.f32.mrf.mxu0
    %v2316 = vadd.f32 %v2235, %v2315
    %v2317 = vpop.f32.mrf.mxu0
    %2318 = vdwg.mxu0
    %2319 = vrot.lane.b32.xlu0 %v1741, 80
    %v2320 = vpop.permute.xlu0 %2319
    %2321 = vrot.lane.b32.xlu0 %v1746, 80
    %v2322 = vpop.permute.xlu0 %2321
    %2323 = vrot.lane.b32.xlu0 %v1741, 72
    %v2324 = vpop.permute.xlu0 %2323
    %2325 = vrot.lane.b32.xlu0 %v1746, 72
    %v2326 = vpop.permute.xlu0 %2325
    %v2327 = vsel %vm58, %v2320, 0
    %v2329 = vsel %vm58, %v2322, 0
    %v2331 = vsel %vm58, %v2324, 0
    %v2333 = vsel %vm58, %v2326, 0
    %2335 = vmatprep.subr.mxu0 0.0
    %2336 = vmatpush1.xpose.msra.mxu0 0.0
    %2337 = vmatprep.subr.mxu0 0.0
    %2338 = vmatpush1.xpose.msra.mxu0 0.0
    %2339 = vmatprep.subr.mxu0 0.0
    %2340 = vmatpush1.xpose.msra.mxu0 0.0
    %2341 = vmatprep.subr.mxu0 0.0
    %2342 = vmatpush1.xpose.msra.mxu0 0.0
    %2343 = vmatprep.subr.mxu0 0.0
    %2344 = vmatpush1.xpose.msra.mxu0 0.0
    %2345 = vmatprep.subr.mxu0 0.0
    %2346 = vmatpush1.xpose.msra.mxu0 0.0
    %2347 = vmatprep.subr.mxu0 0.0
    %2348 = vmatpush1.xpose.msra.mxu0 0.0
    %2349 = vmatprep.subr.mxu0 0.0
    %2350 = vmatpush1.xpose.msra.mxu0 0.0
    %2351 = vmatprep.subr.mxu0 0.0
    %2352 = vmatpush1.xpose.msra.mxu0 0.0
    %2353 = vmatprep.subr.mxu0 0.0
    %2354 = vmatpush1.xpose.msra.mxu0 0.0
    %2355 = vmatprep.subr.mxu0 0.0
    %2356 = vmatpush1.xpose.msra.mxu0 0.0
    %2357 = vmatprep.subr.mxu0 0.0
    %2358 = vmatpush1.xpose.msra.mxu0 0.0
    %2359 = vmatprep.subr.mxu0 0.0
    %2360 = vmatpush1.xpose.msra.mxu0 0.0
    %2361 = vmatprep.subr.mxu0 0.0
    %2362 = vmatpush1.xpose.msra.mxu0 0.0
    %2363 = vmatprep.subr.mxu0 0.0
    %2364 = vmatpush1.xpose.msra.mxu0 %v2333
    %2365 = vmatprep.subr.mxu0 0.0
    %2366 = vmatpush1.xpose.msra.mxu0 %v2331
    %2367 = vmatprep.subr.mxu0 0.0
    %2368 = vmatpush2.xpose.msra.mxu0 0.0
    %2369 = vmatprep.subr.mxu0 0.0
    %2370 = vmatpush2.xpose.msra.mxu0 0.0
    %2371 = vmatprep.subr.mxu0 0.0
    %2372 = vmatpush2.xpose.msra.mxu0 0.0
    %2373 = vmatprep.subr.mxu0 0.0
    %2374 = vmatpush2.xpose.msra.mxu0 0.0
    %2375 = vmatprep.subr.mxu0 0.0
    %2376 = vmatpush2.xpose.msra.mxu0 0.0
    %2377 = vmatprep.subr.mxu0 0.0
    %2378 = vmatpush2.xpose.msra.mxu0 0.0
    %2379 = vmatprep.subr.mxu0 0.0
    %2380 = vmatpush2.xpose.msra.mxu0 0.0
    %2381 = vmatprep.subr.mxu0 0.0
    %2382 = vmatpush2.xpose.msra.mxu0 0.0
    %2383 = vmatprep.subr.mxu0 0.0
    %2384 = vmatpush2.xpose.msra.mxu0 0.0
    %2385 = vmatprep.subr.mxu0 0.0
    %2386 = vmatpush2.xpose.msra.mxu0 0.0
    %2387 = vmatprep.subr.mxu0 0.0
    %2388 = vmatpush2.xpose.msra.mxu0 0.0
    %2389 = vmatprep.subr.mxu0 0.0
    %2390 = vmatpush2.xpose.msra.mxu0 0.0
    %2391 = vmatprep.subr.mxu0 0.0
    %2392 = vmatpush2.xpose.msra.mxu0 0.0
    %2393 = vmatprep.subr.mxu0 0.0
    %2394 = vmatpush2.xpose.msra.mxu0 0.0
    %2395 = vmatprep.subr.mxu0 0.0
    %2396 = vmatpush2.xpose.msra.mxu0 0.0
    %2397 = vmatprep.subr.mxu0 0.0
    %2398 = vmatpush2.xpose.msra.mxu0 0.0
    %2399 = vmatprep.mubr.f32.mxu0 0.0
    %2400 = vmatmul.mubr.f32.gmra.mxu0 %v2327
    %v2401 = vpop.f32.mrf.mxu0
    %v2402 = vadd.f32 0.0, %v2401
    %v2403 = vpop.f32.mrf.mxu0
    %2404 = vmatprep.mubr.f32.mxu0 0.0
    %2405 = vmatmul.mubr.f32.gmra.mxu0 %v2329
    %v2406 = vpop.f32.mrf.mxu0
    %v2407 = vadd.f32 0.0, %v2406
    %v2408 = vpop.f32.mrf.mxu0
    %2409 = vdwg.mxu0
    %v2410 = vmul.f32 %v2402, 0.35355338
    %v2411 = vmul.f32 %v2407, 0.35355338
    %v2412 = vadd.f32 %v2410, %v140
    %v2413 = vadd.f32 %v2411, %v141
    %v2414 = vsel %vm326, %v2412, -inf
    %2415 = vmax.xlane.f32.xlu0 %v2414
    %v2416 = vpop.xlane.xlu0 %2415
    %v2417 = vsel %vm326, %v2413, -inf
    %2418 = vmax.xlane.f32.xlu0 %v2417
    %v2419 = vpop.xlane.xlu0 %2418
    %v2420 = vsub.f32 %v2412, %v2416
    %v2421 = vsub.f32 %v2413, %v2419
    %v2422 = vmul.f32 %v2420, 1.442695
    %v2423 = vpow.pop %v2422
    %v2424 = vmul.f32 %v2421, 1.442695
    %v2425 = vpow.pop %v2424
    %v2426 = vsel %vm326, %v2423, 0.0
    %2427 = vadd.xlane.f32.xlu0 %v2426
    %v2428 = vpop.xlane.xlu0 %2427
    %v2429 = vsel %vm326, %v2425, 0.0
    %2430 = vadd.xlane.f32.xlu0 %v2429
    %v2431 = vpop.xlane.xlu0 %2430
    %v2432 = vrcp.pop %v2428
    %v2433 = vrcp.pop %v2431
    %v2434 = vmul.f32 %v2423, %v2432
    %v2435 = vmul.f32 %v2425, %v2433
    %2436 = vrot.lane.b32.xlu0 %v1741, 64
    %v2437 = vpop.permute.xlu0 %2436
    %2438 = vrot.lane.b32.xlu0 %v1746, 64
    %v2439 = vpop.permute.xlu0 %2438
    %v2443 = vsel %vm326, %v2434, 0
    %v2446 = vsel %vm326, %v2435, 0
    %2448 = vmatprep.subr.mxu0 0.0
    %2449 = vmatpush1.msra.mxu0 0.0
    %2450 = vmatprep.subr.mxu0 0.0
    %2451 = vmatpush1.msra.mxu0 0.0
    %2452 = vmatprep.subr.mxu0 0.0
    %2453 = vmatpush1.msra.mxu0 0.0
    %2454 = vmatprep.subr.mxu0 0.0
    %2455 = vmatpush1.msra.mxu0 0.0
    %2456 = vmatprep.subr.mxu0 0.0
    %2457 = vmatpush1.msra.mxu0 0.0
    %2458 = vmatprep.subr.mxu0 0.0
    %2459 = vmatpush1.msra.mxu0 0.0
    %2460 = vmatprep.subr.mxu0 0.0
    %2461 = vmatpush1.msra.mxu0 0.0
    %2462 = vmatprep.subr.mxu0 0.0
    %2463 = vmatpush1.msra.mxu0 0.0
    %2464 = vmatprep.subr.mxu0 0.0
    %2465 = vmatpush1.msra.mxu0 0.0
    %2466 = vmatprep.subr.mxu0 0.0
    %2467 = vmatpush1.msra.mxu0 0.0
    %2468 = vmatprep.subr.mxu0 0.0
    %2469 = vmatpush1.msra.mxu0 0.0
    %2470 = vmatprep.subr.mxu0 0.0
    %2471 = vmatpush1.msra.mxu0 0.0
    %2472 = vmatprep.subr.mxu0 0.0
    %2473 = vmatpush1.msra.mxu0 0.0
    %2474 = vmatprep.subr.mxu0 0.0
    %2475 = vmatpush1.msra.mxu0 0.0
    %2476 = vmatprep.subr.mxu0 0.0
    %2477 = vmatpush1.msra.mxu0 %v2439
    %2478 = vmatprep.subr.mxu0 0.0
    %2479 = vmatpush1.msra.mxu0 %v2437
    %2480 = vmatprep.subr.mxu0 0.0
    %2481 = vmatpush2.msra.mxu0 0.0
    %2482 = vmatprep.subr.mxu0 0.0
    %2483 = vmatpush2.msra.mxu0 0.0
    %2484 = vmatprep.subr.mxu0 0.0
    %2485 = vmatpush2.msra.mxu0 0.0
    %2486 = vmatprep.subr.mxu0 0.0
    %2487 = vmatpush2.msra.mxu0 0.0
    %2488 = vmatprep.subr.mxu0 0.0
    %2489 = vmatpush2.msra.mxu0 0.0
    %2490 = vmatprep.subr.mxu0 0.0
    %2491 = vmatpush2.msra.mxu0 0.0
    %2492 = vmatprep.subr.mxu0 0.0
    %2493 = vmatpush2.msra.mxu0 0.0
    %2494 = vmatprep.subr.mxu0 0.0
    %2495 = vmatpush2.msra.mxu0 0.0
    %2496 = vmatprep.subr.mxu0 0.0
    %2497 = vmatpush2.msra.mxu0 0.0
    %2498 = vmatprep.subr.mxu0 0.0
    %2499 = vmatpush2.msra.mxu0 0.0
    %2500 = vmatprep.subr.mxu0 0.0
    %2501 = vmatpush2.msra.mxu0 0.0
    %2502 = vmatprep.subr.mxu0 0.0
    %2503 = vmatpush2.msra.mxu0 0.0
    %2504 = vmatprep.subr.mxu0 0.0
    %2505 = vmatpush2.msra.mxu0 0.0
    %2506 = vmatprep.subr.mxu0 0.0
    %2507 = vmatpush2.msra.mxu0 0.0
    %2508 = vmatprep.subr.mxu0 0.0
    %2509 = vmatpush2.msra.mxu0 0.0
    %2510 = vmatprep.subr.mxu0 0.0
    %2511 = vmatpush2.msra.mxu0 0.0
    %2512 = vmatprep.mubr.f32.mxu0 0.0
    %2513 = vmatmul.mubr.f32.gmra.mxu0 %v2443
    %v2514 = vpop.f32.mrf.mxu0
    %v2515 = vadd.f32 0.0, %v2514
    %v2516 = vpop.f32.mrf.mxu0
    %2517 = vmatprep.mubr.f32.mxu0 0.0
    %2518 = vmatmul.mubr.f32.gmra.mxu0 %v2446
    %v2519 = vpop.f32.mrf.mxu0
    %v2520 = vadd.f32 0.0, %v2519
    %v2521 = vpop.f32.mrf.mxu0
    %2522 = vdwg.mxu0
    %v2523 = vld [vmem:[#allocation2 + $0xd8] sm:$0xff]
    %v2525 = vsel %vm58, %v2515, 0
    %v2528 = vsel %vm58, %v2520, 0
    %2530 = vmatprep.subr.mxu0 0.0
    %2531 = vmatpush1.msra.mxu0 0.0
    %2532 = vmatprep.subr.mxu0 0.0
    %2533 = vmatpush1.msra.mxu0 0.0
    %2534 = vmatprep.subr.mxu0 0.0
    %2535 = vmatpush1.msra.mxu0 0.0
    %2536 = vmatprep.subr.mxu0 0.0
    %2537 = vmatpush1.msra.mxu0 0.0
    %2538 = vmatprep.subr.mxu0 0.0
    %2539 = vmatpush1.msra.mxu0 0.0
    %2540 = vmatprep.subr.mxu0 0.0
    %2541 = vmatpush1.msra.mxu0 0.0
    %2542 = vmatprep.subr.mxu0 0.0
    %2543 = vmatpush1.msra.mxu0 0.0
    %2544 = vmatprep.subr.mxu0 0.0
    %2545 = vmatpush1.msra.mxu0 0.0
    %2546 = vmatprep.subr.mxu0 0.0
    %2547 = vmatpush1.msra.mxu0 0.0
    %2548 = vmatprep.subr.mxu0 0.0
    %2549 = vmatpush1.msra.mxu0 0.0
    %2550 = vmatprep.subr.mxu0 0.0
    %2551 = vmatpush1.msra.mxu0 0.0
    %2552 = vmatprep.subr.mxu0 0.0
    %2553 = vmatpush1.msra.mxu0 0.0
    %2554 = vmatprep.subr.mxu0 0.0
    %2555 = vmatpush1.msra.mxu0 0.0
    %2556 = vmatprep.subr.mxu0 0.0
    %2557 = vmatpush1.msra.mxu0 0.0
    %2558 = vmatprep.subr.mxu0 0.0
    %2559 = vmatpush1.msra.mxu0 0.0
    %2560 = vmatprep.subr.mxu0 0.0
    %2561 = vmatpush1.msra.mxu0 %v2523
    %2562 = vmatprep.subr.mxu0 0.0
    %2563 = vmatpush2.msra.mxu0 0.0
    %2564 = vmatprep.subr.mxu0 0.0
    %2565 = vmatpush2.msra.mxu0 0.0
    %2566 = vmatprep.subr.mxu0 0.0
    %2567 = vmatpush2.msra.mxu0 0.0
    %2568 = vmatprep.subr.mxu0 0.0
    %2569 = vmatpush2.msra.mxu0 0.0
    %2570 = vmatprep.subr.mxu0 0.0
    %2571 = vmatpush2.msra.mxu0 0.0
    %2572 = vmatprep.subr.mxu0 0.0
    %2573 = vmatpush2.msra.mxu0 0.0
    %2574 = vmatprep.subr.mxu0 0.0
    %2575 = vmatpush2.msra.mxu0 0.0
    %2576 = vmatprep.subr.mxu0 0.0
    %2577 = vmatpush2.msra.mxu0 0.0
    %2578 = vmatprep.subr.mxu0 0.0
    %2579 = vmatpush2.msra.mxu0 0.0
    %2580 = vmatprep.subr.mxu0 0.0
    %2581 = vmatpush2.msra.mxu0 0.0
    %2582 = vmatprep.subr.mxu0 0.0
    %2583 = vmatpush2.msra.mxu0 0.0
    %2584 = vmatprep.subr.mxu0 0.0
    %2585 = vmatpush2.msra.mxu0 0.0
    %2586 = vmatprep.subr.mxu0 0.0
    %2587 = vmatpush2.msra.mxu0 0.0
    %2588 = vmatprep.subr.mxu0 0.0
    %2589 = vmatpush2.msra.mxu0 0.0
    %2590 = vmatprep.subr.mxu0 0.0
    %2591 = vmatpush2.msra.mxu0 0.0
    %2592 = vmatprep.subr.mxu0 0.0
    %2593 = vmatpush2.msra.mxu0 0.0
    %2594 = vmatprep.mubr.f32.mxu0 0.0
    %2595 = vmatmul.mubr.f32.gmra.mxu0 %v2525
    %v2596 = vpop.f32.mrf.mxu0
    %v2597 = vadd.f32 0.0, %v2596
    %v2598 = vpop.f32.mrf.mxu0
    %2599 = vmatprep.mubr.f32.mxu0 0.0
    %2600 = vmatmul.mubr.f32.gmra.mxu0 %v2528
    %v2601 = vpop.f32.mrf.mxu0
    %v2602 = vadd.f32 0.0, %v2601
    %v2603 = vpop.f32.mrf.mxu0
    %2604 = vdwg.mxu0
    %v2605 = vadd.f32 %v2311, %v2597
    %v2606 = vadd.f32 %v2316, %v2602
    %2607 = vrot.lane.b32.xlu0 %v1741, 56
    %v2608 = vpop.permute.xlu0 %2607
    %2609 = vrot.lane.b32.xlu0 %v1746, 56
    %v2610 = vpop.permute.xlu0 %2609
    %2611 = vrot.lane.b32.xlu0 %v1741, 48
    %v2612 = vpop.permute.xlu0 %2611
    %2613 = vrot.lane.b32.xlu0 %v1746, 48
    %v2614 = vpop.permute.xlu0 %2613
    %v2615 = vsel %vm58, %v2608, 0
    %v2617 = vsel %vm58, %v2610, 0
    %v2619 = vsel %vm58, %v2612, 0
    %v2621 = vsel %vm58, %v2614, 0
    %2623 = vmatprep.subr.mxu0 0.0
    %2624 = vmatpush1.xpose.msra.mxu0 0.0
    %2625 = vmatprep.subr.mxu0 0.0
    %2626 = vmatpush1.xpose.msra.mxu0 0.0
    %2627 = vmatprep.subr.mxu0 0.0
    %2628 = vmatpush1.xpose.msra.mxu0 0.0
    %2629 = vmatprep.subr.mxu0 0.0
    %2630 = vmatpush1.xpose.msra.mxu0 0.0
    %2631 = vmatprep.subr.mxu0 0.0
    %2632 = vmatpush1.xpose.msra.mxu0 0.0
    %2633 = vmatprep.subr.mxu0 0.0
    %2634 = vmatpush1.xpose.msra.mxu0 0.0
    %2635 = vmatprep.subr.mxu0 0.0
    %2636 = vmatpush1.xpose.msra.mxu0 0.0
    %2637 = vmatprep.subr.mxu0 0.0
    %2638 = vmatpush1.xpose.msra.mxu0 0.0
    %2639 = vmatprep.subr.mxu0 0.0
    %2640 = vmatpush1.xpose.msra.mxu0 0.0
    %2641 = vmatprep.subr.mxu0 0.0
    %2642 = vmatpush1.xpose.msra.mxu0 0.0
    %2643 = vmatprep.subr.mxu0 0.0
    %2644 = vmatpush1.xpose.msra.mxu0 0.0
    %2645 = vmatprep.subr.mxu0 0.0
    %2646 = vmatpush1.xpose.msra.mxu0 0.0
    %2647 = vmatprep.subr.mxu0 0.0
    %2648 = vmatpush1.xpose.msra.mxu0 0.0
    %2649 = vmatprep.subr.mxu0 0.0
    %2650 = vmatpush1.xpose.msra.mxu0 0.0
    %2651 = vmatprep.subr.mxu0 0.0
    %2652 = vmatpush1.xpose.msra.mxu0 %v2621
    %2653 = vmatprep.subr.mxu0 0.0
    %2654 = vmatpush1.xpose.msra.mxu0 %v2619
    %2655 = vmatprep.subr.mxu0 0.0
    %2656 = vmatpush2.xpose.msra.mxu0 0.0
    %2657 = vmatprep.subr.mxu0 0.0
    %2658 = vmatpush2.xpose.msra.mxu0 0.0
    %2659 = vmatprep.subr.mxu0 0.0
    %2660 = vmatpush2.xpose.msra.mxu0 0.0
    %2661 = vmatprep.subr.mxu0 0.0
    %2662 = vmatpush2.xpose.msra.mxu0 0.0
    %2663 = vmatprep.subr.mxu0 0.0
    %2664 = vmatpush2.xpose.msra.mxu0 0.0
    %2665 = vmatprep.subr.mxu0 0.0
    %2666 = vmatpush2.xpose.msra.mxu0 0.0
    %2667 = vmatprep.subr.mxu0 0.0
    %2668 = vmatpush2.xpose.msra.mxu0 0.0
    %2669 = vmatprep.subr.mxu0 0.0
    %2670 = vmatpush2.xpose.msra.mxu0 0.0
    %2671 = vmatprep.subr.mxu0 0.0
    %2672 = vmatpush2.xpose.msra.mxu0 0.0
    %2673 = vmatprep.subr.mxu0 0.0
    %2674 = vmatpush2.xpose.msra.mxu0 0.0
    %2675 = vmatprep.subr.mxu0 0.0
    %2676 = vmatpush2.xpose.msra.mxu0 0.0
    %2677 = vmatprep.subr.mxu0 0.0
    %2678 = vmatpush2.xpose.msra.mxu0 0.0
    %2679 = vmatprep.subr.mxu0 0.0
    %2680 = vmatpush2.xpose.msra.mxu0 0.0
    %2681 = vmatprep.subr.mxu0 0.0
    %2682 = vmatpush2.xpose.msra.mxu0 0.0
    %2683 = vmatprep.subr.mxu0 0.0
    %2684 = vmatpush2.xpose.msra.mxu0 0.0
    %2685 = vmatprep.subr.mxu0 0.0
    %2686 = vmatpush2.xpose.msra.mxu0 0.0
    %2687 = vmatprep.mubr.f32.mxu0 0.0
    %2688 = vmatmul.mubr.f32.gmra.mxu0 %v2615
    %v2689 = vpop.f32.mrf.mxu0
    %v2690 = vadd.f32 0.0, %v2689
    %v2691 = vpop.f32.mrf.mxu0
    %2692 = vmatprep.mubr.f32.mxu0 0.0
    %2693 = vmatmul.mubr.f32.gmra.mxu0 %v2617
    %v2694 = vpop.f32.mrf.mxu0
    %v2695 = vadd.f32 0.0, %v2694
    %v2696 = vpop.f32.mrf.mxu0
    %2697 = vdwg.mxu0
    %v2698 = vmul.f32 %v2690, 0.35355338
    %v2699 = vmul.f32 %v2695, 0.35355338
    %v2700 = vadd.f32 %v2698, %v140
    %v2701 = vadd.f32 %v2699, %v141
    %v2702 = vsel %vm326, %v2700, -inf
    %2703 = vmax.xlane.f32.xlu0 %v2702
    %v2704 = vpop.xlane.xlu0 %2703
    %v2705 = vsel %vm326, %v2701, -inf
    %2706 = vmax.xlane.f32.xlu0 %v2705
    %v2707 = vpop.xlane.xlu0 %2706
    %v2708 = vsub.f32 %v2700, %v2704
    %v2709 = vsub.f32 %v2701, %v2707
    %v2710 = vmul.f32 %v2708, 1.442695
    %v2711 = vpow.pop %v2710
    %v2712 = vmul.f32 %v2709, 1.442695
    %v2713 = vpow.pop %v2712
    %v2714 = vsel %vm326, %v2711, 0.0
    %2715 = vadd.xlane.f32.xlu0 %v2714
    %v2716 = vpop.xlane.xlu0 %2715
    %v2717 = vsel %vm326, %v2713, 0.0
    %2718 = vadd.xlane.f32.xlu0 %v2717
    %v2719 = vpop.xlane.xlu0 %2718
    %v2720 = vrcp.pop %v2716
    %v2721 = vrcp.pop %v2719
    %v2722 = vmul.f32 %v2711, %v2720
    %v2723 = vmul.f32 %v2713, %v2721
    %2724 = vrot.lane.b32.xlu0 %v1741, 40
    %v2725 = vpop.permute.xlu0 %2724
    %2726 = vrot.lane.b32.xlu0 %v1746, 40
    %v2727 = vpop.permute.xlu0 %2726
    %v2731 = vsel %vm326, %v2722, 0
    %v2734 = vsel %vm326, %v2723, 0
    %2736 = vmatprep.subr.mxu0 0.0
    %2737 = vmatpush1.msra.mxu0 0.0
    %2738 = vmatprep.subr.mxu0 0.0
    %2739 = vmatpush1.msra.mxu0 0.0
    %2740 = vmatprep.subr.mxu0 0.0
    %2741 = vmatpush1.msra.mxu0 0.0
    %2742 = vmatprep.subr.mxu0 0.0
    %2743 = vmatpush1.msra.mxu0 0.0
    %2744 = vmatprep.subr.mxu0 0.0
    %2745 = vmatpush1.msra.mxu0 0.0
    %2746 = vmatprep.subr.mxu0 0.0
    %2747 = vmatpush1.msra.mxu0 0.0
    %2748 = vmatprep.subr.mxu0 0.0
    %2749 = vmatpush1.msra.mxu0 0.0
    %2750 = vmatprep.subr.mxu0 0.0
    %2751 = vmatpush1.msra.mxu0 0.0
    %2752 = vmatprep.subr.mxu0 0.0
    %2753 = vmatpush1.msra.mxu0 0.0
    %2754 = vmatprep.subr.mxu0 0.0
    %2755 = vmatpush1.msra.mxu0 0.0
    %2756 = vmatprep.subr.mxu0 0.0
    %2757 = vmatpush1.msra.mxu0 0.0
    %2758 = vmatprep.subr.mxu0 0.0
    %2759 = vmatpush1.msra.mxu0 0.0
    %2760 = vmatprep.subr.mxu0 0.0
    %2761 = vmatpush1.msra.mxu0 0.0
    %2762 = vmatprep.subr.mxu0 0.0
    %2763 = vmatpush1.msra.mxu0 0.0
    %2764 = vmatprep.subr.mxu0 0.0
    %2765 = vmatpush1.msra.mxu0 %v2727
    %2766 = vmatprep.subr.mxu0 0.0
    %2767 = vmatpush1.msra.mxu0 %v2725
    %2768 = vmatprep.subr.mxu0 0.0
    %2769 = vmatpush2.msra.mxu0 0.0
    %2770 = vmatprep.subr.mxu0 0.0
    %2771 = vmatpush2.msra.mxu0 0.0
    %2772 = vmatprep.subr.mxu0 0.0
    %2773 = vmatpush2.msra.mxu0 0.0
    %2774 = vmatprep.subr.mxu0 0.0
    %2775 = vmatpush2.msra.mxu0 0.0
    %2776 = vmatprep.subr.mxu0 0.0
    %2777 = vmatpush2.msra.mxu0 0.0
    %2778 = vmatprep.subr.mxu0 0.0
    %2779 = vmatpush2.msra.mxu0 0.0
    %2780 = vmatprep.subr.mxu0 0.0
    %2781 = vmatpush2.msra.mxu0 0.0
    %2782 = vmatprep.subr.mxu0 0.0
    %2783 = vmatpush2.msra.mxu0 0.0
    %2784 = vmatprep.subr.mxu0 0.0
    %2785 = vmatpush2.msra.mxu0 0.0
    %2786 = vmatprep.subr.mxu0 0.0
    %2787 = vmatpush2.msra.mxu0 0.0
    %2788 = vmatprep.subr.mxu0 0.0
    %2789 = vmatpush2.msra.mxu0 0.0
    %2790 = vmatprep.subr.mxu0 0.0
    %2791 = vmatpush2.msra.mxu0 0.0
    %2792 = vmatprep.subr.mxu0 0.0
    %2793 = vmatpush2.msra.mxu0 0.0
    %2794 = vmatprep.subr.mxu0 0.0
    %2795 = vmatpush2.msra.mxu0 0.0
    %2796 = vmatprep.subr.mxu0 0.0
    %2797 = vmatpush2.msra.mxu0 0.0
    %2798 = vmatprep.subr.mxu0 0.0
    %2799 = vmatpush2.msra.mxu0 0.0
    %2800 = vmatprep.mubr.f32.mxu0 0.0
    %2801 = vmatmul.mubr.f32.gmra.mxu0 %v2731
    %v2802 = vpop.f32.mrf.mxu0
    %v2803 = vadd.f32 0.0, %v2802
    %v2804 = vpop.f32.mrf.mxu0
    %2805 = vmatprep.mubr.f32.mxu0 0.0
    %2806 = vmatmul.mubr.f32.gmra.mxu0 %v2734
    %v2807 = vpop.f32.mrf.mxu0
    %v2808 = vadd.f32 0.0, %v2807
    %v2809 = vpop.f32.mrf.mxu0
    %2810 = vdwg.mxu0
    %v2811 = vld [vmem:[#allocation2 + $0xe0] sm:$0xff]
    %v2813 = vsel %vm58, %v2803, 0
    %v2816 = vsel %vm58, %v2808, 0
    %2818 = vmatprep.subr.mxu0 0.0
    %2819 = vmatpush1.msra.mxu0 0.0
    %2820 = vmatprep.subr.mxu0 0.0
    %2821 = vmatpush1.msra.mxu0 0.0
    %2822 = vmatprep.subr.mxu0 0.0
    %2823 = vmatpush1.msra.mxu0 0.0
    %2824 = vmatprep.subr.mxu0 0.0
    %2825 = vmatpush1.msra.mxu0 0.0
    %2826 = vmatprep.subr.mxu0 0.0
    %2827 = vmatpush1.msra.mxu0 0.0
    %2828 = vmatprep.subr.mxu0 0.0
    %2829 = vmatpush1.msra.mxu0 0.0
    %2830 = vmatprep.subr.mxu0 0.0
    %2831 = vmatpush1.msra.mxu0 0.0
    %2832 = vmatprep.subr.mxu0 0.0
    %2833 = vmatpush1.msra.mxu0 0.0
    %2834 = vmatprep.subr.mxu0 0.0
    %2835 = vmatpush1.msra.mxu0 0.0
    %2836 = vmatprep.subr.mxu0 0.0
    %2837 = vmatpush1.msra.mxu0 0.0
    %2838 = vmatprep.subr.mxu0 0.0
    %2839 = vmatpush1.msra.mxu0 0.0
    %2840 = vmatprep.subr.mxu0 0.0
    %2841 = vmatpush1.msra.mxu0 0.0
    %2842 = vmatprep.subr.mxu0 0.0
    %2843 = vmatpush1.msra.mxu0 0.0
    %2844 = vmatprep.subr.mxu0 0.0
    %2845 = vmatpush1.msra.mxu0 0.0
    %2846 = vmatprep.subr.mxu0 0.0
    %2847 = vmatpush1.msra.mxu0 0.0
    %2848 = vmatprep.subr.mxu0 0.0
    %2849 = vmatpush1.msra.mxu0 %v2811
    %2850 = vmatprep.subr.mxu0 0.0
    %2851 = vmatpush2.msra.mxu0 0.0
    %2852 = vmatprep.subr.mxu0 0.0
    %2853 = vmatpush2.msra.mxu0 0.0
    %2854 = vmatprep.subr.mxu0 0.0
    %2855 = vmatpush2.msra.mxu0 0.0
    %2856 = vmatprep.subr.mxu0 0.0
    %2857 = vmatpush2.msra.mxu0 0.0
    %2858 = vmatprep.subr.mxu0 0.0
    %2859 = vmatpush2.msra.mxu0 0.0
    %2860 = vmatprep.subr.mxu0 0.0
    %2861 = vmatpush2.msra.mxu0 0.0
    %2862 = vmatprep.subr.mxu0 0.0
    %2863 = vmatpush2.msra.mxu0 0.0
    %2864 = vmatprep.subr.mxu0 0.0
    %2865 = vmatpush2.msra.mxu0 0.0
    %2866 = vmatprep.subr.mxu0 0.0
    %2867 = vmatpush2.msra.mxu0 0.0
    %2868 = vmatprep.subr.mxu0 0.0
    %2869 = vmatpush2.msra.mxu0 0.0
    %2870 = vmatprep.subr.mxu0 0.0
    %2871 = vmatpush2.msra.mxu0 0.0
    %2872 = vmatprep.subr.mxu0 0.0
    %2873 = vmatpush2.msra.mxu0 0.0
    %2874 = vmatprep.subr.mxu0 0.0
    %2875 = vmatpush2.msra.mxu0 0.0
    %2876 = vmatprep.subr.mxu0 0.0
    %2877 = vmatpush2.msra.mxu0 0.0
    %2878 = vmatprep.subr.mxu0 0.0
    %2879 = vmatpush2.msra.mxu0 0.0
    %2880 = vmatprep.subr.mxu0 0.0
    %2881 = vmatpush2.msra.mxu0 0.0
    %2882 = vmatprep.mubr.f32.mxu0 0.0
    %2883 = vmatmul.mubr.f32.gmra.mxu0 %v2813
    %v2884 = vpop.f32.mrf.mxu0
    %v2885 = vadd.f32 0.0, %v2884
    %v2886 = vpop.f32.mrf.mxu0
    %2887 = vmatprep.mubr.f32.mxu0 0.0
    %2888 = vmatmul.mubr.f32.gmra.mxu0 %v2816
    %v2889 = vpop.f32.mrf.mxu0
    %v2890 = vadd.f32 0.0, %v2889
    %v2891 = vpop.f32.mrf.mxu0
    %2892 = vdwg.mxu0
    %v2893 = vadd.f32 %v2605, %v2885
    %v2894 = vadd.f32 %v2606, %v2890
    %v2895 = vld [vmem:[#allocation5 + $0x19] sm:$0x1]
    %v2896 = vlaneseq
    %v2897 = vshrl.u32 %v2896, 7
    %v2898 = vsub.s32 0, %v2897
    %v2899 = vrot.slane %v2895, %v2898
    %v2900 = vadd.f32 %v2893, %v2899
    %v2901 = vadd.f32 %v2894, %v2899
    %v2902 = vadd.f32 %v1657, %v2900
    %v2903 = vadd.f32 %v1658, %v2901
    %v2904 = vld [vmem:[#allocation5 + $0x1c] sm:$0x1]
    %v2905 = vld [vmem:[#allocation5 + $0x1d] sm:$0x1]
    %v2906 = vsel %vm151, %v2902, 0.0
    %2907 = vadd.xlane.f32.xlu0 %v2906
    %v2908 = vpop.xlane.xlu0 %2907
    %v2909 = vsel %vm151, %v2903, 0.0
    %2910 = vadd.xlane.f32.xlu0 %v2909
    %v2911 = vpop.xlane.xlu0 %2910
    %v2912 = vmul.f32 %v2908, %v1397
    %v2913 = vmul.f32 %v2911, %v1397
    %v2914 = vsub.f32 %v2902, %v2912
    %v2915 = vsub.f32 %v2903, %v2913
    %v2916 = vmul.f32 %v2914, %v2914
    %v2917 = vmul.f32 %v2915, %v2915
    %v2918 = vsel %vm151, %v2916, 0.0
    %2919 = vadd.xlane.f32.xlu0 %v2918
    %v2920 = vpop.xlane.xlu0 %2919
    %v2921 = vsel %vm151, %v2917, 0.0
    %2922 = vadd.xlane.f32.xlu0 %v2921
    %v2923 = vpop.xlane.xlu0 %2922
    %v2924 = vmul.f32 %v2920, %v1397
    %v2925 = vmul.f32 %v2923, %v1397
    %v2926 = vadd.f32 %v2924, 1e-05
    %v2927 = vadd.f32 %v2925, 1e-05
    %v2928 = vrsqrt.pop %v2926
    %v2929 = vrsqrt.pop %v2927
    %v2930 = vmul.f32 %v2914, %v2928
    %v2931 = vmul.f32 %v2915, %v2929
    %v2932 = vlaneseq
    %v2933 = vshrl.u32 %v2932, 7
    %v2934 = vsub.s32 0, %v2933
    %v2935 = vrot.slane %v2904, %v2934
    %v2936 = vmul.f32 %v2930, %v2935
    %v2937 = vmul.f32 %v2931, %v2935
    %v2938 = vlaneseq
    %v2939 = vshrl.u32 %v2938, 7
    %v2940 = vsub.s32 0, %v2939
    %v2941 = vrot.slane %v2905, %v2940
    %v2942 = vadd.f32 %v2936, %v2941
    %v2943 = vadd.f32 %v2937, %v2941
    %v2944 = vld [vmem:[#allocation2 + $0xe8] sm:$0xff]
    %v2945 = vld [vmem:[#allocation2 + $0xf0] sm:$0xff]
    %v2946 = vld [vmem:[#allocation2 + $0xf8] sm:$0xff]
    %v2947 = vld [vmem:[#allocation2 + $0x100] sm:$0xff]
    %v2948 = vld [vmem:[#allocation5 + $0x1a] sm:$0x1]
    %v2949 = vlaneseq
    %v2950 = vshrl.u32 %v2949, 7
    %v2951 = vsub.s32 0, %v2950
    %v2952 = vrot.slane %v2948, %v2951
    %v2954 = vsel %vm151, %v2942, 0
    %v2957 = vsel %vm151, %v2943, 0
    %2959 = vmatprep.subr.mxu0 0.0
    %2960 = vmatpush1.msra.mxu0 0.0
    %2961 = vmatprep.subr.mxu0 0.0
    %2962 = vmatpush1.msra.mxu0 0.0
    %2963 = vmatprep.subr.mxu0 0.0
    %2964 = vmatpush1.msra.mxu0 0.0
    %2965 = vmatprep.subr.mxu0 0.0
    %2966 = vmatpush1.msra.mxu0 0.0
    %2967 = vmatprep.subr.mxu0 0.0
    %2968 = vmatpush1.msra.mxu0 0.0
    %2969 = vmatprep.subr.mxu0 0.0
    %2970 = vmatpush1.msra.mxu0 0.0
    %2971 = vmatprep.subr.mxu0 0.0
    %2972 = vmatpush1.msra.mxu0 0.0
    %2973 = vmatprep.subr.mxu0 0.0
    %2974 = vmatpush1.msra.mxu0 0.0
    %2975 = vmatprep.subr.mxu0 0.0
    %2976 = vmatpush1.msra.mxu0 0.0
    %2977 = vmatprep.subr.mxu0 0.0
    %2978 = vmatpush1.msra.mxu0 0.0
    %2979 = vmatprep.subr.mxu0 0.0
    %2980 = vmatpush1.msra.mxu0 0.0
    %2981 = vmatprep.subr.mxu0 0.0
    %2982 = vmatpush1.msra.mxu0 0.0
    %2983 = vmatprep.subr.mxu0 0.0
    %2984 = vmatpush1.msra.mxu0 %v2947
    %2985 = vmatprep.subr.mxu0 0.0
    %2986 = vmatpush1.msra.mxu0 %v2946
    %2987 = vmatprep.subr.mxu0 0.0
    %2988 = vmatpush1.msra.mxu0 %v2945
    %2989 = vmatprep.subr.mxu0 0.0
    %2990 = vmatpush1.msra.mxu0 %v2944
    %2991 = vmatprep.subr.mxu0 0.0
    %2992 = vmatpush2.msra.mxu0 0.0
    %2993 = vmatprep.subr.mxu0 0.0
    %2994 = vmatpush2.msra.mxu0 0.0
    %2995 = vmatprep.subr.mxu0 0.0
    %2996 = vmatpush2.msra.mxu0 0.0
    %2997 = vmatprep.subr.mxu0 0.0
    %2998 = vmatpush2.msra.mxu0 0.0
    %2999 = vmatprep.subr.mxu0 0.0
    %3000 = vmatpush2.msra.mxu0 0.0
    %3001 = vmatprep.subr.mxu0 0.0
    %3002 = vmatpush2.msra.mxu0 0.0
    %3003 = vmatprep.subr.mxu0 0.0
    %3004 = vmatpush2.msra.mxu0 0.0
    %3005 = vmatprep.subr.mxu0 0.0
    %3006 = vmatpush2.msra.mxu0 0.0
    %3007 = vmatprep.subr.mxu0 0.0
    %3008 = vmatpush2.msra.mxu0 0.0
    %3009 = vmatprep.subr.mxu0 0.0
    %3010 = vmatpush2.msra.mxu0 0.0
    %3011 = vmatprep.subr.mxu0 0.0
    %3012 = vmatpush2.msra.mxu0 0.0
    %3013 = vmatprep.subr.mxu0 0.0
    %3014 = vmatpush2.msra.mxu0 0.0
    %3015 = vmatprep.subr.mxu0 0.0
    %3016 = vmatpush2.msra.mxu0 0.0
    %3017 = vmatprep.subr.mxu0 0.0
    %3018 = vmatpush2.msra.mxu0 0.0
    %3019 = vmatprep.subr.mxu0 0.0
    %3020 = vmatpush2.msra.mxu0 0.0
    %3021 = vmatprep.subr.mxu0 0.0
    %3022 = vmatpush2.msra.mxu0 0.0
    %3023 = vmatprep.mubr.f32.mxu0 0.0
    %3024 = vmatmul.mubr.f32.gmra.mxu0 %v2954
    %v3025 = vpop.f32.mrf.mxu0
    %v3026 = vadd.f32 %v2952, %v3025
    %v3027 = vpop.f32.mrf.mxu0
    %3028 = vmatprep.mubr.f32.mxu0 0.0
    %3029 = vmatmul.mubr.f32.gmra.mxu0 %v2957
    %v3030 = vpop.f32.mrf.mxu0
    %v3031 = vadd.f32 %v2952, %v3030
    %v3032 = vpop.f32.mrf.mxu0
    %3033 = vdwg.mxu0
    %v3034 = vmax.f32 %v3026, 0.0
    %v3035 = vmax.f32 %v3031, 0.0
    %v3036 = vld [vmem:[#allocation2 + $0x108] sm:$0xff]
    %v3037 = vld [vmem:[#allocation2 + $0x110] sm:$0xff]
    %v3038 = vld [vmem:[#allocation2 + $0x118] sm:$0xff]
    %v3039 = vld [vmem:[#allocation2 + $0x120] sm:$0xff]
    %v3040 = vld [vmem:[#allocation2 + $0x128] sm:$0xff]
    %v3041 = vld [vmem:[#allocation2 + $0x130] sm:$0xff]
    %v3042 = vld [vmem:[#allocation2 + $0x138] sm:$0xff]
    %v3043 = vld [vmem:[#allocation2 + $0x140] sm:$0xff]
    %v3044 = vld [vmem:[#allocation5 + $0x1b] sm:$0x1]
    %v3045 = vlaneseq
    %v3046 = vshrl.u32 %v3045, 7
    %v3047 = vsub.s32 0, %v3046
    %v3048 = vrot.slane %v3044, %v3047
    %v3050 = vsel %vm1535, %v3034, 0
    %v3053 = vsel %vm1535, %v3035, 0
    %3055 = vmatprep.subr.mxu0 0.0
    %3056 = vmatpush1.msra.mxu0 0.0
    %3057 = vmatprep.subr.mxu0 0.0
    %3058 = vmatpush1.msra.mxu0 0.0
    %3059 = vmatprep.subr.mxu0 0.0
    %3060 = vmatpush1.msra.mxu0 0.0
    %3061 = vmatprep.subr.mxu0 0.0
    %3062 = vmatpush1.msra.mxu0 0.0
    %3063 = vmatprep.subr.mxu0 0.0
    %3064 = vmatpush1.msra.mxu0 0.0
    %3065 = vmatprep.subr.mxu0 0.0
    %3066 = vmatpush1.msra.mxu0 0.0
    %3067 = vmatprep.subr.mxu0 0.0
    %3068 = vmatpush1.msra.mxu0 0.0
    %3069 = vmatprep.subr.mxu0 0.0
    %3070 = vmatpush1.msra.mxu0 0.0
    %3071 = vmatprep.subr.mxu0 0.0
    %3072 = vmatpush1.msra.mxu0 %v3043
    %3073 = vmatprep.subr.mxu0 0.0
    %3074 = vmatpush1.msra.mxu0 %v3042
    %3075 = vmatprep.subr.mxu0 0.0
    %3076 = vmatpush1.msra.mxu0 %v3041
    %3077 = vmatprep.subr.mxu0 0.0
    %3078 = vmatpush1.msra.mxu0 %v3040
    %3079 = vmatprep.subr.mxu0 0.0
    %3080 = vmatpush1.msra.mxu0 %v3039
    %3081 = vmatprep.subr.mxu0 0.0
    %3082 = vmatpush1.msra.mxu0 %v3038
    %3083 = vmatprep.subr.mxu0 0.0
    %3084 = vmatpush1.msra.mxu0 %v3037
    %3085 = vmatprep.subr.mxu0 0.0
    %3086 = vmatpush1.msra.mxu0 %v3036
    %3087 = vmatprep.subr.mxu0 0.0
    %3088 = vmatpush2.msra.mxu0 0.0
    %3089 = vmatprep.subr.mxu0 0.0
    %3090 = vmatpush2.msra.mxu0 0.0
    %3091 = vmatprep.subr.mxu0 0.0
    %3092 = vmatpush2.msra.mxu0 0.0
    %3093 = vmatprep.subr.mxu0 0.0
    %3094 = vmatpush2.msra.mxu0 0.0
    %3095 = vmatprep.subr.mxu0 0.0
    %3096 = vmatpush2.msra.mxu0 0.0
    %3097 = vmatprep.subr.mxu0 0.0
    %3098 = vmatpush2.msra.mxu0 0.0
    %3099 = vmatprep.subr.mxu0 0.0
    %3100 = vmatpush2.msra.mxu0 0.0
    %3101 = vmatprep.subr.mxu0 0.0
    %3102 = vmatpush2.msra.mxu0 0.0
    %3103 = vmatprep.subr.mxu0 0.0
    %3104 = vmatpush2.msra.mxu0 0.0
    %3105 = vmatprep.subr.mxu0 0.0
    %3106 = vmatpush2.msra.mxu0 0.0
    %3107 = vmatprep.subr.mxu0 0.0
    %3108 = vmatpush2.msra.mxu0 0.0
    %3109 = vmatprep.subr.mxu0 0.0
    %3110 = vmatpush2.msra.mxu0 0.0
    %3111 = vmatprep.subr.mxu0 0.0
    %3112 = vmatpush2.msra.mxu0 0.0
    %3113 = vmatprep.subr.mxu0 0.0
    %3114 = vmatpush2.msra.mxu0 0.0
    %3115 = vmatprep.subr.mxu0 0.0
    %3116 = vmatpush2.msra.mxu0 0.0
    %3117 = vmatprep.subr.mxu0 0.0
    %3118 = vmatpush2.msra.mxu0 0.0
    %3119 = vmatprep.mubr.f32.mxu0 0.0
    %3120 = vmatmul.mubr.f32.gmra.mxu0 %v3050
    %v3121 = vpop.f32.mrf.mxu0
    %v3122 = vadd.f32 %v3048, %v3121
    %v3123 = vpop.f32.mrf.mxu0
    %3124 = vmatprep.mubr.f32.mxu0 0.0
    %3125 = vmatmul.mubr.f32.gmra.mxu0 %v3053
    %v3126 = vpop.f32.mrf.mxu0
    %v3127 = vadd.f32 %v3048, %v3126
    %v3128 = vpop.f32.mrf.mxu0
    %3129 = vdwg.mxu0
    %v3130 = vadd.f32 %v2942, %v3122
    %v3131 = vadd.f32 %v2943, %v3127
    %v3132 = vld [vmem:[#allocation5 + $0x1e] sm:$0x1]
    %v3133 = vld [vmem:[#allocation5 + $0x1f] sm:$0x1]
    %v3134 = vsel %vm151, %v3130, 0.0
    %3135 = vadd.xlane.f32.xlu0 %v3134
    %v3136 = vpop.xlane.xlu0 %3135
    %v3137 = vsel %vm151, %v3131, 0.0
    %3138 = vadd.xlane.f32.xlu0 %v3137
    %v3139 = vpop.xlane.xlu0 %3138
    %v3140 = vmul.f32 %v3136, %v1397
    %v3141 = vmul.f32 %v3139, %v1397
    %v3142 = vsub.f32 %v3130, %v3140
    %v3143 = vsub.f32 %v3131, %v3141
    %v3144 = vmul.f32 %v3142, %v3142
    %v3145 = vmul.f32 %v3143, %v3143
    %v3146 = vsel %vm151, %v3144, 0.0
    %3147 = vadd.xlane.f32.xlu0 %v3146
    %v3148 = vpop.xlane.xlu0 %3147
    %v3149 = vsel %vm151, %v3145, 0.0
    %3150 = vadd.xlane.f32.xlu0 %v3149
    %v3151 = vpop.xlane.xlu0 %3150
    %v3152 = vmul.f32 %v3148, %v1397
    %v3153 = vmul.f32 %v3151, %v1397
    %v3154 = vadd.f32 %v3152, 1e-05
    %v3155 = vadd.f32 %v3153, 1e-05
    %v3156 = vrsqrt.pop %v3154
    %v3157 = vrsqrt.pop %v3155
    %v3158 = vmul.f32 %v3142, %v3156
    %v3159 = vmul.f32 %v3143, %v3157
    %v3160 = vlaneseq
    %v3161 = vshrl.u32 %v3160, 7
    %v3162 = vsub.s32 0, %v3161
    %v3163 = vrot.slane %v3132, %v3162
    %v3164 = vmul.f32 %v3158, %v3163
    %v3165 = vmul.f32 %v3159, %v3163
    %v3166 = vlaneseq
    %v3167 = vshrl.u32 %v3166, 7
    %v3168 = vsub.s32 0, %v3167
    %v3169 = vrot.slane %v3133, %v3168
    %v3170 = vadd.f32 %v3164, %v3169
    %v3171 = vadd.f32 %v3165, %v3169
    %v3173 = vrot.slane %v3171, 7
    %vm3175 = vcmask 1040384
    %v3176 = vsel %vm3175, %v3170, %v3173
    %v3177 = vld [vmem:[#allocation2 + $0x148] sm:$0xff]
    %v3178 = vld [vmem:[#allocation2 + $0x150] sm:$0xff]
    %v3179 = vld [vmem:[#allocation2 + $0x158] sm:$0xff]
    %v3180 = vld [vmem:[#allocation2 + $0x160] sm:$0xff]
    %v3181 = vld [vmem:[#allocation5 + $0x20] sm:$0x1]
    %v3182 = vlaneseq
    %v3183 = vshrl.u32 %v3182, 7
    %v3184 = vsub.s32 0, %v3183
    %v3185 = vrot.slane %v3181, %v3184
    %v3187 = vsel %vm151, %v3176, 0
    %3189 = vmatprep.subr.mxu0 0.0
    %3190 = vmatpush1.msra.mxu0 0.0
    %3191 = vmatprep.subr.mxu0 0.0
    %3192 = vmatpush1.msra.mxu0 0.0
    %3193 = vmatprep.subr.mxu0 0.0
    %3194 = vmatpush1.msra.mxu0 0.0
    %3195 = vmatprep.subr.mxu0 0.0
    %3196 = vmatpush1.msra.mxu0 0.0
    %3197 = vmatprep.subr.mxu0 0.0
    %3198 = vmatpush1.msra.mxu0 0.0
    %3199 = vmatprep.subr.mxu0 0.0
    %3200 = vmatpush1.msra.mxu0 0.0
    %3201 = vmatprep.subr.mxu0 0.0
    %3202 = vmatpush1.msra.mxu0 0.0
    %3203 = vmatprep.subr.mxu0 0.0
    %3204 = vmatpush1.msra.mxu0 0.0
    %3205 = vmatprep.subr.mxu0 0.0
    %3206 = vmatpush1.msra.mxu0 0.0
    %3207 = vmatprep.subr.mxu0 0.0
    %3208 = vmatpush1.msra.mxu0 0.0
    %3209 = vmatprep.subr.mxu0 0.0
    %3210 = vmatpush1.msra.mxu0 0.0
    %3211 = vmatprep.subr.mxu0 0.0
    %3212 = vmatpush1.msra.mxu0 0.0
    %3213 = vmatprep.subr.mxu0 0.0
    %3214 = vmatpush1.msra.mxu0 %v3180
    %3215 = vmatprep.subr.mxu0 0.0
    %3216 = vmatpush1.msra.mxu0 %v3179
    %3217 = vmatprep.subr.mxu0 0.0
    %3218 = vmatpush1.msra.mxu0 %v3178
    %3219 = vmatprep.subr.mxu0 0.0
    %3220 = vmatpush1.msra.mxu0 %v3177
    %3221 = vmatprep.subr.mxu0 0.0
    %3222 = vmatpush2.msra.mxu0 0.0
    %3223 = vmatprep.subr.mxu0 0.0
    %3224 = vmatpush2.msra.mxu0 0.0
    %3225 = vmatprep.subr.mxu0 0.0
    %3226 = vmatpush2.msra.mxu0 0.0
    %3227 = vmatprep.subr.mxu0 0.0
    %3228 = vmatpush2.msra.mxu0 0.0
    %3229 = vmatprep.subr.mxu0 0.0
    %3230 = vmatpush2.msra.mxu0 0.0
    %3231 = vmatprep.subr.mxu0 0.0
    %3232 = vmatpush2.msra.mxu0 0.0
    %3233 = vmatprep.subr.mxu0 0.0
    %3234 = vmatpush2.msra.mxu0 0.0
    %3235 = vmatprep.subr.mxu0 0.0
    %3236 = vmatpush2.msra.mxu0 0.0
    %3237 = vmatprep.subr.mxu0 0.0
    %3238 = vmatpush2.msra.mxu0 0.0
    %3239 = vmatprep.subr.mxu0 0.0
    %3240 = vmatpush2.msra.mxu0 0.0
    %3241 = vmatprep.subr.mxu0 0.0
    %3242 = vmatpush2.msra.mxu0 0.0
    %3243 = vmatprep.subr.mxu0 0.0
    %3244 = vmatpush2.msra.mxu0 0.0
    %3245 = vmatprep.subr.mxu0 0.0
    %3246 = vmatpush2.msra.mxu0 0.0
    %3247 = vmatprep.subr.mxu0 0.0
    %3248 = vmatpush2.msra.mxu0 0.0
    %3249 = vmatprep.subr.mxu0 0.0
    %3250 = vmatpush2.msra.mxu0 0.0
    %3251 = vmatprep.subr.mxu0 0.0
    %3252 = vmatpush2.msra.mxu0 0.0
    %3253 = vmatprep.mubr.f32.mxu0 0.0
    %3254 = vmatmul.mubr.f32.gmra.mxu0 %v3187
    %v3255 = vpop.f32.mrf.mxu0
    %v3256 = vadd.f32 %v3185, %v3255
    %v3257 = vpop.f32.mrf.mxu0
    %3258 = vdwg.mxu0
    %vm3259 = vcmask 9216
    %3260 = vst.msk [vmem:[#allocation7] sm:$0x3] %vm3259, %v3256
    // Predicated region
    $region22: #{transformer_classifier_forward.1} parent=1 // pred_check
      _
    $region23: #{transformer_classifier_forward.1} parent=1 // pred_check_branch
      %3262 = sbr.rel (0) target = $region25
    $region24: #{transformer_classifier_forward.1} parent=1 // pred_region
      %s3264 = ssub.s32 32, 32
      %3265 = vsyncadd [#allocation4], %s3264
      %s3267 = sshll.u32 [#allocation7], 4
      %s3268 = int_to_ptr.vmem [resolvable:$true] %s3267
      %3270 = dma.vmem_to_hbm [thread:$0]  %s3268, 32, %s3, [#allocation4]
    $region25: #{transformer_classifier_forward.1} parent=1 // pred_fallthru
      _
    // Predicated region
    $region26: #{transformer_classifier_forward.1} parent=1 // pred_check
      _
    $region27: #{transformer_classifier_forward.1} parent=1 // pred_check_branch
      %3272 = sbr.rel (0) target = $region29
    $region28: #{transformer_classifier_forward.1} parent=1 // pred_region
      %3273 = dma.done [#allocation4], 32
    $region29: #{transformer_classifier_forward.1} parent=1 // pred_fallthru
      _
    %3274 = vsyncpa [#allocation3], 1
    %3275 = vsyncpa [#allocation6], 1
    %3276 = vsyncpa [#allocation4], 1

</llo_original>
